<compile_context>
chip_gen: v6e
topology: v6e:2x2x1
jax: 0.10.0
libtpu: 0.0.40
codegen_flags: <defaults>
</compile_context>

<pallas_src>
import math

import jax
import jax.numpy as jnp
from jax import lax
from jax.experimental import pallas as pl
from jax.experimental.pallas import tpu as pltpu


# ------------------------------ small helpers -------------------------------

def _round_up(x, m):
    return ((x + m - 1) // m) * m


def _sigmoid(x):
    # Stable, exact logistic: 0.5*(1 + tanh(x/2)).  tanh goes to the EUP slot
    # and never produces inf intermediates (unlike 1/(1+exp(-x))).
    return 0.5 * (jnp.tanh(0.5 * x) + 1.0)


def _prep_gate_weight(w, din_p, hp):
    """PyTorch (4H, Din) gate weight -> transposed, per-gate zero-padded
    (Din_p, 4*Hp), cast to bf16 for the MXU (f32 accumulation in-kernel)."""
    four_h, din = w.shape
    h = four_h // 4
    w = w.reshape(4, h, din)
    w = jnp.pad(w, ((0, 0), (0, hp - h), (0, din_p - din)))
    return jnp.transpose(w, (2, 0, 1)).reshape(din_p, 4 * hp).astype(jnp.bfloat16)


def _prep_gate_bias(b, hp):
    """(4H,) combined bias -> (1, 4*Hp) f32, zero-padded per gate block.
    Bias is added to the f32 accumulator, so it stays f32."""
    h = b.shape[0] // 4
    b = b.reshape(4, h)
    b = jnp.pad(b, ((0, 0), (0, hp - h)))
    return b.reshape(1, 4 * hp).astype(jnp.float32)


# ------------------------------- fused kernel -------------------------------

def _make_lstm_kernel(S, Bt, Hp, num_layers, unroll):
    four_hp = 4 * Hp

    def kernel(*refs):
        x_ref = refs[0]                                    # (S, Bt, Ip)  bf16
        layer_refs = refs[1:1 + 3 * num_layers]            # (w_ih_t, w_hh_t, b) per layer
        w_fc_ref = refs[1 + 3 * num_layers]                # (Hp, Op)     bf16
        b_fc_ref = refs[2 + 3 * num_layers]                # (1, Op)      f32
        out_ref = refs[3 + 3 * num_layers]                 # (Bt, Op)     f32
        hn_ref = refs[4 + 3 * num_layers]                  # (L, Bt, Hp)  f32
        gates_buf = refs[5 + 3 * num_layers]               # (S, Bt, 4*Hp) bf16 scratch
        seq_buf = refs[6 + 3 * num_layers]                 # (S, Bt, Hp)   bf16 scratch

        h_last = None
        for l in range(num_layers):
            w_ih_t_ref = layer_refs[3 * l]
            w_hh_t_ref = layer_refs[3 * l + 1]
            b_ref = layer_refs[3 * l + 2]

            # ---- hoisted input projection for the whole sequence ----------
            # One big bf16 MXU matmul (f32 accumulate); bias (b_ih + b_hh)
            # folded in here so the recurrence only carries h @ W_hh.
            inp = x_ref[...] if l == 0 else seq_buf[...]        # bf16
            din_p = inp.shape[-1]
            proj = jnp.dot(inp.reshape(S * Bt, din_p), w_ih_t_ref[...],
                           preferred_element_type=jnp.float32) + b_ref[...]
            gates_buf[...] = proj.reshape(S, Bt, four_hp).astype(jnp.bfloat16)

            w_hh = w_hh_t_ref[...]                         # hoisted bf16 weight load
            write_seq = l < num_layers - 1                 # last layer: only h_T needed

            h0 = jnp.zeros((Bt, Hp), jnp.float32)
            c0 = jnp.zeros((Bt, Hp), jnp.float32)

            def step(t, carry, w_hh=w_hh, write_seq=write_seq):
                h, c = carry
                # Padded lanes stay exactly zero: padded weight/bias columns
                # are zero and c0 = 0, so c_g = tanh(0) = 0 keeps c (and hence
                # h) zero there.  Do NOT change the zero-padding or h0/c0
                # without revisiting this invariant.
                g = gates_buf[t].astype(jnp.float32) + jnp.dot(
                    h.astype(jnp.bfloat16), w_hh,
                    preferred_element_type=jnp.float32)
                i_g = _sigmoid(g[:, 0 * Hp:1 * Hp])
                f_g = _sigmoid(g[:, 1 * Hp:2 * Hp])
                c_g = jnp.tanh(g[:, 2 * Hp:3 * Hp])
                o_g = _sigmoid(g[:, 3 * Hp:4 * Hp])
                c_new = f_g * c + i_g * c_g
                h_new = o_g * jnp.tanh(c_new)
                if write_seq:
                    seq_buf[t] = h_new.astype(jnp.bfloat16)
                return (h_new, c_new)

            # h, c live in vregs as the loop carry; no per-step VMEM scratch.
            h_last, _ = lax.fori_loop(0, S, step, (h0, c0), unroll=unroll)
            hn_ref[l] = h_last

        # -------- Linear head on the last timestep of the last layer --------
        out = jnp.dot(h_last.astype(jnp.bfloat16), w_fc_ref[...],
                      preferred_element_type=jnp.float32) + b_fc_ref[...]
        out_ref[...] = out.astype(out_ref.dtype)

    return kernel


# --------------------------------- wrapper ----------------------------------

def lstm_forward(x, params, num_layers, hidden_size, output_size):
    """x: (B, S, I) batch-first.  Returns (out, hn):
    out: (B, output_size);  hn: (num_layers, B, hidden_size)."""
    B, S, I = x.shape
    H, O = hidden_size, output_size
    Ip = _round_up(I, 128)        # lane-dense input features
    Hp = _round_up(H, 128)        # lane-dense hidden (each gate = Hp lanes)
    Op = _round_up(O, 128)        # lane-dense head output
    # TODO(synk): for H < 128, packing 4H contiguously (instead of per-gate
    # Hp padding) would cut MXU/VMEM/VPU work ~4x; per-gate padding kept for
    # simplicity and because real workloads use H >= 128.

    # Batch tile: fill the MXU M dimension (up to 256 rows on v6e/v7x); keep
    # sublane dim a multiple of 16 so bf16 scratch tiles are dense.
    Bt = min(256, _round_up(B, 16))
    Bp = _round_up(B, Bt)
    nb = Bp // Bt

    # time-major, padded, bf16 input (feeds the MXU directly)
    x_tm = jnp.transpose(x, (1, 0, 2)).astype(jnp.float32)
    x_tm = jnp.pad(x_tm, ((0, 0), (0, Bp - B), (0, Ip - I))).astype(jnp.bfloat16)

    args = [x_tm]
    in_specs = [pl.BlockSpec((S, Bt, Ip), lambda b: (0, b, 0))]
    for l in range(num_layers):
        din_p = Ip if l == 0 else Hp
        w_ih = _prep_gate_weight(params[f"w_ih_l{l}"], din_p, Hp)
        w_hh = _prep_gate_weight(params[f"w_hh_l{l}"], Hp, Hp)
        bias = _prep_gate_bias(params[f"b_ih_l{l}"] + params[f"b_hh_l{l}"], Hp)
        args += [w_ih, w_hh, bias]
        # Weights: full-array blocks, block index 0 for every batch block so
        # they stay VMEM-resident across the parallel batch grid.
        in_specs += [pl.BlockSpec(w_ih.shape, lambda b: (0, 0)),
                     pl.BlockSpec(w_hh.shape, lambda b: (0, 0)),
                     pl.BlockSpec(bias.shape, lambda b: (0, 0))]
    w_fc = jnp.pad(params["w_fc"].T, ((0, Hp - H), (0, Op - O))).astype(jnp.bfloat16)
    b_fc = jnp.pad(params["b_fc"], (0, Op - O)).reshape(1, Op).astype(jnp.float32)
    args += [w_fc, b_fc]
    in_specs += [pl.BlockSpec(w_fc.shape, lambda b: (0, 0)),
                 pl.BlockSpec(b_fc.shape, lambda b: (0, 0))]

    out_specs = (pl.BlockSpec((Bt, Op), lambda b: (b, 0)),
                 pl.BlockSpec((num_layers, Bt, Hp), lambda b: (0, b, 0)))
    out_shape = (jax.ShapeDtypeStruct((Bp, Op), jnp.float32),
                 jax.ShapeDtypeStruct((num_layers, Bp, Hp), jnp.float32))

    scratch_shapes = [pltpu.VMEM((S, Bt, 4 * Hp), jnp.bfloat16),   # hoisted gates
                      pltpu.VMEM((S, Bt, Hp), jnp.bfloat16)]       # inter-layer seq

    # Unroll cap from estimated per-step vreg footprint (h, c, g, gate slices).
    vregs_per_step = 12 * max(1, Bt // 8) * max(1, Hp // 128)
    if S <= 32 and vregs_per_step <= 24:
        unroll = True
    else:
        unroll = max(1, min(8, 48 // vregs_per_step))

    # VMEM budget: double-buffered input/weight/output blocks + scratch.
    weight_bytes = sum(int(a.size) * a.dtype.itemsize for a in args[1:])
    block_in_bytes = S * Bt * Ip * 2
    scratch_bytes = S * Bt * 4 * Hp * 2 + S * Bt * Hp * 2
    out_bytes = Bt * Op * 4 + num_layers * Bt * Hp * 4
    vmem_bytes = 2 * (block_in_bytes + weight_bytes + out_bytes) + scratch_bytes
    vmem_limit = int(min(64 * 1024 * 1024,
                         max(16 * 1024 * 1024, 2 * vmem_bytes)))

    kernel = _make_lstm_kernel(S, Bt, Hp, num_layers, unroll)

    out_p, hn_p = pl.pallas_call(
        kernel,
        grid=(nb,),
        out_shape=out_shape,
        in_specs=in_specs,
        out_specs=out_specs,
        scratch_shapes=scratch_shapes,
        compiler_params=pltpu.CompilerParams(
            dimension_semantics=("parallel",),
            vmem_limit_bytes=vmem_limit),
    )(*args)

    return out_p[:B, :O], hn_p[:, :B, :H]


# -------------------------- pure-JAX reference check ------------------------

def reference_forward(x, params, num_layers, hidden_size, output_size):
    B, S, I = x.shape
    H = hidden_size
    x_tm = jnp.transpose(x, (1, 0, 2)).astype(jnp.float32)
    inp = x_tm
    hn_layers = []
    for l in range(num_layers):
        w_ih = params[f"w_ih_l{l}"]
        w_hh = params[f"w_hh_l{l}"]
        b = params[f"b_ih_l{l}"] + params[f"b_hh_l{l}"]

        def step(carry, x_t):
            h, c = carry
            g = x_t @ w_ih.T + h @ w_hh.T + b
            i_g = jax.nn.sigmoid(g[:, 0 * H:1 * H])
            f_g = jax.nn.sigmoid(g[:, 1 * H:2 * H])
            c_g = jnp.tanh(g[:, 2 * H:3 * H])
            o_g = jax.nn.sigmoid(g[:, 3 * H:4 * H])
            c = f_g * c + i_g * c_g
            h = o_g * jnp.tanh(c)
            return (h, c), h

        init = (jnp.zeros((B, H), jnp.float32), jnp.zeros((B, H), jnp.float32))
        (h_last, _), seq = lax.scan(step, init, inp)
        hn_layers.append(h_last)
        inp = seq
    hn = jnp.stack(hn_layers, axis=0)
    out = inp[-1] @ params["w_fc"].T + params["b_fc"]
    return out, hn


# --------------------------------- params -----------------------------------

def init_params(key, input_size, hidden_size, num_layers, output_size):
    params = {}
    k = 1.0 / math.sqrt(hidden_size)
    for l in range(num_layers):
        d_in = input_size if l == 0 else hidden_size
        key, k1, k2, k3, k4 = jax.random.split(key, 5)
        params[f"w_ih_l{l}"] = jax.random.uniform(
            k1, (4 * hidden_size, d_in), jnp.float32, -k, k)
        params[f"w_hh_l{l}"] = jax.random.uniform(
            k2, (4 * hidden_size, hidden_size), jnp.float32, -k, k)
        params[f"b_ih_l{l}"] = jax.random.uniform(
            k3, (4 * hidden_size,), jnp.float32, -k, k)
        params[f"b_hh_l{l}"] = jax.random.uniform(
            k4, (4 * hidden_size,), jnp.float32, -k, k)
    key, k1, k2 = jax.random.split(key, 3)
    params["w_fc"] = jax.random.uniform(
        k1, (output_size, hidden_size), jnp.float32, -k, k)
    params["b_fc"] = jax.random.uniform(
        k2, (output_size,), jnp.float32, -k, k)
    return params


# ----------------------------------- main ------------------------------------

if __name__ == "__main__":
    batch, seq_len, input_size = 2, 8, 4
    hidden_size, num_layers, output_size = 32, 2, 3

    key = jax.random.PRNGKey(0)
    key, kx, kp = jax.random.split(key, 3)
    x = jax.random.normal(kx, (batch, seq_len, input_size), jnp.float32)
    params = init_params(kp, input_size, hidden_size, num_layers, output_size)

    out, hn = lstm_forward(x, params, num_layers, hidden_size, output_size)
    out = jax.block_until_ready(out)
    hn = jax.block_until_ready(hn)

    ref_out, ref_hn = reference_forward(x, params, num_layers,
                                        hidden_size, output_size)
    assert out.shape == (batch, output_size)
    assert hn.shape == (num_layers, batch, hidden_size)
    # bf16 MXU operands (f32 accumulate) -> compare with a bf16-appropriate
    # tolerance against the f32 reference.
    assert jnp.allclose(out, ref_out, atol=5e-2, rtol=0.0), (
        "output mismatch", float(jnp.max(jnp.abs(out - ref_out))))
    assert jnp.allclose(hn, ref_hn, atol=5e-2, rtol=0.0), (
        "hidden-state mismatch", float(jnp.max(jnp.abs(hn - ref_hn))))

    print("KERNEL_OK")
</pallas_src>

<mosaic_0001>
module attributes {stable_mosaic.version = 11 : i64} {
  func.func @kernel(%arg0: i32, %arg1: memref<8x16x128xbf16, #tpu.memory_space<vmem>>, %arg2: memref<128x512xbf16, #tpu.memory_space<vmem>>, %arg3: memref<128x512xbf16, #tpu.memory_space<vmem>>, %arg4: memref<1x512xf32, #tpu.memory_space<vmem>>, %arg5: memref<128x512xbf16, #tpu.memory_space<vmem>>, %arg6: memref<128x512xbf16, #tpu.memory_space<vmem>>, %arg7: memref<1x512xf32, #tpu.memory_space<vmem>>, %arg8: memref<128x128xbf16, #tpu.memory_space<vmem>>, %arg9: memref<1x128xf32, #tpu.memory_space<vmem>>, %arg10: memref<16x128xf32, #tpu.memory_space<vmem>>, %arg11: memref<2x16x128xf32, #tpu.memory_space<vmem>>, %arg12: memref<8x16x512xbf16, #tpu.memory_space<vmem>>, %arg13: memref<8x16x128xbf16, #tpu.memory_space<vmem>>) attributes {dimension_semantics = [#tpu.dimension_semantics<parallel>], iteration_bounds = array<i64: 1>, scalar_prefetch = 0 : i64, scratch_operands = 2 : i64, tpu.core_type = #tpu.core_type<tc>, window_params = [{transform_indices = @transform_0, window_bounds = array<i64: 8, 16, 128>}, {pipeline_mode = #tpu.pipeline_mode<synchronous>, transform_indices = @transform_1, window_bounds = array<i64: 128, 512>}, {pipeline_mode = #tpu.pipeline_mode<synchronous>, transform_indices = @transform_2, window_bounds = array<i64: 128, 512>}, {pipeline_mode = #tpu.pipeline_mode<synchronous>, transform_indices = @transform_3, window_bounds = array<i64: 1, 512>}, {pipeline_mode = #tpu.pipeline_mode<synchronous>, transform_indices = @transform_4, window_bounds = array<i64: 128, 512>}, {pipeline_mode = #tpu.pipeline_mode<synchronous>, transform_indices = @transform_5, window_bounds = array<i64: 128, 512>}, {pipeline_mode = #tpu.pipeline_mode<synchronous>, transform_indices = @transform_6, window_bounds = array<i64: 1, 512>}, {pipeline_mode = #tpu.pipeline_mode<synchronous>, transform_indices = @transform_7, window_bounds = array<i64: 128, 128>}, {pipeline_mode = #tpu.pipeline_mode<synchronous>, transform_indices = @transform_8, window_bounds = array<i64: 1, 128>}, {transform_indices = @transform_9, window_bounds = array<i64: 16, 128>}, {transform_indices = @transform_10, window_bounds = array<i64: 2, 16, 128>}]} {
    %c0 = arith.constant 0 : index
    %c0_0 = arith.constant 0 : index
    %c0_1 = arith.constant 0 : index
    %0 = vector.load %arg1[%c0, %c0_0, %c0_1] : memref<8x16x128xbf16, #tpu.memory_space<vmem>>, vector<8x16x128xbf16>
    %1 = vector.shape_cast %0 : vector<8x16x128xbf16> to vector<128x128xbf16>
    %c0_2 = arith.constant 0 : index
    %c0_3 = arith.constant 0 : index
    %2 = vector.load %arg2[%c0_2, %c0_3] : memref<128x512xbf16, #tpu.memory_space<vmem>>, vector<128x512xbf16>
    %cst = arith.constant dense<0.000000e+00> : vector<128x512xf32>
    %3 = tpu.matmul %1, %2, %cst {dimension_numbers = #tpu.dot_dimension_numbers<[1], [0], [0], [1], [0, 0, 1, 1], [], []>} : vector<128x128xbf16>, vector<128x512xbf16>, vector<128x512xf32> -> vector<128x512xf32>
    %c0_4 = arith.constant 0 : index
    %c0_5 = arith.constant 0 : index
    %4 = vector.load %arg4[%c0_4, %c0_5] : memref<1x512xf32, #tpu.memory_space<vmem>>, vector<1x512xf32>
    %5 = vector.broadcast %4 : vector<1x512xf32> to vector<128x512xf32>
    %6 = arith.addf %3, %5 : vector<128x512xf32>
    %7 = vector.shape_cast %6 : vector<128x512xf32> to vector<8x16x512xf32>
    %8 = arith.truncf %7 : vector<8x16x512xf32> to vector<8x16x512xbf16>
    %c0_6 = arith.constant 0 : index
    %c0_7 = arith.constant 0 : index
    %c0_8 = arith.constant 0 : index
    %9 = vector.load %arg12[%c0_6, %c0_7, %c0_8] : memref<8x16x512xbf16, #tpu.memory_space<vmem>>, vector<8x16x512xbf16>
    tpu.vector_store %arg12[%c0_6, %c0_7, %c0_8], %8 {strides = array<i32>} : memref<8x16x512xbf16, #tpu.memory_space<vmem>>, vector<8x16x512xbf16>,
    %c0_9 = arith.constant 0 : index
    %c0_10 = arith.constant 0 : index
    %10 = vector.load %arg3[%c0_9, %c0_10] : memref<128x512xbf16, #tpu.memory_space<vmem>>, vector<128x512xbf16>
    %cst_11 = arith.constant 0.000000e+00 : f32
    %11 = vector.broadcast %cst_11 : f32 to vector<16x128xf32>
    %cst_12 = arith.constant 0.000000e+00 : f32
    %12 = vector.broadcast %cst_12 : f32 to vector<16x128xf32>
    %c0_i32 = arith.constant 0 : i32
    %13 = arith.index_cast %c0_i32 : i32 to index
    %c0_13 = arith.constant 0 : index
    %c0_14 = arith.constant 0 : index
    %14 = vector.load %arg12[%13, %c0_13, %c0_14] : memref<8x16x512xbf16, #tpu.memory_space<vmem>>, vector<1x16x512xbf16>
    %15 = vector.shape_cast %14 : vector<1x16x512xbf16> to vector<16x512xbf16>
    %16 = arith.extf %15 : vector<16x512xbf16> to vector<16x512xf32>
    %17 = arith.truncf %11 : vector<16x128xf32> to vector<16x128xbf16>
    %cst_15 = arith.constant dense<0.000000e+00> : vector<16x512xf32>
    %18 = tpu.matmul %17, %10, %cst_15 {dimension_numbers = #tpu.dot_dimension_numbers<[1], [0], [0], [1], [0, 0, 1, 1], [], []>} : vector<16x128xbf16>, vector<128x512xbf16>, vector<16x512xf32> -> vector<16x512xf32>
    %19 = arith.addf %16, %18 : vector<16x512xf32>
    %20 = vector.extract_strided_slice %19 {offsets = [0, 0], sizes = [16, 128], strides = [1, 1]} : vector<16x512xf32> to vector<16x128xf32>
    %cst_16 = arith.constant 5.000000e-01 : f32
    %21 = vector.broadcast %cst_16 : f32 to vector<16x128xf32>
    %22 = arith.mulf %21, %20 : vector<16x128xf32>
    %23 = math.tanh %22 : vector<16x128xf32>
    %cst_17 = arith.constant 1.000000e+00 : f32
    %24 = vector.broadcast %cst_17 : f32 to vector<16x128xf32>
    %25 = arith.addf %23, %24 : vector<16x128xf32>
    %cst_18 = arith.constant 5.000000e-01 : f32
    %26 = vector.broadcast %cst_18 : f32 to vector<16x128xf32>
    %27 = arith.mulf %26, %25 : vector<16x128xf32>
    %28 = vector.extract_strided_slice %19 {offsets = [0, 128], sizes = [16, 128], strides = [1, 1]} : vector<16x512xf32> to vector<16x128xf32>
    %cst_19 = arith.constant 5.000000e-01 : f32
    %29 = vector.broadcast %cst_19 : f32 to vector<16x128xf32>
    %30 = arith.mulf %29, %28 : vector<16x128xf32>
    %31 = math.tanh %30 : vector<16x128xf32>
    %cst_20 = arith.constant 1.000000e+00 : f32
    %32 = vector.broadcast %cst_20 : f32 to vector<16x128xf32>
    %33 = arith.addf %31, %32 : vector<16x128xf32>
    %cst_21 = arith.constant 5.000000e-01 : f32
    %34 = vector.broadcast %cst_21 : f32 to vector<16x128xf32>
    %35 = arith.mulf %34, %33 : vector<16x128xf32>
    %36 = vector.extract_strided_slice %19 {offsets = [0, 256], sizes = [16, 128], strides = [1, 1]} : vector<16x512xf32> to vector<16x128xf32>
    %37 = math.tanh %36 : vector<16x128xf32>
    %38 = vector.extract_strided_slice %19 {offsets = [0, 384], sizes = [16, 128], strides = [1, 1]} : vector<16x512xf32> to vector<16x128xf32>
    %cst_22 = arith.constant 5.000000e-01 : f32
    %39 = vector.broadcast %cst_22 : f32 to vector<16x128xf32>
    %40 = arith.mulf %39, %38 : vector<16x128xf32>
    %41 = math.tanh %40 : vector<16x128xf32>
    %cst_23 = arith.constant 1.000000e+00 : f32
    %42 = vector.broadcast %cst_23 : f32 to vector<16x128xf32>
    %43 = arith.addf %41, %42 : vector<16x128xf32>
    %cst_24 = arith.constant 5.000000e-01 : f32
    %44 = vector.broadcast %cst_24 : f32 to vector<16x128xf32>
    %45 = arith.mulf %44, %43 : vector<16x128xf32>
    %46 = arith.mulf %35, %12 : vector<16x128xf32>
    %47 = arith.mulf %27, %37 : vector<16x128xf32>
    %48 = arith.addf %46, %47 : vector<16x128xf32>
    %49 = math.tanh %48 : vector<16x128xf32>
    %50 = arith.mulf %45, %49 : vector<16x128xf32>
    %51 = arith.truncf %50 : vector<16x128xf32> to vector<16x128xbf16>
    %52 = arith.index_cast %c0_i32 : i32 to index
    %c0_25 = arith.constant 0 : index
    %c0_26 = arith.constant 0 : index
    %53 = vector.load %arg13[%52, %c0_25, %c0_26] : memref<8x16x128xbf16, #tpu.memory_space<vmem>>, vector<1x16x128xbf16>
    %54 = vector.shape_cast %53 : vector<1x16x128xbf16> to vector<16x128xbf16>
    %55 = vector.shape_cast %51 : vector<16x128xbf16> to vector<1x16x128xbf16>
    tpu.vector_store %arg13[%52, %c0_25, %c0_26], %55 {strides = array<i32>} : memref<8x16x128xbf16, #tpu.memory_space<vmem>>, vector<1x16x128xbf16>,
    %c1_i32 = arith.constant 1 : i32
    %56 = arith.index_cast %c1_i32 : i32 to index
    %c0_27 = arith.constant 0 : index
    %c0_28 = arith.constant 0 : index
    %57 = vector.load %arg12[%56, %c0_27, %c0_28] : memref<8x16x512xbf16, #tpu.memory_space<vmem>>, vector<1x16x512xbf16>
    %58 = vector.shape_cast %57 : vector<1x16x512xbf16> to vector<16x512xbf16>
    %59 = arith.extf %58 : vector<16x512xbf16> to vector<16x512xf32>
    %60 = arith.truncf %50 : vector<16x128xf32> to vector<16x128xbf16>
    %cst_29 = arith.constant dense<0.000000e+00> : vector<16x512xf32>
    %61 = tpu.matmul %60, %10, %cst_29 {dimension_numbers = #tpu.dot_dimension_numbers<[1], [0], [0], [1], [0, 0, 1, 1], [], []>} : vector<16x128xbf16>, vector<128x512xbf16>, vector<16x512xf32> -> vector<16x512xf32>
    %62 = arith.addf %59, %61 : vector<16x512xf32>
    %63 = vector.extract_strided_slice %62 {offsets = [0, 0], sizes = [16, 128], strides = [1, 1]} : vector<16x512xf32> to vector<16x128xf32>
    %cst_30 = arith.constant 5.000000e-01 : f32
    %64 = vector.broadcast %cst_30 : f32 to vector<16x128xf32>
    %65 = arith.mulf %64, %63 : vector<16x128xf32>
    %66 = math.tanh %65 : vector<16x128xf32>
    %cst_31 = arith.constant 1.000000e+00 : f32
    %67 = vector.broadcast %cst_31 : f32 to vector<16x128xf32>
    %68 = arith.addf %66, %67 : vector<16x128xf32>
    %cst_32 = arith.constant 5.000000e-01 : f32
    %69 = vector.broadcast %cst_32 : f32 to vector<16x128xf32>
    %70 = arith.mulf %69, %68 : vector<16x128xf32>
    %71 = vector.extract_strided_slice %62 {offsets = [0, 128], sizes = [16, 128], strides = [1, 1]} : vector<16x512xf32> to vector<16x128xf32>
    %cst_33 = arith.constant 5.000000e-01 : f32
    %72 = vector.broadcast %cst_33 : f32 to vector<16x128xf32>
    %73 = arith.mulf %72, %71 : vector<16x128xf32>
    %74 = math.tanh %73 : vector<16x128xf32>
    %cst_34 = arith.constant 1.000000e+00 : f32
    %75 = vector.broadcast %cst_34 : f32 to vector<16x128xf32>
    %76 = arith.addf %74, %75 : vector<16x128xf32>
    %cst_35 = arith.constant 5.000000e-01 : f32
    %77 = vector.broadcast %cst_35 : f32 to vector<16x128xf32>
    %78 = arith.mulf %77, %76 : vector<16x128xf32>
    %79 = vector.extract_strided_slice %62 {offsets = [0, 256], sizes = [16, 128], strides = [1, 1]} : vector<16x512xf32> to vector<16x128xf32>
    %80 = math.tanh %79 : vector<16x128xf32>
    %81 = vector.extract_strided_slice %62 {offsets = [0, 384], sizes = [16, 128], strides = [1, 1]} : vector<16x512xf32> to vector<16x128xf32>
    %cst_36 = arith.constant 5.000000e-01 : f32
    %82 = vector.broadcast %cst_36 : f32 to vector<16x128xf32>
    %83 = arith.mulf %82, %81 : vector<16x128xf32>
    %84 = math.tanh %83 : vector<16x128xf32>
    %cst_37 = arith.constant 1.000000e+00 : f32
    %85 = vector.broadcast %cst_37 : f32 to vector<16x128xf32>
    %86 = arith.addf %84, %85 : vector<16x128xf32>
    %cst_38 = arith.constant 5.000000e-01 : f32
    %87 = vector.broadcast %cst_38 : f32 to vector<16x128xf32>
    %88 = arith.mulf %87, %86 : vector<16x128xf32>
    %89 = arith.mulf %78, %48 : vector<16x128xf32>
    %90 = arith.mulf %70, %80 : vector<16x128xf32>
    %91 = arith.addf %89, %90 : vector<16x128xf32>
    %92 = math.tanh %91 : vector<16x128xf32>
    %93 = arith.mulf %88, %92 : vector<16x128xf32>
    %94 = arith.truncf %93 : vector<16x128xf32> to vector<16x128xbf16>
    %95 = arith.index_cast %c1_i32 : i32 to index
    %c0_39 = arith.constant 0 : index
    %c0_40 = arith.constant 0 : index
    %96 = vector.load %arg13[%95, %c0_39, %c0_40] : memref<8x16x128xbf16, #tpu.memory_space<vmem>>, vector<1x16x128xbf16>
    %97 = vector.shape_cast %96 : vector<1x16x128xbf16> to vector<16x128xbf16>
    %98 = vector.shape_cast %94 : vector<16x128xbf16> to vector<1x16x128xbf16>
    tpu.vector_store %arg13[%95, %c0_39, %c0_40], %98 {strides = array<i32>} : memref<8x16x128xbf16, #tpu.memory_space<vmem>>, vector<1x16x128xbf16>,
    %c2_i32 = arith.constant 2 : i32
    %99 = arith.index_cast %c2_i32 : i32 to index
    %c0_41 = arith.constant 0 : index
    %c0_42 = arith.constant 0 : index
    %100 = vector.load %arg12[%99, %c0_41, %c0_42] : memref<8x16x512xbf16, #tpu.memory_space<vmem>>, vector<1x16x512xbf16>
    %101 = vector.shape_cast %100 : vector<1x16x512xbf16> to vector<16x512xbf16>
    %102 = arith.extf %101 : vector<16x512xbf16> to vector<16x512xf32>
    %103 = arith.truncf %93 : vector<16x128xf32> to vector<16x128xbf16>
    %cst_43 = arith.constant dense<0.000000e+00> : vector<16x512xf32>
    %104 = tpu.matmul %103, %10, %cst_43 {dimension_numbers = #tpu.dot_dimension_numbers<[1], [0], [0], [1], [0, 0, 1, 1], [], []>} : vector<16x128xbf16>, vector<128x512xbf16>, vector<16x512xf32> -> vector<16x512xf32>
    %105 = arith.addf %102, %104 : vector<16x512xf32>
    %106 = vector.extract_strided_slice %105 {offsets = [0, 0], sizes = [16, 128], strides = [1, 1]} : vector<16x512xf32> to vector<16x128xf32>
    %cst_44 = arith.constant 5.000000e-01 : f32
    %107 = vector.broadcast %cst_44 : f32 to vector<16x128xf32>
    %108 = arith.mulf %107, %106 : vector<16x128xf32>
    %109 = math.tanh %108 : vector<16x128xf32>
    %cst_45 = arith.constant 1.000000e+00 : f32
    %110 = vector.broadcast %cst_45 : f32 to vector<16x128xf32>
    %111 = arith.addf %109, %110 : vector<16x128xf32>
    %cst_46 = arith.constant 5.000000e-01 : f32
    %112 = vector.broadcast %cst_46 : f32 to vector<16x128xf32>
    %113 = arith.mulf %112, %111 : vector<16x128xf32>
    %114 = vector.extract_strided_slice %105 {offsets = [0, 128], sizes = [16, 128], strides = [1, 1]} : vector<16x512xf32> to vector<16x128xf32>
    %cst_47 = arith.constant 5.000000e-01 : f32
    %115 = vector.broadcast %cst_47 : f32 to vector<16x128xf32>
    %116 = arith.mulf %115, %114 : vector<16x128xf32>
    %117 = math.tanh %116 : vector<16x128xf32>
    %cst_48 = arith.constant 1.000000e+00 : f32
    %118 = vector.broadcast %cst_48 : f32 to vector<16x128xf32>
    %119 = arith.addf %117, %118 : vector<16x128xf32>
    %cst_49 = arith.constant 5.000000e-01 : f32
    %120 = vector.broadcast %cst_49 : f32 to vector<16x128xf32>
    %121 = arith.mulf %120, %119 : vector<16x128xf32>
    %122 = vector.extract_strided_slice %105 {offsets = [0, 256], sizes = [16, 128], strides = [1, 1]} : vector<16x512xf32> to vector<16x128xf32>
    %123 = math.tanh %122 : vector<16x128xf32>
    %124 = vector.extract_strided_slice %105 {offsets = [0, 384], sizes = [16, 128], strides = [1, 1]} : vector<16x512xf32> to vector<16x128xf32>
    %cst_50 = arith.constant 5.000000e-01 : f32
    %125 = vector.broadcast %cst_50 : f32 to vector<16x128xf32>
    %126 = arith.mulf %125, %124 : vector<16x128xf32>
    %127 = math.tanh %126 : vector<16x128xf32>
    %cst_51 = arith.constant 1.000000e+00 : f32
    %128 = vector.broadcast %cst_51 : f32 to vector<16x128xf32>
    %129 = arith.addf %127, %128 : vector<16x128xf32>
    %cst_52 = arith.constant 5.000000e-01 : f32
    %130 = vector.broadcast %cst_52 : f32 to vector<16x128xf32>
    %131 = arith.mulf %130, %129 : vector<16x128xf32>
    %132 = arith.mulf %121, %91 : vector<16x128xf32>
    %133 = arith.mulf %113, %123 : vector<16x128xf32>
    %134 = arith.addf %132, %133 : vector<16x128xf32>
    %135 = math.tanh %134 : vector<16x128xf32>
    %136 = arith.mulf %131, %135 : vector<16x128xf32>
    %137 = arith.truncf %136 : vector<16x128xf32> to vector<16x128xbf16>
    %138 = arith.index_cast %c2_i32 : i32 to index
    %c0_53 = arith.constant 0 : index
    %c0_54 = arith.constant 0 : index
    %139 = vector.load %arg13[%138, %c0_53, %c0_54] : memref<8x16x128xbf16, #tpu.memory_space<vmem>>, vector<1x16x128xbf16>
    %140 = vector.shape_cast %139 : vector<1x16x128xbf16> to vector<16x128xbf16>
    %141 = vector.shape_cast %137 : vector<16x128xbf16> to vector<1x16x128xbf16>
    tpu.vector_store %arg13[%138, %c0_53, %c0_54], %141 {strides = array<i32>} : memref<8x16x128xbf16, #tpu.memory_space<vmem>>, vector<1x16x128xbf16>,
    %c3_i32 = arith.constant 3 : i32
    %142 = arith.index_cast %c3_i32 : i32 to index
    %c0_55 = arith.constant 0 : index
    %c0_56 = arith.constant 0 : index
    %143 = vector.load %arg12[%142, %c0_55, %c0_56] : memref<8x16x512xbf16, #tpu.memory_space<vmem>>, vector<1x16x512xbf16>
    %144 = vector.shape_cast %143 : vector<1x16x512xbf16> to vector<16x512xbf16>
    %145 = arith.extf %144 : vector<16x512xbf16> to vector<16x512xf32>
    %146 = arith.truncf %136 : vector<16x128xf32> to vector<16x128xbf16>
    %cst_57 = arith.constant dense<0.000000e+00> : vector<16x512xf32>
    %147 = tpu.matmul %146, %10, %cst_57 {dimension_numbers = #tpu.dot_dimension_numbers<[1], [0], [0], [1], [0, 0, 1, 1], [], []>} : vector<16x128xbf16>, vector<128x512xbf16>, vector<16x512xf32> -> vector<16x512xf32>
    %148 = arith.addf %145, %147 : vector<16x512xf32>
    %149 = vector.extract_strided_slice %148 {offsets = [0, 0], sizes = [16, 128], strides = [1, 1]} : vector<16x512xf32> to vector<16x128xf32>
    %cst_58 = arith.constant 5.000000e-01 : f32
    %150 = vector.broadcast %cst_58 : f32 to vector<16x128xf32>
    %151 = arith.mulf %150, %149 : vector<16x128xf32>
    %152 = math.tanh %151 : vector<16x128xf32>
    %cst_59 = arith.constant 1.000000e+00 : f32
    %153 = vector.broadcast %cst_59 : f32 to vector<16x128xf32>
    %154 = arith.addf %152, %153 : vector<16x128xf32>
    %cst_60 = arith.constant 5.000000e-01 : f32
    %155 = vector.broadcast %cst_60 : f32 to vector<16x128xf32>
    %156 = arith.mulf %155, %154 : vector<16x128xf32>
    %157 = vector.extract_strided_slice %148 {offsets = [0, 128], sizes = [16, 128], strides = [1, 1]} : vector<16x512xf32> to vector<16x128xf32>
    %cst_61 = arith.constant 5.000000e-01 : f32
    %158 = vector.broadcast %cst_61 : f32 to vector<16x128xf32>
    %159 = arith.mulf %158, %157 : vector<16x128xf32>
    %160 = math.tanh %159 : vector<16x128xf32>
    %cst_62 = arith.constant 1.000000e+00 : f32
    %161 = vector.broadcast %cst_62 : f32 to vector<16x128xf32>
    %162 = arith.addf %160, %161 : vector<16x128xf32>
    %cst_63 = arith.constant 5.000000e-01 : f32
    %163 = vector.broadcast %cst_63 : f32 to vector<16x128xf32>
    %164 = arith.mulf %163, %162 : vector<16x128xf32>
    %165 = vector.extract_strided_slice %148 {offsets = [0, 256], sizes = [16, 128], strides = [1, 1]} : vector<16x512xf32> to vector<16x128xf32>
    %166 = math.tanh %165 : vector<16x128xf32>
    %167 = vector.extract_strided_slice %148 {offsets = [0, 384], sizes = [16, 128], strides = [1, 1]} : vector<16x512xf32> to vector<16x128xf32>
    %cst_64 = arith.constant 5.000000e-01 : f32
    %168 = vector.broadcast %cst_64 : f32 to vector<16x128xf32>
    %169 = arith.mulf %168, %167 : vector<16x128xf32>
    %170 = math.tanh %169 : vector<16x128xf32>
    %cst_65 = arith.constant 1.000000e+00 : f32
    %171 = vector.broadcast %cst_65 : f32 to vector<16x128xf32>
    %172 = arith.addf %170, %171 : vector<16x128xf32>
    %cst_66 = arith.constant 5.000000e-01 : f32
    %173 = vector.broadcast %cst_66 : f32 to vector<16x128xf32>
    %174 = arith.mulf %173, %172 : vector<16x128xf32>
    %175 = arith.mulf %164, %134 : vector<16x128xf32>
    %176 = arith.mulf %156, %166 : vector<16x128xf32>
    %177 = arith.addf %175, %176 : vector<16x128xf32>
    %178 = math.tanh %177 : vector<16x128xf32>
    %179 = arith.mulf %174, %178 : vector<16x128xf32>
    %180 = arith.truncf %179 : vector<16x128xf32> to vector<16x128xbf16>
    %181 = arith.index_cast %c3_i32 : i32 to index
    %c0_67 = arith.constant 0 : index
    %c0_68 = arith.constant 0 : index
    %182 = vector.load %arg13[%181, %c0_67, %c0_68] : memref<8x16x128xbf16, #tpu.memory_space<vmem>>, vector<1x16x128xbf16>
    %183 = vector.shape_cast %182 : vector<1x16x128xbf16> to vector<16x128xbf16>
    %184 = vector.shape_cast %180 : vector<16x128xbf16> to vector<1x16x128xbf16>
    tpu.vector_store %arg13[%181, %c0_67, %c0_68], %184 {strides = array<i32>} : memref<8x16x128xbf16, #tpu.memory_space<vmem>>, vector<1x16x128xbf16>,
    %c4_i32 = arith.constant 4 : i32
    %185 = arith.index_cast %c4_i32 : i32 to index
    %c0_69 = arith.constant 0 : index
    %c0_70 = arith.constant 0 : index
    %186 = vector.load %arg12[%185, %c0_69, %c0_70] : memref<8x16x512xbf16, #tpu.memory_space<vmem>>, vector<1x16x512xbf16>
    %187 = vector.shape_cast %186 : vector<1x16x512xbf16> to vector<16x512xbf16>
    %188 = arith.extf %187 : vector<16x512xbf16> to vector<16x512xf32>
    %189 = arith.truncf %179 : vector<16x128xf32> to vector<16x128xbf16>
    %cst_71 = arith.constant dense<0.000000e+00> : vector<16x512xf32>
    %190 = tpu.matmul %189, %10, %cst_71 {dimension_numbers = #tpu.dot_dimension_numbers<[1], [0], [0], [1], [0, 0, 1, 1], [], []>} : vector<16x128xbf16>, vector<128x512xbf16>, vector<16x512xf32> -> vector<16x512xf32>
    %191 = arith.addf %188, %190 : vector<16x512xf32>
    %192 = vector.extract_strided_slice %191 {offsets = [0, 0], sizes = [16, 128], strides = [1, 1]} : vector<16x512xf32> to vector<16x128xf32>
    %cst_72 = arith.constant 5.000000e-01 : f32
    %193 = vector.broadcast %cst_72 : f32 to vector<16x128xf32>
    %194 = arith.mulf %193, %192 : vector<16x128xf32>
    %195 = math.tanh %194 : vector<16x128xf32>
    %cst_73 = arith.constant 1.000000e+00 : f32
    %196 = vector.broadcast %cst_73 : f32 to vector<16x128xf32>
    %197 = arith.addf %195, %196 : vector<16x128xf32>
    %cst_74 = arith.constant 5.000000e-01 : f32
    %198 = vector.broadcast %cst_74 : f32 to vector<16x128xf32>
    %199 = arith.mulf %198, %197 : vector<16x128xf32>
    %200 = vector.extract_strided_slice %191 {offsets = [0, 128], sizes = [16, 128], strides = [1, 1]} : vector<16x512xf32> to vector<16x128xf32>
    %cst_75 = arith.constant 5.000000e-01 : f32
    %201 = vector.broadcast %cst_75 : f32 to vector<16x128xf32>
    %202 = arith.mulf %201, %200 : vector<16x128xf32>
    %203 = math.tanh %202 : vector<16x128xf32>
    %cst_76 = arith.constant 1.000000e+00 : f32
    %204 = vector.broadcast %cst_76 : f32 to vector<16x128xf32>
    %205 = arith.addf %203, %204 : vector<16x128xf32>
    %cst_77 = arith.constant 5.000000e-01 : f32
    %206 = vector.broadcast %cst_77 : f32 to vector<16x128xf32>
    %207 = arith.mulf %206, %205 : vector<16x128xf32>
    %208 = vector.extract_strided_slice %191 {offsets = [0, 256], sizes = [16, 128], strides = [1, 1]} : vector<16x512xf32> to vector<16x128xf32>
    %209 = math.tanh %208 : vector<16x128xf32>
    %210 = vector.extract_strided_slice %191 {offsets = [0, 384], sizes = [16, 128], strides = [1, 1]} : vector<16x512xf32> to vector<16x128xf32>
    %cst_78 = arith.constant 5.000000e-01 : f32
    %211 = vector.broadcast %cst_78 : f32 to vector<16x128xf32>
    %212 = arith.mulf %211, %210 : vector<16x128xf32>
    %213 = math.tanh %212 : vector<16x128xf32>
    %cst_79 = arith.constant 1.000000e+00 : f32
    %214 = vector.broadcast %cst_79 : f32 to vector<16x128xf32>
    %215 = arith.addf %213, %214 : vector<16x128xf32>
    %cst_80 = arith.constant 5.000000e-01 : f32
    %216 = vector.broadcast %cst_80 : f32 to vector<16x128xf32>
    %217 = arith.mulf %216, %215 : vector<16x128xf32>
    %218 = arith.mulf %207, %177 : vector<16x128xf32>
    %219 = arith.mulf %199, %209 : vector<16x128xf32>
    %220 = arith.addf %218, %219 : vector<16x128xf32>
    %221 = math.tanh %220 : vector<16x128xf32>
    %222 = arith.mulf %217, %221 : vector<16x128xf32>
    %223 = arith.truncf %222 : vector<16x128xf32> to vector<16x128xbf16>
    %224 = arith.index_cast %c4_i32 : i32 to index
    %c0_81 = arith.constant 0 : index
    %c0_82 = arith.constant 0 : index
    %225 = vector.load %arg13[%224, %c0_81, %c0_82] : memref<8x16x128xbf16, #tpu.memory_space<vmem>>, vector<1x16x128xbf16>
    %226 = vector.shape_cast %225 : vector<1x16x128xbf16> to vector<16x128xbf16>
    %227 = vector.shape_cast %223 : vector<16x128xbf16> to vector<1x16x128xbf16>
    tpu.vector_store %arg13[%224, %c0_81, %c0_82], %227 {strides = array<i32>} : memref<8x16x128xbf16, #tpu.memory_space<vmem>>, vector<1x16x128xbf16>,
    %c5_i32 = arith.constant 5 : i32
    %228 = arith.index_cast %c5_i32 : i32 to index
    %c0_83 = arith.constant 0 : index
    %c0_84 = arith.constant 0 : index
    %229 = vector.load %arg12[%228, %c0_83, %c0_84] : memref<8x16x512xbf16, #tpu.memory_space<vmem>>, vector<1x16x512xbf16>
    %230 = vector.shape_cast %229 : vector<1x16x512xbf16> to vector<16x512xbf16>
    %231 = arith.extf %230 : vector<16x512xbf16> to vector<16x512xf32>
    %232 = arith.truncf %222 : vector<16x128xf32> to vector<16x128xbf16>
    %cst_85 = arith.constant dense<0.000000e+00> : vector<16x512xf32>
    %233 = tpu.matmul %232, %10, %cst_85 {dimension_numbers = #tpu.dot_dimension_numbers<[1], [0], [0], [1], [0, 0, 1, 1], [], []>} : vector<16x128xbf16>, vector<128x512xbf16>, vector<16x512xf32> -> vector<16x512xf32>
    %234 = arith.addf %231, %233 : vector<16x512xf32>
    %235 = vector.extract_strided_slice %234 {offsets = [0, 0], sizes = [16, 128], strides = [1, 1]} : vector<16x512xf32> to vector<16x128xf32>
    %cst_86 = arith.constant 5.000000e-01 : f32
    %236 = vector.broadcast %cst_86 : f32 to vector<16x128xf32>
    %237 = arith.mulf %236, %235 : vector<16x128xf32>
    %238 = math.tanh %237 : vector<16x128xf32>
    %cst_87 = arith.constant 1.000000e+00 : f32
    %239 = vector.broadcast %cst_87 : f32 to vector<16x128xf32>
    %240 = arith.addf %238, %239 : vector<16x128xf32>
    %cst_88 = arith.constant 5.000000e-01 : f32
    %241 = vector.broadcast %cst_88 : f32 to vector<16x128xf32>
    %242 = arith.mulf %241, %240 : vector<16x128xf32>
    %243 = vector.extract_strided_slice %234 {offsets = [0, 128], sizes = [16, 128], strides = [1, 1]} : vector<16x512xf32> to vector<16x128xf32>
    %cst_89 = arith.constant 5.000000e-01 : f32
    %244 = vector.broadcast %cst_89 : f32 to vector<16x128xf32>
    %245 = arith.mulf %244, %243 : vector<16x128xf32>
    %246 = math.tanh %245 : vector<16x128xf32>
    %cst_90 = arith.constant 1.000000e+00 : f32
    %247 = vector.broadcast %cst_90 : f32 to vector<16x128xf32>
    %248 = arith.addf %246, %247 : vector<16x128xf32>
    %cst_91 = arith.constant 5.000000e-01 : f32
    %249 = vector.broadcast %cst_91 : f32 to vector<16x128xf32>
    %250 = arith.mulf %249, %248 : vector<16x128xf32>
    %251 = vector.extract_strided_slice %234 {offsets = [0, 256], sizes = [16, 128], strides = [1, 1]} : vector<16x512xf32> to vector<16x128xf32>
    %252 = math.tanh %251 : vector<16x128xf32>
    %253 = vector.extract_strided_slice %234 {offsets = [0, 384], sizes = [16, 128], strides = [1, 1]} : vector<16x512xf32> to vector<16x128xf32>
    %cst_92 = arith.constant 5.000000e-01 : f32
    %254 = vector.broadcast %cst_92 : f32 to vector<16x128xf32>
    %255 = arith.mulf %254, %253 : vector<16x128xf32>
    %256 = math.tanh %255 : vector<16x128xf32>
    %cst_93 = arith.constant 1.000000e+00 : f32
    %257 = vector.broadcast %cst_93 : f32 to vector<16x128xf32>
    %258 = arith.addf %256, %257 : vector<16x128xf32>
    %cst_94 = arith.constant 5.000000e-01 : f32
    %259 = vector.broadcast %cst_94 : f32 to vector<16x128xf32>
    %260 = arith.mulf %259, %258 : vector<16x128xf32>
    %261 = arith.mulf %250, %220 : vector<16x128xf32>
    %262 = arith.mulf %242, %252 : vector<16x128xf32>
    %263 = arith.addf %261, %262 : vector<16x128xf32>
    %264 = math.tanh %263 : vector<16x128xf32>
    %265 = arith.mulf %260, %264 : vector<16x128xf32>
    %266 = arith.truncf %265 : vector<16x128xf32> to vector<16x128xbf16>
    %267 = arith.index_cast %c5_i32 : i32 to index
    %c0_95 = arith.constant 0 : index
    %c0_96 = arith.constant 0 : index
    %268 = vector.load %arg13[%267, %c0_95, %c0_96] : memref<8x16x128xbf16, #tpu.memory_space<vmem>>, vector<1x16x128xbf16>
    %269 = vector.shape_cast %268 : vector<1x16x128xbf16> to vector<16x128xbf16>
    %270 = vector.shape_cast %266 : vector<16x128xbf16> to vector<1x16x128xbf16>
    tpu.vector_store %arg13[%267, %c0_95, %c0_96], %270 {strides = array<i32>} : memref<8x16x128xbf16, #tpu.memory_space<vmem>>, vector<1x16x128xbf16>,
    %c6_i32 = arith.constant 6 : i32
    %271 = arith.index_cast %c6_i32 : i32 to index
    %c0_97 = arith.constant 0 : index
    %c0_98 = arith.constant 0 : index
    %272 = vector.load %arg12[%271, %c0_97, %c0_98] : memref<8x16x512xbf16, #tpu.memory_space<vmem>>, vector<1x16x512xbf16>
    %273 = vector.shape_cast %272 : vector<1x16x512xbf16> to vector<16x512xbf16>
    %274 = arith.extf %273 : vector<16x512xbf16> to vector<16x512xf32>
    %275 = arith.truncf %265 : vector<16x128xf32> to vector<16x128xbf16>
    %cst_99 = arith.constant dense<0.000000e+00> : vector<16x512xf32>
    %276 = tpu.matmul %275, %10, %cst_99 {dimension_numbers = #tpu.dot_dimension_numbers<[1], [0], [0], [1], [0, 0, 1, 1], [], []>} : vector<16x128xbf16>, vector<128x512xbf16>, vector<16x512xf32> -> vector<16x512xf32>
    %277 = arith.addf %274, %276 : vector<16x512xf32>
    %278 = vector.extract_strided_slice %277 {offsets = [0, 0], sizes = [16, 128], strides = [1, 1]} : vector<16x512xf32> to vector<16x128xf32>
    %cst_100 = arith.constant 5.000000e-01 : f32
    %279 = vector.broadcast %cst_100 : f32 to vector<16x128xf32>
    %280 = arith.mulf %279, %278 : vector<16x128xf32>
    %281 = math.tanh %280 : vector<16x128xf32>
    %cst_101 = arith.constant 1.000000e+00 : f32
    %282 = vector.broadcast %cst_101 : f32 to vector<16x128xf32>
    %283 = arith.addf %281, %282 : vector<16x128xf32>
    %cst_102 = arith.constant 5.000000e-01 : f32
    %284 = vector.broadcast %cst_102 : f32 to vector<16x128xf32>
    %285 = arith.mulf %284, %283 : vector<16x128xf32>
    %286 = vector.extract_strided_slice %277 {offsets = [0, 128], sizes = [16, 128], strides = [1, 1]} : vector<16x512xf32> to vector<16x128xf32>
    %cst_103 = arith.constant 5.000000e-01 : f32
    %287 = vector.broadcast %cst_103 : f32 to vector<16x128xf32>
    %288 = arith.mulf %287, %286 : vector<16x128xf32>
    %289 = math.tanh %288 : vector<16x128xf32>
    %cst_104 = arith.constant 1.000000e+00 : f32
    %290 = vector.broadcast %cst_104 : f32 to vector<16x128xf32>
    %291 = arith.addf %289, %290 : vector<16x128xf32>
    %cst_105 = arith.constant 5.000000e-01 : f32
    %292 = vector.broadcast %cst_105 : f32 to vector<16x128xf32>
    %293 = arith.mulf %292, %291 : vector<16x128xf32>
    %294 = vector.extract_strided_slice %277 {offsets = [0, 256], sizes = [16, 128], strides = [1, 1]} : vector<16x512xf32> to vector<16x128xf32>
    %295 = math.tanh %294 : vector<16x128xf32>
    %296 = vector.extract_strided_slice %277 {offsets = [0, 384], sizes = [16, 128], strides = [1, 1]} : vector<16x512xf32> to vector<16x128xf32>
    %cst_106 = arith.constant 5.000000e-01 : f32
    %297 = vector.broadcast %cst_106 : f32 to vector<16x128xf32>
    %298 = arith.mulf %297, %296 : vector<16x128xf32>
    %299 = math.tanh %298 : vector<16x128xf32>
    %cst_107 = arith.constant 1.000000e+00 : f32
    %300 = vector.broadcast %cst_107 : f32 to vector<16x128xf32>
    %301 = arith.addf %299, %300 : vector<16x128xf32>
    %cst_108 = arith.constant 5.000000e-01 : f32
    %302 = vector.broadcast %cst_108 : f32 to vector<16x128xf32>
    %303 = arith.mulf %302, %301 : vector<16x128xf32>
    %304 = arith.mulf %293, %263 : vector<16x128xf32>
    %305 = arith.mulf %285, %295 : vector<16x128xf32>
    %306 = arith.addf %304, %305 : vector<16x128xf32>
    %307 = math.tanh %306 : vector<16x128xf32>
    %308 = arith.mulf %303, %307 : vector<16x128xf32>
    %309 = arith.truncf %308 : vector<16x128xf32> to vector<16x128xbf16>
    %310 = arith.index_cast %c6_i32 : i32 to index
    %c0_109 = arith.constant 0 : index
    %c0_110 = arith.constant 0 : index
    %311 = vector.load %arg13[%310, %c0_109, %c0_110] : memref<8x16x128xbf16, #tpu.memory_space<vmem>>, vector<1x16x128xbf16>
    %312 = vector.shape_cast %311 : vector<1x16x128xbf16> to vector<16x128xbf16>
    %313 = vector.shape_cast %309 : vector<16x128xbf16> to vector<1x16x128xbf16>
    tpu.vector_store %arg13[%310, %c0_109, %c0_110], %313 {strides = array<i32>} : memref<8x16x128xbf16, #tpu.memory_space<vmem>>, vector<1x16x128xbf16>,
    %c7_i32 = arith.constant 7 : i32
    %314 = arith.index_cast %c7_i32 : i32 to index
    %c0_111 = arith.constant 0 : index
    %c0_112 = arith.constant 0 : index
    %315 = vector.load %arg12[%314, %c0_111, %c0_112] : memref<8x16x512xbf16, #tpu.memory_space<vmem>>, vector<1x16x512xbf16>
    %316 = vector.shape_cast %315 : vector<1x16x512xbf16> to vector<16x512xbf16>
    %317 = arith.extf %316 : vector<16x512xbf16> to vector<16x512xf32>
    %318 = arith.truncf %308 : vector<16x128xf32> to vector<16x128xbf16>
    %cst_113 = arith.constant dense<0.000000e+00> : vector<16x512xf32>
    %319 = tpu.matmul %318, %10, %cst_113 {dimension_numbers = #tpu.dot_dimension_numbers<[1], [0], [0], [1], [0, 0, 1, 1], [], []>} : vector<16x128xbf16>, vector<128x512xbf16>, vector<16x512xf32> -> vector<16x512xf32>
    %320 = arith.addf %317, %319 : vector<16x512xf32>
    %321 = vector.extract_strided_slice %320 {offsets = [0, 0], sizes = [16, 128], strides = [1, 1]} : vector<16x512xf32> to vector<16x128xf32>
    %cst_114 = arith.constant 5.000000e-01 : f32
    %322 = vector.broadcast %cst_114 : f32 to vector<16x128xf32>
    %323 = arith.mulf %322, %321 : vector<16x128xf32>
    %324 = math.tanh %323 : vector<16x128xf32>
    %cst_115 = arith.constant 1.000000e+00 : f32
    %325 = vector.broadcast %cst_115 : f32 to vector<16x128xf32>
    %326 = arith.addf %324, %325 : vector<16x128xf32>
    %cst_116 = arith.constant 5.000000e-01 : f32
    %327 = vector.broadcast %cst_116 : f32 to vector<16x128xf32>
    %328 = arith.mulf %327, %326 : vector<16x128xf32>
    %329 = vector.extract_strided_slice %320 {offsets = [0, 128], sizes = [16, 128], strides = [1, 1]} : vector<16x512xf32> to vector<16x128xf32>
    %cst_117 = arith.constant 5.000000e-01 : f32
    %330 = vector.broadcast %cst_117 : f32 to vector<16x128xf32>
    %331 = arith.mulf %330, %329 : vector<16x128xf32>
    %332 = math.tanh %331 : vector<16x128xf32>
    %cst_118 = arith.constant 1.000000e+00 : f32
    %333 = vector.broadcast %cst_118 : f32 to vector<16x128xf32>
    %334 = arith.addf %332, %333 : vector<16x128xf32>
    %cst_119 = arith.constant 5.000000e-01 : f32
    %335 = vector.broadcast %cst_119 : f32 to vector<16x128xf32>
    %336 = arith.mulf %335, %334 : vector<16x128xf32>
    %337 = vector.extract_strided_slice %320 {offsets = [0, 256], sizes = [16, 128], strides = [1, 1]} : vector<16x512xf32> to vector<16x128xf32>
    %338 = math.tanh %337 : vector<16x128xf32>
    %339 = vector.extract_strided_slice %320 {offsets = [0, 384], sizes = [16, 128], strides = [1, 1]} : vector<16x512xf32> to vector<16x128xf32>
    %cst_120 = arith.constant 5.000000e-01 : f32
    %340 = vector.broadcast %cst_120 : f32 to vector<16x128xf32>
    %341 = arith.mulf %340, %339 : vector<16x128xf32>
    %342 = math.tanh %341 : vector<16x128xf32>
    %cst_121 = arith.constant 1.000000e+00 : f32
    %343 = vector.broadcast %cst_121 : f32 to vector<16x128xf32>
    %344 = arith.addf %342, %343 : vector<16x128xf32>
    %cst_122 = arith.constant 5.000000e-01 : f32
    %345 = vector.broadcast %cst_122 : f32 to vector<16x128xf32>
    %346 = arith.mulf %345, %344 : vector<16x128xf32>
    %347 = arith.mulf %336, %306 : vector<16x128xf32>
    %348 = arith.mulf %328, %338 : vector<16x128xf32>
    %349 = arith.addf %347, %348 : vector<16x128xf32>
    %350 = math.tanh %349 : vector<16x128xf32>
    %351 = arith.mulf %346, %350 : vector<16x128xf32>
    %352 = arith.truncf %351 : vector<16x128xf32> to vector<16x128xbf16>
    %353 = arith.index_cast %c7_i32 : i32 to index
    %c0_123 = arith.constant 0 : index
    %c0_124 = arith.constant 0 : index
    %354 = vector.load %arg13[%353, %c0_123, %c0_124] : memref<8x16x128xbf16, #tpu.memory_space<vmem>>, vector<1x16x128xbf16>
    %355 = vector.shape_cast %354 : vector<1x16x128xbf16> to vector<16x128xbf16>
    %356 = vector.shape_cast %352 : vector<16x128xbf16> to vector<1x16x128xbf16>
    tpu.vector_store %arg13[%353, %c0_123, %c0_124], %356 {strides = array<i32>} : memref<8x16x128xbf16, #tpu.memory_space<vmem>>, vector<1x16x128xbf16>,
    %c8_i32 = arith.constant 8 : i32
    %c0_125 = arith.constant 0 : index
    %c0_126 = arith.constant 0 : index
    %c0_127 = arith.constant 0 : index
    %357 = vector.load %arg11[%c0_125, %c0_126, %c0_127] : memref<2x16x128xf32, #tpu.memory_space<vmem>>, vector<1x16x128xf32>
    %358 = vector.shape_cast %357 : vector<1x16x128xf32> to vector<16x128xf32>
    %359 = vector.shape_cast %351 : vector<16x128xf32> to vector<1x16x128xf32>
    tpu.vector_store %arg11[%c0_125, %c0_126, %c0_127], %359 {strides = array<i32>} : memref<2x16x128xf32, #tpu.memory_space<vmem>>, vector<1x16x128xf32>,
    %c0_128 = arith.constant 0 : index
    %c0_129 = arith.constant 0 : index
    %c0_130 = arith.constant 0 : index
    %360 = vector.load %arg13[%c0_128, %c0_129, %c0_130] : memref<8x16x128xbf16, #tpu.memory_space<vmem>>, vector<8x16x128xbf16>
    %361 = vector.shape_cast %360 : vector<8x16x128xbf16> to vector<128x128xbf16>
    %c0_131 = arith.constant 0 : index
    %c0_132 = arith.constant 0 : index
    %362 = vector.load %arg5[%c0_131, %c0_132] : memref<128x512xbf16, #tpu.memory_space<vmem>>, vector<128x512xbf16>
    %cst_133 = arith.constant dense<0.000000e+00> : vector<128x512xf32>
    %363 = tpu.matmul %361, %362, %cst_133 {dimension_numbers = #tpu.dot_dimension_numbers<[1], [0], [0], [1], [0, 0, 1, 1], [], []>} : vector<128x128xbf16>, vector<128x512xbf16>, vector<128x512xf32> -> vector<128x512xf32>
    %c0_134 = arith.constant 0 : index
    %c0_135 = arith.constant 0 : index
    %364 = vector.load %arg7[%c0_134, %c0_135] : memref<1x512xf32, #tpu.memory_space<vmem>>, vector<1x512xf32>
    %365 = vector.broadcast %364 : vector<1x512xf32> to vector<128x512xf32>
    %366 = arith.addf %363, %365 : vector<128x512xf32>
    %367 = vector.shape_cast %366 : vector<128x512xf32> to vector<8x16x512xf32>
    %368 = arith.truncf %367 : vector<8x16x512xf32> to vector<8x16x512xbf16>
    %c0_136 = arith.constant 0 : index
    %c0_137 = arith.constant 0 : index
    %c0_138 = arith.constant 0 : index
    %369 = vector.load %arg12[%c0_136, %c0_137, %c0_138] : memref<8x16x512xbf16, #tpu.memory_space<vmem>>, vector<8x16x512xbf16>
    tpu.vector_store %arg12[%c0_136, %c0_137, %c0_138], %368 {strides = array<i32>} : memref<8x16x512xbf16, #tpu.memory_space<vmem>>, vector<8x16x512xbf16>,
    %c0_139 = arith.constant 0 : index
    %c0_140 = arith.constant 0 : index
    %370 = vector.load %arg6[%c0_139, %c0_140] : memref<128x512xbf16, #tpu.memory_space<vmem>>, vector<128x512xbf16>
    %cst_141 = arith.constant 0.000000e+00 : f32
    %371 = vector.broadcast %cst_141 : f32 to vector<16x128xf32>
    %cst_142 = arith.constant 0.000000e+00 : f32
    %372 = vector.broadcast %cst_142 : f32 to vector<16x128xf32>
    %c0_i32_143 = arith.constant 0 : i32
    %373 = arith.index_cast %c0_i32_143 : i32 to index
    %c0_144 = arith.constant 0 : index
    %c0_145 = arith.constant 0 : index
    %374 = vector.load %arg12[%373, %c0_144, %c0_145] : memref<8x16x512xbf16, #tpu.memory_space<vmem>>, vector<1x16x512xbf16>
    %375 = vector.shape_cast %374 : vector<1x16x512xbf16> to vector<16x512xbf16>
    %376 = arith.extf %375 : vector<16x512xbf16> to vector<16x512xf32>
    %377 = arith.truncf %371 : vector<16x128xf32> to vector<16x128xbf16>
    %cst_146 = arith.constant dense<0.000000e+00> : vector<16x512xf32>
    %378 = tpu.matmul %377, %370, %cst_146 {dimension_numbers = #tpu.dot_dimension_numbers<[1], [0], [0], [1], [0, 0, 1, 1], [], []>} : vector<16x128xbf16>, vector<128x512xbf16>, vector<16x512xf32> -> vector<16x512xf32>
    %379 = arith.addf %376, %378 : vector<16x512xf32>
    %380 = vector.extract_strided_slice %379 {offsets = [0, 0], sizes = [16, 128], strides = [1, 1]} : vector<16x512xf32> to vector<16x128xf32>
    %cst_147 = arith.constant 5.000000e-01 : f32
    %381 = vector.broadcast %cst_147 : f32 to vector<16x128xf32>
    %382 = arith.mulf %381, %380 : vector<16x128xf32>
    %383 = math.tanh %382 : vector<16x128xf32>
    %cst_148 = arith.constant 1.000000e+00 : f32
    %384 = vector.broadcast %cst_148 : f32 to vector<16x128xf32>
    %385 = arith.addf %383, %384 : vector<16x128xf32>
    %cst_149 = arith.constant 5.000000e-01 : f32
    %386 = vector.broadcast %cst_149 : f32 to vector<16x128xf32>
    %387 = arith.mulf %386, %385 : vector<16x128xf32>
    %388 = vector.extract_strided_slice %379 {offsets = [0, 128], sizes = [16, 128], strides = [1, 1]} : vector<16x512xf32> to vector<16x128xf32>
    %cst_150 = arith.constant 5.000000e-01 : f32
    %389 = vector.broadcast %cst_150 : f32 to vector<16x128xf32>
    %390 = arith.mulf %389, %388 : vector<16x128xf32>
    %391 = math.tanh %390 : vector<16x128xf32>
    %cst_151 = arith.constant 1.000000e+00 : f32
    %392 = vector.broadcast %cst_151 : f32 to vector<16x128xf32>
    %393 = arith.addf %391, %392 : vector<16x128xf32>
    %cst_152 = arith.constant 5.000000e-01 : f32
    %394 = vector.broadcast %cst_152 : f32 to vector<16x128xf32>
    %395 = arith.mulf %394, %393 : vector<16x128xf32>
    %396 = vector.extract_strided_slice %379 {offsets = [0, 256], sizes = [16, 128], strides = [1, 1]} : vector<16x512xf32> to vector<16x128xf32>
    %397 = math.tanh %396 : vector<16x128xf32>
    %398 = vector.extract_strided_slice %379 {offsets = [0, 384], sizes = [16, 128], strides = [1, 1]} : vector<16x512xf32> to vector<16x128xf32>
    %cst_153 = arith.constant 5.000000e-01 : f32
    %399 = vector.broadcast %cst_153 : f32 to vector<16x128xf32>
    %400 = arith.mulf %399, %398 : vector<16x128xf32>
    %401 = math.tanh %400 : vector<16x128xf32>
    %cst_154 = arith.constant 1.000000e+00 : f32
    %402 = vector.broadcast %cst_154 : f32 to vector<16x128xf32>
    %403 = arith.addf %401, %402 : vector<16x128xf32>
    %cst_155 = arith.constant 5.000000e-01 : f32
    %404 = vector.broadcast %cst_155 : f32 to vector<16x128xf32>
    %405 = arith.mulf %404, %403 : vector<16x128xf32>
    %406 = arith.mulf %395, %372 : vector<16x128xf32>
    %407 = arith.mulf %387, %397 : vector<16x128xf32>
    %408 = arith.addf %406, %407 : vector<16x128xf32>
    %409 = math.tanh %408 : vector<16x128xf32>
    %410 = arith.mulf %405, %409 : vector<16x128xf32>
    %c1_i32_156 = arith.constant 1 : i32
    %411 = arith.index_cast %c1_i32_156 : i32 to index
    %c0_157 = arith.constant 0 : index
    %c0_158 = arith.constant 0 : index
    %412 = vector.load %arg12[%411, %c0_157, %c0_158] : memref<8x16x512xbf16, #tpu.memory_space<vmem>>, vector<1x16x512xbf16>
    %413 = vector.shape_cast %412 : vector<1x16x512xbf16> to vector<16x512xbf16>
    %414 = arith.extf %413 : vector<16x512xbf16> to vector<16x512xf32>
    %415 = arith.truncf %410 : vector<16x128xf32> to vector<16x128xbf16>
    %cst_159 = arith.constant dense<0.000000e+00> : vector<16x512xf32>
    %416 = tpu.matmul %415, %370, %cst_159 {dimension_numbers = #tpu.dot_dimension_numbers<[1], [0], [0], [1], [0, 0, 1, 1], [], []>} : vector<16x128xbf16>, vector<128x512xbf16>, vector<16x512xf32> -> vector<16x512xf32>
    %417 = arith.addf %414, %416 : vector<16x512xf32>
    %418 = vector.extract_strided_slice %417 {offsets = [0, 0], sizes = [16, 128], strides = [1, 1]} : vector<16x512xf32> to vector<16x128xf32>
    %cst_160 = arith.constant 5.000000e-01 : f32
    %419 = vector.broadcast %cst_160 : f32 to vector<16x128xf32>
    %420 = arith.mulf %419, %418 : vector<16x128xf32>
    %421 = math.tanh %420 : vector<16x128xf32>
    %cst_161 = arith.constant 1.000000e+00 : f32
    %422 = vector.broadcast %cst_161 : f32 to vector<16x128xf32>
    %423 = arith.addf %421, %422 : vector<16x128xf32>
    %cst_162 = arith.constant 5.000000e-01 : f32
    %424 = vector.broadcast %cst_162 : f32 to vector<16x128xf32>
    %425 = arith.mulf %424, %423 : vector<16x128xf32>
    %426 = vector.extract_strided_slice %417 {offsets = [0, 128], sizes = [16, 128], strides = [1, 1]} : vector<16x512xf32> to vector<16x128xf32>
    %cst_163 = arith.constant 5.000000e-01 : f32
    %427 = vector.broadcast %cst_163 : f32 to vector<16x128xf32>
    %428 = arith.mulf %427, %426 : vector<16x128xf32>
    %429 = math.tanh %428 : vector<16x128xf32>
    %cst_164 = arith.constant 1.000000e+00 : f32
    %430 = vector.broadcast %cst_164 : f32 to vector<16x128xf32>
    %431 = arith.addf %429, %430 : vector<16x128xf32>
    %cst_165 = arith.constant 5.000000e-01 : f32
    %432 = vector.broadcast %cst_165 : f32 to vector<16x128xf32>
    %433 = arith.mulf %432, %431 : vector<16x128xf32>
    %434 = vector.extract_strided_slice %417 {offsets = [0, 256], sizes = [16, 128], strides = [1, 1]} : vector<16x512xf32> to vector<16x128xf32>
    %435 = math.tanh %434 : vector<16x128xf32>
    %436 = vector.extract_strided_slice %417 {offsets = [0, 384], sizes = [16, 128], strides = [1, 1]} : vector<16x512xf32> to vector<16x128xf32>
    %cst_166 = arith.constant 5.000000e-01 : f32
    %437 = vector.broadcast %cst_166 : f32 to vector<16x128xf32>
    %438 = arith.mulf %437, %436 : vector<16x128xf32>
    %439 = math.tanh %438 : vector<16x128xf32>
    %cst_167 = arith.constant 1.000000e+00 : f32
    %440 = vector.broadcast %cst_167 : f32 to vector<16x128xf32>
    %441 = arith.addf %439, %440 : vector<16x128xf32>
    %cst_168 = arith.constant 5.000000e-01 : f32
    %442 = vector.broadcast %cst_168 : f32 to vector<16x128xf32>
    %443 = arith.mulf %442, %441 : vector<16x128xf32>
    %444 = arith.mulf %433, %408 : vector<16x128xf32>
    %445 = arith.mulf %425, %435 : vector<16x128xf32>
    %446 = arith.addf %444, %445 : vector<16x128xf32>
    %447 = math.tanh %446 : vector<16x128xf32>
    %448 = arith.mulf %443, %447 : vector<16x128xf32>
    %c2_i32_169 = arith.constant 2 : i32
    %449 = arith.index_cast %c2_i32_169 : i32 to index
    %c0_170 = arith.constant 0 : index
    %c0_171 = arith.constant 0 : index
    %450 = vector.load %arg12[%449, %c0_170, %c0_171] : memref<8x16x512xbf16, #tpu.memory_space<vmem>>, vector<1x16x512xbf16>
    %451 = vector.shape_cast %450 : vector<1x16x512xbf16> to vector<16x512xbf16>
    %452 = arith.extf %451 : vector<16x512xbf16> to vector<16x512xf32>
    %453 = arith.truncf %448 : vector<16x128xf32> to vector<16x128xbf16>
    %cst_172 = arith.constant dense<0.000000e+00> : vector<16x512xf32>
    %454 = tpu.matmul %453, %370, %cst_172 {dimension_numbers = #tpu.dot_dimension_numbers<[1], [0], [0], [1], [0, 0, 1, 1], [], []>} : vector<16x128xbf16>, vector<128x512xbf16>, vector<16x512xf32> -> vector<16x512xf32>
    %455 = arith.addf %452, %454 : vector<16x512xf32>
    %456 = vector.extract_strided_slice %455 {offsets = [0, 0], sizes = [16, 128], strides = [1, 1]} : vector<16x512xf32> to vector<16x128xf32>
    %cst_173 = arith.constant 5.000000e-01 : f32
    %457 = vector.broadcast %cst_173 : f32 to vector<16x128xf32>
    %458 = arith.mulf %457, %456 : vector<16x128xf32>
    %459 = math.tanh %458 : vector<16x128xf32>
    %cst_174 = arith.constant 1.000000e+00 : f32
    %460 = vector.broadcast %cst_174 : f32 to vector<16x128xf32>
    %461 = arith.addf %459, %460 : vector<16x128xf32>
    %cst_175 = arith.constant 5.000000e-01 : f32
    %462 = vector.broadcast %cst_175 : f32 to vector<16x128xf32>
    %463 = arith.mulf %462, %461 : vector<16x128xf32>
    %464 = vector.extract_strided_slice %455 {offsets = [0, 128], sizes = [16, 128], strides = [1, 1]} : vector<16x512xf32> to vector<16x128xf32>
    %cst_176 = arith.constant 5.000000e-01 : f32
    %465 = vector.broadcast %cst_176 : f32 to vector<16x128xf32>
    %466 = arith.mulf %465, %464 : vector<16x128xf32>
    %467 = math.tanh %466 : vector<16x128xf32>
    %cst_177 = arith.constant 1.000000e+00 : f32
    %468 = vector.broadcast %cst_177 : f32 to vector<16x128xf32>
    %469 = arith.addf %467, %468 : vector<16x128xf32>
    %cst_178 = arith.constant 5.000000e-01 : f32
    %470 = vector.broadcast %cst_178 : f32 to vector<16x128xf32>
    %471 = arith.mulf %470, %469 : vector<16x128xf32>
    %472 = vector.extract_strided_slice %455 {offsets = [0, 256], sizes = [16, 128], strides = [1, 1]} : vector<16x512xf32> to vector<16x128xf32>
    %473 = math.tanh %472 : vector<16x128xf32>
    %474 = vector.extract_strided_slice %455 {offsets = [0, 384], sizes = [16, 128], strides = [1, 1]} : vector<16x512xf32> to vector<16x128xf32>
    %cst_179 = arith.constant 5.000000e-01 : f32
    %475 = vector.broadcast %cst_179 : f32 to vector<16x128xf32>
    %476 = arith.mulf %475, %474 : vector<16x128xf32>
    %477 = math.tanh %476 : vector<16x128xf32>
    %cst_180 = arith.constant 1.000000e+00 : f32
    %478 = vector.broadcast %cst_180 : f32 to vector<16x128xf32>
    %479 = arith.addf %477, %478 : vector<16x128xf32>
    %cst_181 = arith.constant 5.000000e-01 : f32
    %480 = vector.broadcast %cst_181 : f32 to vector<16x128xf32>
    %481 = arith.mulf %480, %479 : vector<16x128xf32>
    %482 = arith.mulf %471, %446 : vector<16x128xf32>
    %483 = arith.mulf %463, %473 : vector<16x128xf32>
    %484 = arith.addf %482, %483 : vector<16x128xf32>
    %485 = math.tanh %484 : vector<16x128xf32>
    %486 = arith.mulf %481, %485 : vector<16x128xf32>
    %c3_i32_182 = arith.constant 3 : i32
    %487 = arith.index_cast %c3_i32_182 : i32 to index
    %c0_183 = arith.constant 0 : index
    %c0_184 = arith.constant 0 : index
    %488 = vector.load %arg12[%487, %c0_183, %c0_184] : memref<8x16x512xbf16, #tpu.memory_space<vmem>>, vector<1x16x512xbf16>
    %489 = vector.shape_cast %488 : vector<1x16x512xbf16> to vector<16x512xbf16>
    %490 = arith.extf %489 : vector<16x512xbf16> to vector<16x512xf32>
    %491 = arith.truncf %486 : vector<16x128xf32> to vector<16x128xbf16>
    %cst_185 = arith.constant dense<0.000000e+00> : vector<16x512xf32>
    %492 = tpu.matmul %491, %370, %cst_185 {dimension_numbers = #tpu.dot_dimension_numbers<[1], [0], [0], [1], [0, 0, 1, 1], [], []>} : vector<16x128xbf16>, vector<128x512xbf16>, vector<16x512xf32> -> vector<16x512xf32>
    %493 = arith.addf %490, %492 : vector<16x512xf32>
    %494 = vector.extract_strided_slice %493 {offsets = [0, 0], sizes = [16, 128], strides = [1, 1]} : vector<16x512xf32> to vector<16x128xf32>
    %cst_186 = arith.constant 5.000000e-01 : f32
    %495 = vector.broadcast %cst_186 : f32 to vector<16x128xf32>
    %496 = arith.mulf %495, %494 : vector<16x128xf32>
    %497 = math.tanh %496 : vector<16x128xf32>
    %cst_187 = arith.constant 1.000000e+00 : f32
    %498 = vector.broadcast %cst_187 : f32 to vector<16x128xf32>
    %499 = arith.addf %497, %498 : vector<16x128xf32>
    %cst_188 = arith.constant 5.000000e-01 : f32
    %500 = vector.broadcast %cst_188 : f32 to vector<16x128xf32>
    %501 = arith.mulf %500, %499 : vector<16x128xf32>
    %502 = vector.extract_strided_slice %493 {offsets = [0, 128], sizes = [16, 128], strides = [1, 1]} : vector<16x512xf32> to vector<16x128xf32>
    %cst_189 = arith.constant 5.000000e-01 : f32
    %503 = vector.broadcast %cst_189 : f32 to vector<16x128xf32>
    %504 = arith.mulf %503, %502 : vector<16x128xf32>
    %505 = math.tanh %504 : vector<16x128xf32>
    %cst_190 = arith.constant 1.000000e+00 : f32
    %506 = vector.broadcast %cst_190 : f32 to vector<16x128xf32>
    %507 = arith.addf %505, %506 : vector<16x128xf32>
    %cst_191 = arith.constant 5.000000e-01 : f32
    %508 = vector.broadcast %cst_191 : f32 to vector<16x128xf32>
    %509 = arith.mulf %508, %507 : vector<16x128xf32>
    %510 = vector.extract_strided_slice %493 {offsets = [0, 256], sizes = [16, 128], strides = [1, 1]} : vector<16x512xf32> to vector<16x128xf32>
    %511 = math.tanh %510 : vector<16x128xf32>
    %512 = vector.extract_strided_slice %493 {offsets = [0, 384], sizes = [16, 128], strides = [1, 1]} : vector<16x512xf32> to vector<16x128xf32>
    %cst_192 = arith.constant 5.000000e-01 : f32
    %513 = vector.broadcast %cst_192 : f32 to vector<16x128xf32>
    %514 = arith.mulf %513, %512 : vector<16x128xf32>
    %515 = math.tanh %514 : vector<16x128xf32>
    %cst_193 = arith.constant 1.000000e+00 : f32
    %516 = vector.broadcast %cst_193 : f32 to vector<16x128xf32>
    %517 = arith.addf %515, %516 : vector<16x128xf32>
    %cst_194 = arith.constant 5.000000e-01 : f32
    %518 = vector.broadcast %cst_194 : f32 to vector<16x128xf32>
    %519 = arith.mulf %518, %517 : vector<16x128xf32>
    %520 = arith.mulf %509, %484 : vector<16x128xf32>
    %521 = arith.mulf %501, %511 : vector<16x128xf32>
    %522 = arith.addf %520, %521 : vector<16x128xf32>
    %523 = math.tanh %522 : vector<16x128xf32>
    %524 = arith.mulf %519, %523 : vector<16x128xf32>
    %c4_i32_195 = arith.constant 4 : i32
    %525 = arith.index_cast %c4_i32_195 : i32 to index
    %c0_196 = arith.constant 0 : index
    %c0_197 = arith.constant 0 : index
    %526 = vector.load %arg12[%525, %c0_196, %c0_197] : memref<8x16x512xbf16, #tpu.memory_space<vmem>>, vector<1x16x512xbf16>
    %527 = vector.shape_cast %526 : vector<1x16x512xbf16> to vector<16x512xbf16>
    %528 = arith.extf %527 : vector<16x512xbf16> to vector<16x512xf32>
    %529 = arith.truncf %524 : vector<16x128xf32> to vector<16x128xbf16>
    %cst_198 = arith.constant dense<0.000000e+00> : vector<16x512xf32>
    %530 = tpu.matmul %529, %370, %cst_198 {dimension_numbers = #tpu.dot_dimension_numbers<[1], [0], [0], [1], [0, 0, 1, 1], [], []>} : vector<16x128xbf16>, vector<128x512xbf16>, vector<16x512xf32> -> vector<16x512xf32>
    %531 = arith.addf %528, %530 : vector<16x512xf32>
    %532 = vector.extract_strided_slice %531 {offsets = [0, 0], sizes = [16, 128], strides = [1, 1]} : vector<16x512xf32> to vector<16x128xf32>
    %cst_199 = arith.constant 5.000000e-01 : f32
    %533 = vector.broadcast %cst_199 : f32 to vector<16x128xf32>
    %534 = arith.mulf %533, %532 : vector<16x128xf32>
    %535 = math.tanh %534 : vector<16x128xf32>
    %cst_200 = arith.constant 1.000000e+00 : f32
    %536 = vector.broadcast %cst_200 : f32 to vector<16x128xf32>
    %537 = arith.addf %535, %536 : vector<16x128xf32>
    %cst_201 = arith.constant 5.000000e-01 : f32
    %538 = vector.broadcast %cst_201 : f32 to vector<16x128xf32>
    %539 = arith.mulf %538, %537 : vector<16x128xf32>
    %540 = vector.extract_strided_slice %531 {offsets = [0, 128], sizes = [16, 128], strides = [1, 1]} : vector<16x512xf32> to vector<16x128xf32>
    %cst_202 = arith.constant 5.000000e-01 : f32
    %541 = vector.broadcast %cst_202 : f32 to vector<16x128xf32>
    %542 = arith.mulf %541, %540 : vector<16x128xf32>
    %543 = math.tanh %542 : vector<16x128xf32>
    %cst_203 = arith.constant 1.000000e+00 : f32
    %544 = vector.broadcast %cst_203 : f32 to vector<16x128xf32>
    %545 = arith.addf %543, %544 : vector<16x128xf32>
    %cst_204 = arith.constant 5.000000e-01 : f32
    %546 = vector.broadcast %cst_204 : f32 to vector<16x128xf32>
    %547 = arith.mulf %546, %545 : vector<16x128xf32>
    %548 = vector.extract_strided_slice %531 {offsets = [0, 256], sizes = [16, 128], strides = [1, 1]} : vector<16x512xf32> to vector<16x128xf32>
    %549 = math.tanh %548 : vector<16x128xf32>
    %550 = vector.extract_strided_slice %531 {offsets = [0, 384], sizes = [16, 128], strides = [1, 1]} : vector<16x512xf32> to vector<16x128xf32>
    %cst_205 = arith.constant 5.000000e-01 : f32
    %551 = vector.broadcast %cst_205 : f32 to vector<16x128xf32>
    %552 = arith.mulf %551, %550 : vector<16x128xf32>
    %553 = math.tanh %552 : vector<16x128xf32>
    %cst_206 = arith.constant 1.000000e+00 : f32
    %554 = vector.broadcast %cst_206 : f32 to vector<16x128xf32>
    %555 = arith.addf %553, %554 : vector<16x128xf32>
    %cst_207 = arith.constant 5.000000e-01 : f32
    %556 = vector.broadcast %cst_207 : f32 to vector<16x128xf32>
    %557 = arith.mulf %556, %555 : vector<16x128xf32>
    %558 = arith.mulf %547, %522 : vector<16x128xf32>
    %559 = arith.mulf %539, %549 : vector<16x128xf32>
    %560 = arith.addf %558, %559 : vector<16x128xf32>
    %561 = math.tanh %560 : vector<16x128xf32>
    %562 = arith.mulf %557, %561 : vector<16x128xf32>
    %c5_i32_208 = arith.constant 5 : i32
    %563 = arith.index_cast %c5_i32_208 : i32 to index
    %c0_209 = arith.constant 0 : index
    %c0_210 = arith.constant 0 : index
    %564 = vector.load %arg12[%563, %c0_209, %c0_210] : memref<8x16x512xbf16, #tpu.memory_space<vmem>>, vector<1x16x512xbf16>
    %565 = vector.shape_cast %564 : vector<1x16x512xbf16> to vector<16x512xbf16>
    %566 = arith.extf %565 : vector<16x512xbf16> to vector<16x512xf32>
    %567 = arith.truncf %562 : vector<16x128xf32> to vector<16x128xbf16>
    %cst_211 = arith.constant dense<0.000000e+00> : vector<16x512xf32>
    %568 = tpu.matmul %567, %370, %cst_211 {dimension_numbers = #tpu.dot_dimension_numbers<[1], [0], [0], [1], [0, 0, 1, 1], [], []>} : vector<16x128xbf16>, vector<128x512xbf16>, vector<16x512xf32> -> vector<16x512xf32>
    %569 = arith.addf %566, %568 : vector<16x512xf32>
    %570 = vector.extract_strided_slice %569 {offsets = [0, 0], sizes = [16, 128], strides = [1, 1]} : vector<16x512xf32> to vector<16x128xf32>
    %cst_212 = arith.constant 5.000000e-01 : f32
    %571 = vector.broadcast %cst_212 : f32 to vector<16x128xf32>
    %572 = arith.mulf %571, %570 : vector<16x128xf32>
    %573 = math.tanh %572 : vector<16x128xf32>
    %cst_213 = arith.constant 1.000000e+00 : f32
    %574 = vector.broadcast %cst_213 : f32 to vector<16x128xf32>
    %575 = arith.addf %573, %574 : vector<16x128xf32>
    %cst_214 = arith.constant 5.000000e-01 : f32
    %576 = vector.broadcast %cst_214 : f32 to vector<16x128xf32>
    %577 = arith.mulf %576, %575 : vector<16x128xf32>
    %578 = vector.extract_strided_slice %569 {offsets = [0, 128], sizes = [16, 128], strides = [1, 1]} : vector<16x512xf32> to vector<16x128xf32>
    %cst_215 = arith.constant 5.000000e-01 : f32
    %579 = vector.broadcast %cst_215 : f32 to vector<16x128xf32>
    %580 = arith.mulf %579, %578 : vector<16x128xf32>
    %581 = math.tanh %580 : vector<16x128xf32>
    %cst_216 = arith.constant 1.000000e+00 : f32
    %582 = vector.broadcast %cst_216 : f32 to vector<16x128xf32>
    %583 = arith.addf %581, %582 : vector<16x128xf32>
    %cst_217 = arith.constant 5.000000e-01 : f32
    %584 = vector.broadcast %cst_217 : f32 to vector<16x128xf32>
    %585 = arith.mulf %584, %583 : vector<16x128xf32>
    %586 = vector.extract_strided_slice %569 {offsets = [0, 256], sizes = [16, 128], strides = [1, 1]} : vector<16x512xf32> to vector<16x128xf32>
    %587 = math.tanh %586 : vector<16x128xf32>
    %588 = vector.extract_strided_slice %569 {offsets = [0, 384], sizes = [16, 128], strides = [1, 1]} : vector<16x512xf32> to vector<16x128xf32>
    %cst_218 = arith.constant 5.000000e-01 : f32
    %589 = vector.broadcast %cst_218 : f32 to vector<16x128xf32>
    %590 = arith.mulf %589, %588 : vector<16x128xf32>
    %591 = math.tanh %590 : vector<16x128xf32>
    %cst_219 = arith.constant 1.000000e+00 : f32
    %592 = vector.broadcast %cst_219 : f32 to vector<16x128xf32>
    %593 = arith.addf %591, %592 : vector<16x128xf32>
    %cst_220 = arith.constant 5.000000e-01 : f32
    %594 = vector.broadcast %cst_220 : f32 to vector<16x128xf32>
    %595 = arith.mulf %594, %593 : vector<16x128xf32>
    %596 = arith.mulf %585, %560 : vector<16x128xf32>
    %597 = arith.mulf %577, %587 : vector<16x128xf32>
    %598 = arith.addf %596, %597 : vector<16x128xf32>
    %599 = math.tanh %598 : vector<16x128xf32>
    %600 = arith.mulf %595, %599 : vector<16x128xf32>
    %c6_i32_221 = arith.constant 6 : i32
    %601 = arith.index_cast %c6_i32_221 : i32 to index
    %c0_222 = arith.constant 0 : index
    %c0_223 = arith.constant 0 : index
    %602 = vector.load %arg12[%601, %c0_222, %c0_223] : memref<8x16x512xbf16, #tpu.memory_space<vmem>>, vector<1x16x512xbf16>
    %603 = vector.shape_cast %602 : vector<1x16x512xbf16> to vector<16x512xbf16>
    %604 = arith.extf %603 : vector<16x512xbf16> to vector<16x512xf32>
    %605 = arith.truncf %600 : vector<16x128xf32> to vector<16x128xbf16>
    %cst_224 = arith.constant dense<0.000000e+00> : vector<16x512xf32>
    %606 = tpu.matmul %605, %370, %cst_224 {dimension_numbers = #tpu.dot_dimension_numbers<[1], [0], [0], [1], [0, 0, 1, 1], [], []>} : vector<16x128xbf16>, vector<128x512xbf16>, vector<16x512xf32> -> vector<16x512xf32>
    %607 = arith.addf %604, %606 : vector<16x512xf32>
    %608 = vector.extract_strided_slice %607 {offsets = [0, 0], sizes = [16, 128], strides = [1, 1]} : vector<16x512xf32> to vector<16x128xf32>
    %cst_225 = arith.constant 5.000000e-01 : f32
    %609 = vector.broadcast %cst_225 : f32 to vector<16x128xf32>
    %610 = arith.mulf %609, %608 : vector<16x128xf32>
    %611 = math.tanh %610 : vector<16x128xf32>
    %cst_226 = arith.constant 1.000000e+00 : f32
    %612 = vector.broadcast %cst_226 : f32 to vector<16x128xf32>
    %613 = arith.addf %611, %612 : vector<16x128xf32>
    %cst_227 = arith.constant 5.000000e-01 : f32
    %614 = vector.broadcast %cst_227 : f32 to vector<16x128xf32>
    %615 = arith.mulf %614, %613 : vector<16x128xf32>
    %616 = vector.extract_strided_slice %607 {offsets = [0, 128], sizes = [16, 128], strides = [1, 1]} : vector<16x512xf32> to vector<16x128xf32>
    %cst_228 = arith.constant 5.000000e-01 : f32
    %617 = vector.broadcast %cst_228 : f32 to vector<16x128xf32>
    %618 = arith.mulf %617, %616 : vector<16x128xf32>
    %619 = math.tanh %618 : vector<16x128xf32>
    %cst_229 = arith.constant 1.000000e+00 : f32
    %620 = vector.broadcast %cst_229 : f32 to vector<16x128xf32>
    %621 = arith.addf %619, %620 : vector<16x128xf32>
    %cst_230 = arith.constant 5.000000e-01 : f32
    %622 = vector.broadcast %cst_230 : f32 to vector<16x128xf32>
    %623 = arith.mulf %622, %621 : vector<16x128xf32>
    %624 = vector.extract_strided_slice %607 {offsets = [0, 256], sizes = [16, 128], strides = [1, 1]} : vector<16x512xf32> to vector<16x128xf32>
    %625 = math.tanh %624 : vector<16x128xf32>
    %626 = vector.extract_strided_slice %607 {offsets = [0, 384], sizes = [16, 128], strides = [1, 1]} : vector<16x512xf32> to vector<16x128xf32>
    %cst_231 = arith.constant 5.000000e-01 : f32
    %627 = vector.broadcast %cst_231 : f32 to vector<16x128xf32>
    %628 = arith.mulf %627, %626 : vector<16x128xf32>
    %629 = math.tanh %628 : vector<16x128xf32>
    %cst_232 = arith.constant 1.000000e+00 : f32
    %630 = vector.broadcast %cst_232 : f32 to vector<16x128xf32>
    %631 = arith.addf %629, %630 : vector<16x128xf32>
    %cst_233 = arith.constant 5.000000e-01 : f32
    %632 = vector.broadcast %cst_233 : f32 to vector<16x128xf32>
    %633 = arith.mulf %632, %631 : vector<16x128xf32>
    %634 = arith.mulf %623, %598 : vector<16x128xf32>
    %635 = arith.mulf %615, %625 : vector<16x128xf32>
    %636 = arith.addf %634, %635 : vector<16x128xf32>
    %637 = math.tanh %636 : vector<16x128xf32>
    %638 = arith.mulf %633, %637 : vector<16x128xf32>
    %c7_i32_234 = arith.constant 7 : i32
    %639 = arith.index_cast %c7_i32_234 : i32 to index
    %c0_235 = arith.constant 0 : index
    %c0_236 = arith.constant 0 : index
    %640 = vector.load %arg12[%639, %c0_235, %c0_236] : memref<8x16x512xbf16, #tpu.memory_space<vmem>>, vector<1x16x512xbf16>
    %641 = vector.shape_cast %640 : vector<1x16x512xbf16> to vector<16x512xbf16>
    %642 = arith.extf %641 : vector<16x512xbf16> to vector<16x512xf32>
    %643 = arith.truncf %638 : vector<16x128xf32> to vector<16x128xbf16>
    %cst_237 = arith.constant dense<0.000000e+00> : vector<16x512xf32>
    %644 = tpu.matmul %643, %370, %cst_237 {dimension_numbers = #tpu.dot_dimension_numbers<[1], [0], [0], [1], [0, 0, 1, 1], [], []>} : vector<16x128xbf16>, vector<128x512xbf16>, vector<16x512xf32> -> vector<16x512xf32>
    %645 = arith.addf %642, %644 : vector<16x512xf32>
    %646 = vector.extract_strided_slice %645 {offsets = [0, 0], sizes = [16, 128], strides = [1, 1]} : vector<16x512xf32> to vector<16x128xf32>
    %cst_238 = arith.constant 5.000000e-01 : f32
    %647 = vector.broadcast %cst_238 : f32 to vector<16x128xf32>
    %648 = arith.mulf %647, %646 : vector<16x128xf32>
    %649 = math.tanh %648 : vector<16x128xf32>
    %cst_239 = arith.constant 1.000000e+00 : f32
    %650 = vector.broadcast %cst_239 : f32 to vector<16x128xf32>
    %651 = arith.addf %649, %650 : vector<16x128xf32>
    %cst_240 = arith.constant 5.000000e-01 : f32
    %652 = vector.broadcast %cst_240 : f32 to vector<16x128xf32>
    %653 = arith.mulf %652, %651 : vector<16x128xf32>
    %654 = vector.extract_strided_slice %645 {offsets = [0, 128], sizes = [16, 128], strides = [1, 1]} : vector<16x512xf32> to vector<16x128xf32>
    %cst_241 = arith.constant 5.000000e-01 : f32
    %655 = vector.broadcast %cst_241 : f32 to vector<16x128xf32>
    %656 = arith.mulf %655, %654 : vector<16x128xf32>
    %657 = math.tanh %656 : vector<16x128xf32>
    %cst_242 = arith.constant 1.000000e+00 : f32
    %658 = vector.broadcast %cst_242 : f32 to vector<16x128xf32>
    %659 = arith.addf %657, %658 : vector<16x128xf32>
    %cst_243 = arith.constant 5.000000e-01 : f32
    %660 = vector.broadcast %cst_243 : f32 to vector<16x128xf32>
    %661 = arith.mulf %660, %659 : vector<16x128xf32>
    %662 = vector.extract_strided_slice %645 {offsets = [0, 256], sizes = [16, 128], strides = [1, 1]} : vector<16x512xf32> to vector<16x128xf32>
    %663 = math.tanh %662 : vector<16x128xf32>
    %664 = vector.extract_strided_slice %645 {offsets = [0, 384], sizes = [16, 128], strides = [1, 1]} : vector<16x512xf32> to vector<16x128xf32>
    %cst_244 = arith.constant 5.000000e-01 : f32
    %665 = vector.broadcast %cst_244 : f32 to vector<16x128xf32>
    %666 = arith.mulf %665, %664 : vector<16x128xf32>
    %667 = math.tanh %666 : vector<16x128xf32>
    %cst_245 = arith.constant 1.000000e+00 : f32
    %668 = vector.broadcast %cst_245 : f32 to vector<16x128xf32>
    %669 = arith.addf %667, %668 : vector<16x128xf32>
    %cst_246 = arith.constant 5.000000e-01 : f32
    %670 = vector.broadcast %cst_246 : f32 to vector<16x128xf32>
    %671 = arith.mulf %670, %669 : vector<16x128xf32>
    %672 = arith.mulf %661, %636 : vector<16x128xf32>
    %673 = arith.mulf %653, %663 : vector<16x128xf32>
    %674 = arith.addf %672, %673 : vector<16x128xf32>
    %675 = math.tanh %674 : vector<16x128xf32>
    %676 = arith.mulf %671, %675 : vector<16x128xf32>
    %c8_i32_247 = arith.constant 8 : i32
    %c1 = arith.constant 1 : index
    %c0_248 = arith.constant 0 : index
    %c0_249 = arith.constant 0 : index
    %677 = vector.load %arg11[%c1, %c0_248, %c0_249] : memref<2x16x128xf32, #tpu.memory_space<vmem>>, vector<1x16x128xf32>
    %678 = vector.shape_cast %677 : vector<1x16x128xf32> to vector<16x128xf32>
    %679 = vector.shape_cast %676 : vector<16x128xf32> to vector<1x16x128xf32>
    tpu.vector_store %arg11[%c1, %c0_248, %c0_249], %679 {strides = array<i32>} : memref<2x16x128xf32, #tpu.memory_space<vmem>>, vector<1x16x128xf32>,
    %680 = arith.truncf %676 : vector<16x128xf32> to vector<16x128xbf16>
    %c0_250 = arith.constant 0 : index
    %c0_251 = arith.constant 0 : index
    %681 = vector.load %arg8[%c0_250, %c0_251] : memref<128x128xbf16, #tpu.memory_space<vmem>>, vector<128x128xbf16>
    %cst_252 = arith.constant dense<0.000000e+00> : vector<16x128xf32>
    %682 = tpu.matmul %680, %681, %cst_252 {dimension_numbers = #tpu.dot_dimension_numbers<[1], [0], [0], [1], [0, 0, 1, 1], [], []>} : vector<16x128xbf16>, vector<128x128xbf16>, vector<16x128xf32> -> vector<16x128xf32>
    %c0_253 = arith.constant 0 : index
    %c0_254 = arith.constant 0 : index
    %683 = vector.load %arg9[%c0_253, %c0_254] : memref<1x128xf32, #tpu.memory_space<vmem>>, vector<1x128xf32>
    %684 = vector.broadcast %683 : vector<1x128xf32> to vector<16x128xf32>
    %685 = arith.addf %682, %684 : vector<16x128xf32>
    %c0_255 = arith.constant 0 : index
    %c0_256 = arith.constant 0 : index
    %686 = vector.load %arg10[%c0_255, %c0_256] : memref<16x128xf32, #tpu.memory_space<vmem>>, vector<16x128xf32>
    tpu.vector_store %arg10[%c0_255, %c0_256], %685 {strides = array<i32>} : memref<16x128xf32, #tpu.memory_space<vmem>>, vector<16x128xf32>,
    return
  }
  func.func @transform_0(%arg0: i32) -> (i32, i32, i32) {
    %c0_i32 = arith.constant 0 : i32
    %c0_i32_0 = arith.constant 0 : i32
    %c0_i32_1 = arith.constant 0 : i32
    return %c0_i32, %arg0, %c0_i32_0 : i32, i32, i32
  }
  func.func @transform_1(%arg0: i32) -> (i32, i32) {
    %c0_i32 = arith.constant 0 : i32
    %c0_i32_0 = arith.constant 0 : i32
    %c0_i32_1 = arith.constant 0 : i32
    return %c0_i32, %c0_i32_0 : i32, i32
  }
  func.func @transform_2(%arg0: i32) -> (i32, i32) {
    %c0_i32 = arith.constant 0 : i32
    %c0_i32_0 = arith.constant 0 : i32
    %c0_i32_1 = arith.constant 0 : i32
    return %c0_i32, %c0_i32_0 : i32, i32
  }
  func.func @transform_3(%arg0: i32) -> (i32, i32) {
    %c0_i32 = arith.constant 0 : i32
    %c0_i32_0 = arith.constant 0 : i32
    %c0_i32_1 = arith.constant 0 : i32
    return %c0_i32, %c0_i32_0 : i32, i32
  }
  func.func @transform_4(%arg0: i32) -> (i32, i32) {
    %c0_i32 = arith.constant 0 : i32
    %c0_i32_0 = arith.constant 0 : i32
    %c0_i32_1 = arith.constant 0 : i32
    return %c0_i32, %c0_i32_0 : i32, i32
  }
  func.func @transform_5(%arg0: i32) -> (i32, i32) {
    %c0_i32 = arith.constant 0 : i32
    %c0_i32_0 = arith.constant 0 : i32
    %c0_i32_1 = arith.constant 0 : i32
    return %c0_i32, %c0_i32_0 : i32, i32
  }
  func.func @transform_6(%arg0: i32) -> (i32, i32) {
    %c0_i32 = arith.constant 0 : i32
    %c0_i32_0 = arith.constant 0 : i32
    %c0_i32_1 = arith.constant 0 : i32
    return %c0_i32, %c0_i32_0 : i32, i32
  }
  func.func @transform_7(%arg0: i32) -> (i32, i32) {
    %c0_i32 = arith.constant 0 : i32
    %c0_i32_0 = arith.constant 0 : i32
    %c0_i32_1 = arith.constant 0 : i32
    return %c0_i32, %c0_i32_0 : i32, i32
  }
  func.func @transform_8(%arg0: i32) -> (i32, i32) {
    %c0_i32 = arith.constant 0 : i32
    %c0_i32_0 = arith.constant 0 : i32
    %c0_i32_1 = arith.constant 0 : i32
    return %c0_i32, %c0_i32_0 : i32, i32
  }
  func.func @transform_9(%arg0: i32) -> (i32, i32) {
    %c0_i32 = arith.constant 0 : i32
    %c0_i32_0 = arith.constant 0 : i32
    return %arg0, %c0_i32 : i32, i32
  }
  func.func @transform_10(%arg0: i32) -> (i32, i32, i32) {
    %c0_i32 = arith.constant 0 : i32
    %c0_i32_0 = arith.constant 0 : i32
    %c0_i32_1 = arith.constant 0 : i32
    return %c0_i32, %arg0, %c0_i32_0 : i32, i32, i32
  }
}

</mosaic_0001>

<llo_original>
// kernel: tpu_custom_call.1
$region0: #{tpu_custom_call.1}
  #allocation0 [shape = 'u32[]', space=smem, size = 0x4, offset = 0x4, fixed_abs, tag = 'smem constant byte address 0x4 - core index']
  #allocation1 [shape = 'u32[144,128]{1,0:T(1,128)}', space=vmem, size = 0x12000, scoped, tag = 'internal scratch']
  #allocation2 [shape = 'bf16[8,16,512]{2,1,0:T(8,128)(2,1)}', space=vmem, size = 0x20000, scoped, tag = 'scratch operand']
  #allocation3 [shape = 'bf16[8,16,128]{2,1,0:T(8,128)(2,1)}', space=vmem, size = 0x8000, scoped, tag = 'scratch operand']
  %s0 = inlined_call_operand.hbm [shape: bf16[8,16,128], index: 0, kind: input, shape index: {}]
  %s1 = inlined_call_operand.hbm [shape: bf16[128,512], index: 1, kind: input, shape index: {}]
  %s2 = inlined_call_operand.hbm [shape: bf16[128,512], index: 2, kind: input, shape index: {}]
  %s3 = inlined_call_operand.vmem [shape: f32[1,512], index: 3, kind: input, shape index: {}]
  %s4 = inlined_call_operand.hbm [shape: bf16[128,512], index: 4, kind: input, shape index: {}]
  %s5 = inlined_call_operand.hbm [shape: bf16[128,512], index: 5, kind: input, shape index: {}]
  %s6 = inlined_call_operand.vmem [shape: f32[1,512], index: 6, kind: input, shape index: {}]
  %s7 = inlined_call_operand.hbm [shape: bf16[128,128], index: 7, kind: input, shape index: {}]
  %s8 = inlined_call_operand.vmem [shape: f32[1,128], index: 8, kind: input, shape index: {}]
  %s9 = inlined_call_operand.hbm [shape: f32[16,128], index: 9, kind: output, shape index: {0}]
  %s10 = inlined_call_operand.hbm [shape: f32[2,16,128], index: 10, kind: output, shape index: {1}]
  %11 = xla_tuple %s9, %s10
  %s12 = sld [smem:[#allocation0]]
  $region78: #{tpu_custom_call.1} parent=0
    _
  %s14 = ssub.s32 1, %s12
  %s15 = scalar_select 0, %s14, %s12
  $region1: #{tpu_custom_call.1} parent=0
    #allocation4 [shape = 'u8[32768]{0}', space=vmem, size = 0x8000, scoped, tag = 'input window, operand 0, single buffered']
    #allocation5 [shape = 's32[1]{0}', space=sflag, size = 0x4, scoped, tag = 'scoped memory for tpu_custom_call.1']
    #allocation6 [shape = 's32[1]{0}', space=sflag, size = 0x4, scoped, tag = 'scoped memory for tpu_custom_call.1']
    #allocation7 [shape = 'u8[131072]{0}', space=vmem, size = 0x20000, scoped, tag = 'input window, operand 1, single buffered']
    #allocation8 [shape = 's32[1]{0}', space=sflag, size = 0x4, scoped, tag = 'scoped memory for tpu_custom_call.1']
    #allocation9 [shape = 'u8[131072]{0}', space=vmem, size = 0x20000, scoped, tag = 'input window, operand 2, single buffered']
    #allocation10 [shape = 'u8[131072]{0}', space=vmem, size = 0x20000, scoped, tag = 'input window, operand 4, single buffered']
    #allocation11 [shape = 's32[1]{0}', space=sflag, size = 0x4, scoped, tag = 'scoped memory for tpu_custom_call.1']
    #allocation12 [shape = 'u8[131072]{0}', space=vmem, size = 0x20000, scoped, tag = 'input window, operand 5, single buffered']
    #allocation13 [shape = 'u8[32768]{0}', space=vmem, size = 0x8000, scoped, tag = 'input window, operand 7, single buffered']
    #allocation14 [shape = 's32[1]{0}', space=sflag, size = 0x4, scoped, tag = 'scoped memory for tpu_custom_call.1']
    #allocation15 [shape = 'u8[8192]{0}', space=vmem, size = 0x2000, scoped, tag = 'output window, operand 0, single buffered']
    #allocation16 [shape = 'u8[16384]{0}', space=vmem, size = 0x4000, scoped, tag = 'output window, operand 1, single buffered']
    #allocation17 [shape = 's32[1]{0}', space=sflag, size = 0x4, scoped, tag = 'scoped memory for tpu_custom_call.1']
    %16 = vsyncpa [#allocation5], 0
    %17 = vsyncpa [#allocation8], 0
    %18 = vsyncpa [#allocation11], 0
    %19 = vsyncpa [#allocation14], 0
    %20 = vsyncpa [#allocation6], 0
    %21 = vsyncpa [#allocation17], 0
    // Predicated region
    $region2: #{tpu_custom_call.1} parent=1 // pred_check
      _
    $region3: #{tpu_custom_call.1} parent=1 // pred_check_branch
      %23 = sbr.rel (0) target = $region5
    $region4: #{tpu_custom_call.1} parent=1 // pred_region
      %s25 = ssub.s32 1024, 1024
      %26 = vsyncadd [#allocation5], %s25
      %s27 = sshll.u32 [#allocation4], 4
      %s28 = int_to_ptr.vmem [resolvable:$true] %s27
      %33 = dma.hbm_to_vmem [thread:$0]  %s0, 1024, %s28, [#allocation5], 64, 64, 4
    $region5: #{tpu_custom_call.1} parent=1 // pred_fallthru
      _
    // Predicated region
    $region6: #{tpu_custom_call.1} parent=1 // pred_check
      _
    $region7: #{tpu_custom_call.1} parent=1 // pred_check_branch
      %35 = sbr.rel (0) target = $region9
    $region8: #{tpu_custom_call.1} parent=1 // pred_region
      %s37 = ssub.s32 4096, 4096
      %38 = vsyncadd [#allocation8], %s37
      %s39 = sshll.u32 [#allocation7], 4
      %s40 = int_to_ptr.vmem [resolvable:$true] %s39
      %45 = dma.hbm_to_vmem [thread:$0]  %s1, 4096, %s40, [#allocation8], 256, 256, 16
    $region9: #{tpu_custom_call.1} parent=1 // pred_fallthru
      _
    // Predicated region
    $region10: #{tpu_custom_call.1} parent=1 // pred_check
      _
    $region11: #{tpu_custom_call.1} parent=1 // pred_check_branch
      %47 = sbr.rel (0) target = $region13
    $region12: #{tpu_custom_call.1} parent=1 // pred_region
      %s49 = ssub.s32 4096, 4096
      %50 = vsyncadd [#allocation8], %s49
      %s51 = sshll.u32 [#allocation9], 4
      %s52 = int_to_ptr.vmem [resolvable:$true] %s51
      %57 = dma.hbm_to_vmem [thread:$0]  %s2, 4096, %s52, [#allocation8], 256, 256, 16
    $region13: #{tpu_custom_call.1} parent=1 // pred_fallthru
      _
    // Predicated region
    $region14: #{tpu_custom_call.1} parent=1 // pred_check
      _
    $region15: #{tpu_custom_call.1} parent=1 // pred_check_branch
      %59 = sbr.rel (0) target = $region17
    $region16: #{tpu_custom_call.1} parent=1 // pred_region
      _
    $region17: #{tpu_custom_call.1} parent=1 // pred_fallthru
      _
    // Predicated region
    $region18: #{tpu_custom_call.1} parent=1 // pred_check
      _
    $region19: #{tpu_custom_call.1} parent=1 // pred_check_branch
      %61 = sbr.rel (0) target = $region21
    $region20: #{tpu_custom_call.1} parent=1 // pred_region
      %s63 = ssub.s32 4096, 4096
      %64 = vsyncadd [#allocation11], %s63
      %s65 = sshll.u32 [#allocation10], 4
      %s66 = int_to_ptr.vmem [resolvable:$true] %s65
      %71 = dma.hbm_to_vmem [thread:$0]  %s4, 4096, %s66, [#allocation11], 256, 256, 16
    $region21: #{tpu_custom_call.1} parent=1 // pred_fallthru
      _
    // Predicated region
    $region22: #{tpu_custom_call.1} parent=1 // pred_check
      _
    $region23: #{tpu_custom_call.1} parent=1 // pred_check_branch
      %73 = sbr.rel (0) target = $region25
    $region24: #{tpu_custom_call.1} parent=1 // pred_region
      %s75 = ssub.s32 4096, 4096
      %76 = vsyncadd [#allocation11], %s75
      %s77 = sshll.u32 [#allocation12], 4
      %s78 = int_to_ptr.vmem [resolvable:$true] %s77
      %83 = dma.hbm_to_vmem [thread:$0]  %s5, 4096, %s78, [#allocation11], 256, 256, 16
    $region25: #{tpu_custom_call.1} parent=1 // pred_fallthru
      _
    // Predicated region
    $region26: #{tpu_custom_call.1} parent=1 // pred_check
      _
    $region27: #{tpu_custom_call.1} parent=1 // pred_check_branch
      %85 = sbr.rel (0) target = $region29
    $region28: #{tpu_custom_call.1} parent=1 // pred_region
      _
    $region29: #{tpu_custom_call.1} parent=1 // pred_fallthru
      _
    // Predicated region
    $region30: #{tpu_custom_call.1} parent=1 // pred_check
      _
    $region31: #{tpu_custom_call.1} parent=1 // pred_check_branch
      %87 = sbr.rel (0) target = $region33
    $region32: #{tpu_custom_call.1} parent=1 // pred_region
      %s89 = ssub.s32 1024, 1024
      %90 = vsyncadd [#allocation14], %s89
      %s91 = sshll.u32 [#allocation13], 4
      %s92 = int_to_ptr.vmem [resolvable:$true] %s91
      %97 = dma.hbm_to_vmem [thread:$0]  %s7, 1024, %s92, [#allocation14], 64, 64, 4
    $region33: #{tpu_custom_call.1} parent=1 // pred_fallthru
      _
    // Predicated region
    $region34: #{tpu_custom_call.1} parent=1 // pred_check
      _
    $region35: #{tpu_custom_call.1} parent=1 // pred_check_branch
      %99 = sbr.rel (0) target = $region37
    $region36: #{tpu_custom_call.1} parent=1 // pred_region
      _
    $region37: #{tpu_custom_call.1} parent=1 // pred_fallthru
      _
    // Predicated region
    $region38: #{tpu_custom_call.1} parent=1 // pred_check
      _
    $region39: #{tpu_custom_call.1} parent=1 // pred_check_branch
      %101 = sbr.rel (0) target = $region41
    $region40: #{tpu_custom_call.1} parent=1 // pred_region
      %102 = dma.done [#allocation5], 1024
    $region41: #{tpu_custom_call.1} parent=1 // pred_fallthru
      _
    // Predicated region
    $region42: #{tpu_custom_call.1} parent=1 // pred_check
      _
    $region43: #{tpu_custom_call.1} parent=1 // pred_check_branch
      %104 = sbr.rel (0) target = $region45
    $region44: #{tpu_custom_call.1} parent=1 // pred_region
      %105 = dma.done [#allocation8], 4096
    $region45: #{tpu_custom_call.1} parent=1 // pred_fallthru
      _
    // Predicated region
    $region46: #{tpu_custom_call.1} parent=1 // pred_check
      _
    $region47: #{tpu_custom_call.1} parent=1 // pred_check_branch
      %107 = sbr.rel (0) target = $region49
    $region48: #{tpu_custom_call.1} parent=1 // pred_region
      %108 = dma.done [#allocation8], 4096
    $region49: #{tpu_custom_call.1} parent=1 // pred_fallthru
      _
    // Predicated region
    $region50: #{tpu_custom_call.1} parent=1 // pred_check
      _
    $region51: #{tpu_custom_call.1} parent=1 // pred_check_branch
      %110 = sbr.rel (0) target = $region53
    $region52: #{tpu_custom_call.1} parent=1 // pred_region
      %111 = dma.done [#allocation11], 4096
    $region53: #{tpu_custom_call.1} parent=1 // pred_fallthru
      _
    // Predicated region
    $region54: #{tpu_custom_call.1} parent=1 // pred_check
      _
    $region55: #{tpu_custom_call.1} parent=1 // pred_check_branch
      %113 = sbr.rel (0) target = $region57
    $region56: #{tpu_custom_call.1} parent=1 // pred_region
      %114 = dma.done [#allocation11], 4096
    $region57: #{tpu_custom_call.1} parent=1 // pred_fallthru
      _
    // Predicated region
    $region58: #{tpu_custom_call.1} parent=1 // pred_check
      _
    $region59: #{tpu_custom_call.1} parent=1 // pred_check_branch
      %116 = sbr.rel (0) target = $region61
    $region60: #{tpu_custom_call.1} parent=1 // pred_region
      %117 = dma.done [#allocation14], 1024
    $region61: #{tpu_custom_call.1} parent=1 // pred_fallthru
      _
    %v119 = vld [vmem:[#allocation4] sm:$0xf]
    %v120 = vld [vmem:[#allocation4 + $0x4] sm:$0xf]
    %v121 = vld [vmem:[#allocation4 + $0x8] sm:$0xf]
    %v122 = vld [vmem:[#allocation4 + $0xc] sm:$0xf]
    %v123 = vld [vmem:[#allocation4 + $0x10] sm:$0xf]
    %v124 = vld [vmem:[#allocation4 + $0x14] sm:$0xf]
    %v125 = vld [vmem:[#allocation4 + $0x18] sm:$0xf]
    %v126 = vld [vmem:[#allocation4 + $0x1c] sm:$0xf]
    %v127 = vld [vmem:[#allocation4 + $0x20] sm:$0xf]
    %v128 = vld [vmem:[#allocation4 + $0x24] sm:$0xf]
    %v129 = vld [vmem:[#allocation4 + $0x28] sm:$0xf]
    %v130 = vld [vmem:[#allocation4 + $0x2c] sm:$0xf]
    %v131 = vld [vmem:[#allocation4 + $0x30] sm:$0xf]
    %v132 = vld [vmem:[#allocation4 + $0x34] sm:$0xf]
    %v133 = vld [vmem:[#allocation4 + $0x38] sm:$0xf]
    %v134 = vld [vmem:[#allocation4 + $0x3c] sm:$0xf]
    %v135 = vld [vmem:[#allocation7] sm:$0xff]
    %v136 = vld [vmem:[#allocation7 + $0x8] sm:$0xff]
    %v137 = vld [vmem:[#allocation7 + $0x10] sm:$0xff]
    %v138 = vld [vmem:[#allocation7 + $0x18] sm:$0xff]
    %v139 = vld [vmem:[#allocation7 + $0x20] sm:$0xff]
    %v140 = vld [vmem:[#allocation7 + $0x28] sm:$0xff]
    %v141 = vld [vmem:[#allocation7 + $0x30] sm:$0xff]
    %v142 = vld [vmem:[#allocation7 + $0x38] sm:$0xff]
    %v143 = vld [vmem:[#allocation7 + $0x40] sm:$0xff]
    %v144 = vld [vmem:[#allocation7 + $0x48] sm:$0xff]
    %v145 = vld [vmem:[#allocation7 + $0x50] sm:$0xff]
    %v146 = vld [vmem:[#allocation7 + $0x58] sm:$0xff]
    %v147 = vld [vmem:[#allocation7 + $0x60] sm:$0xff]
    %v148 = vld [vmem:[#allocation7 + $0x68] sm:$0xff]
    %v149 = vld [vmem:[#allocation7 + $0x70] sm:$0xff]
    %v150 = vld [vmem:[#allocation7 + $0x78] sm:$0xff]
    %v151 = vld [vmem:[#allocation7 + $0x80] sm:$0xff]
    %v152 = vld [vmem:[#allocation7 + $0x88] sm:$0xff]
    %v153 = vld [vmem:[#allocation7 + $0x90] sm:$0xff]
    %v154 = vld [vmem:[#allocation7 + $0x98] sm:$0xff]
    %v155 = vld [vmem:[#allocation7 + $0xa0] sm:$0xff]
    %v156 = vld [vmem:[#allocation7 + $0xa8] sm:$0xff]
    %v157 = vld [vmem:[#allocation7 + $0xb0] sm:$0xff]
    %v158 = vld [vmem:[#allocation7 + $0xb8] sm:$0xff]
    %v159 = vld [vmem:[#allocation7 + $0xc0] sm:$0xff]
    %v160 = vld [vmem:[#allocation7 + $0xc8] sm:$0xff]
    %v161 = vld [vmem:[#allocation7 + $0xd0] sm:$0xff]
    %v162 = vld [vmem:[#allocation7 + $0xd8] sm:$0xff]
    %v163 = vld [vmem:[#allocation7 + $0xe0] sm:$0xff]
    %v164 = vld [vmem:[#allocation7 + $0xe8] sm:$0xff]
    %v165 = vld [vmem:[#allocation7 + $0xf0] sm:$0xff]
    %v166 = vld [vmem:[#allocation7 + $0xf8] sm:$0xff]
    %v167 = vld [vmem:[%s3] sm:$0xf]
    %v169 = vlaneseq
    %v170 = vshrl.u32 %v169, 7
    %v171 = vsub.s32 0, %v170
    %v172 = vrot.slane %v167, %v171
    %v173 = vlaneseq
    %v174 = vshrl.u32 %v173, 7
    %v175 = vsub.s32 1, %v174
    %v176 = vrot.slane %v167, %v175
    %v177 = vlaneseq
    %v178 = vshrl.u32 %v177, 7
    %v179 = vsub.s32 2, %v178
    %v180 = vrot.slane %v167, %v179
    %v181 = vlaneseq
    %v182 = vshrl.u32 %v181, 7
    %v183 = vsub.s32 3, %v182
    %v184 = vrot.slane %v167, %v183
    %v205 = vunpack.c.l.b16 %v119
    %v206 = vunpack.c.l.b16 %v120
    %v207 = vunpack.c.l.b16 %v121
    %v208 = vunpack.c.l.b16 %v122
    %v209 = vunpack.c.l.b16 %v123
    %v210 = vunpack.c.l.b16 %v124
    %v211 = vunpack.c.l.b16 %v125
    %v212 = vunpack.c.l.b16 %v126
    %v213 = vunpack.c.l.b16 %v127
    %v214 = vunpack.c.l.b16 %v128
    %v215 = vunpack.c.l.b16 %v129
    %v216 = vunpack.c.l.b16 %v130
    %v217 = vunpack.c.l.b16 %v131
    %v218 = vunpack.c.l.b16 %v132
    %v219 = vunpack.c.l.b16 %v133
    %v220 = vunpack.c.l.b16 %v134
    %v221 = vpack.c.b16 %v206, %v205
    %v222 = vpack.c.b16 %v208, %v207
    %v223 = vpack.c.b16 %v210, %v209
    %v224 = vpack.c.b16 %v212, %v211
    %v225 = vpack.c.b16 %v214, %v213
    %v226 = vpack.c.b16 %v216, %v215
    %v227 = vpack.c.b16 %v218, %v217
    %v228 = vpack.c.b16 %v220, %v219
    %v269 = vunpack.c.l.b16 %v135
    %v270 = vunpack.c.h.b16 %v135
    %v271 = vunpack.c.l.b16 %v136
    %v272 = vunpack.c.h.b16 %v136
    %v273 = vunpack.c.l.b16 %v137
    %v274 = vunpack.c.h.b16 %v137
    %v275 = vunpack.c.l.b16 %v138
    %v276 = vunpack.c.h.b16 %v138
    %v277 = vunpack.c.l.b16 %v139
    %v278 = vunpack.c.h.b16 %v139
    %v279 = vunpack.c.l.b16 %v140
    %v280 = vunpack.c.h.b16 %v140
    %v281 = vunpack.c.l.b16 %v141
    %v282 = vunpack.c.h.b16 %v141
    %v283 = vunpack.c.l.b16 %v142
    %v284 = vunpack.c.h.b16 %v142
    %v285 = vunpack.c.l.b16 %v143
    %v286 = vunpack.c.h.b16 %v143
    %v287 = vunpack.c.l.b16 %v144
    %v288 = vunpack.c.h.b16 %v144
    %v289 = vunpack.c.l.b16 %v145
    %v290 = vunpack.c.h.b16 %v145
    %v291 = vunpack.c.l.b16 %v146
    %v292 = vunpack.c.h.b16 %v146
    %v293 = vunpack.c.l.b16 %v147
    %v294 = vunpack.c.h.b16 %v147
    %v295 = vunpack.c.l.b16 %v148
    %v296 = vunpack.c.h.b16 %v148
    %v297 = vunpack.c.l.b16 %v149
    %v298 = vunpack.c.h.b16 %v149
    %v299 = vunpack.c.l.b16 %v150
    %v300 = vunpack.c.h.b16 %v150
    %v301 = vunpack.c.l.b16 %v151
    %v302 = vunpack.c.h.b16 %v151
    %v303 = vunpack.c.l.b16 %v152
    %v304 = vunpack.c.h.b16 %v152
    %v305 = vunpack.c.l.b16 %v153
    %v306 = vunpack.c.h.b16 %v153
    %v307 = vunpack.c.l.b16 %v154
    %v308 = vunpack.c.h.b16 %v154
    %v309 = vunpack.c.l.b16 %v155
    %v310 = vunpack.c.h.b16 %v155
    %v311 = vunpack.c.l.b16 %v156
    %v312 = vunpack.c.h.b16 %v156
    %v313 = vunpack.c.l.b16 %v157
    %v314 = vunpack.c.h.b16 %v157
    %v315 = vunpack.c.l.b16 %v158
    %v316 = vunpack.c.h.b16 %v158
    %v317 = vunpack.c.l.b16 %v159
    %v318 = vunpack.c.h.b16 %v159
    %v319 = vunpack.c.l.b16 %v160
    %v320 = vunpack.c.h.b16 %v160
    %v321 = vunpack.c.l.b16 %v161
    %v322 = vunpack.c.h.b16 %v161
    %v323 = vunpack.c.l.b16 %v162
    %v324 = vunpack.c.h.b16 %v162
    %v325 = vunpack.c.l.b16 %v163
    %v326 = vunpack.c.h.b16 %v163
    %v327 = vunpack.c.l.b16 %v164
    %v328 = vunpack.c.h.b16 %v164
    %v329 = vunpack.c.l.b16 %v165
    %v330 = vunpack.c.h.b16 %v165
    %v331 = vunpack.c.l.b16 %v166
    %v332 = vunpack.c.h.b16 %v166
    %v333 = vpack.c.b16 %v273, %v269
    %v334 = vpack.c.b16 %v274, %v270
    %v335 = vpack.c.b16 %v275, %v271
    %v336 = vpack.c.b16 %v276, %v272
    %v337 = vpack.c.b16 %v281, %v277
    %v338 = vpack.c.b16 %v282, %v278
    %v339 = vpack.c.b16 %v283, %v279
    %v340 = vpack.c.b16 %v284, %v280
    %v341 = vpack.c.b16 %v289, %v285
    %v342 = vpack.c.b16 %v290, %v286
    %v343 = vpack.c.b16 %v291, %v287
    %v344 = vpack.c.b16 %v292, %v288
    %v345 = vpack.c.b16 %v297, %v293
    %v346 = vpack.c.b16 %v298, %v294
    %v347 = vpack.c.b16 %v299, %v295
    %v348 = vpack.c.b16 %v300, %v296
    %v349 = vpack.c.b16 %v305, %v301
    %v350 = vpack.c.b16 %v306, %v302
    %v351 = vpack.c.b16 %v307, %v303
    %v352 = vpack.c.b16 %v308, %v304
    %v353 = vpack.c.b16 %v313, %v309
    %v354 = vpack.c.b16 %v314, %v310
    %v355 = vpack.c.b16 %v315, %v311
    %v356 = vpack.c.b16 %v316, %v312
    %v357 = vpack.c.b16 %v321, %v317
    %v358 = vpack.c.b16 %v322, %v318
    %v359 = vpack.c.b16 %v323, %v319
    %v360 = vpack.c.b16 %v324, %v320
    %v361 = vpack.c.b16 %v329, %v325
    %v362 = vpack.c.b16 %v330, %v326
    %v363 = vpack.c.b16 %v331, %v327
    %v364 = vpack.c.b16 %v332, %v328
    %397 = vmatprep.subr.bf16.mxu0 %v362
    %398 = vmatpush1.bf16.msra.mxu0 %v361
    %399 = vmatprep.subr.bf16.mxu0 %v358
    %400 = vmatpush1.bf16.msra.mxu0 %v357
    %401 = vmatprep.subr.bf16.mxu0 %v354
    %402 = vmatpush1.bf16.msra.mxu0 %v353
    %403 = vmatprep.subr.bf16.mxu0 %v350
    %404 = vmatpush1.bf16.msra.mxu0 %v349
    %405 = vmatprep.subr.bf16.mxu0 %v346
    %406 = vmatpush1.bf16.msra.mxu0 %v345
    %407 = vmatprep.subr.bf16.mxu0 %v342
    %408 = vmatpush1.bf16.msra.mxu0 %v341
    %409 = vmatprep.subr.bf16.mxu0 %v338
    %410 = vmatpush1.bf16.msra.mxu0 %v337
    %411 = vmatprep.subr.bf16.mxu0 %v334
    %412 = vmatpush1.bf16.msra.mxu0 %v333
    %413 = vmatprep.subr.bf16.mxu0 0
    %414 = vmatpush2.bf16.msra.mxu0 0
    %415 = vmatprep.subr.bf16.mxu0 0
    %416 = vmatpush2.bf16.msra.mxu0 0
    %417 = vmatprep.subr.bf16.mxu0 0
    %418 = vmatpush2.bf16.msra.mxu0 0
    %419 = vmatprep.subr.bf16.mxu0 0
    %420 = vmatpush2.bf16.msra.mxu0 0
    %421 = vmatprep.subr.bf16.mxu0 0
    %422 = vmatpush2.bf16.msra.mxu0 0
    %423 = vmatprep.subr.bf16.mxu0 0
    %424 = vmatpush2.bf16.msra.mxu0 0
    %425 = vmatprep.subr.bf16.mxu0 0
    %426 = vmatpush2.bf16.msra.mxu0 0
    %427 = vmatprep.subr.bf16.mxu0 0
    %428 = vmatpush2.bf16.msra.mxu0 0
    %429 = vmatprep.mubr.bf16.mxu0 0
    %430 = vmatmul.mubr.bf16.gmra.mxu0 %v221
    %v431 = vpop.f32.mrf.mxu0
    %v432 = vadd.f32 %v172, %v431
    %v433 = vpop.f32.mrf.mxu0
    %v434 = vadd.f32 %v176, %v433
    %v435 = vpop.f32.mrf.mxu0
    %v436 = vadd.f32 %v172, %v435
    %v437 = vpop.f32.mrf.mxu0
    %v438 = vadd.f32 %v176, %v437
    %439 = vmatprep.mubr.bf16.mxu0 0
    %440 = vmatmul.mubr.bf16.gmra.mxu0 %v222
    %v441 = vpop.f32.mrf.mxu0
    %v442 = vadd.f32 %v172, %v441
    %v443 = vpop.f32.mrf.mxu0
    %v444 = vadd.f32 %v176, %v443
    %v445 = vpop.f32.mrf.mxu0
    %v446 = vadd.f32 %v172, %v445
    %v447 = vpop.f32.mrf.mxu0
    %v448 = vadd.f32 %v176, %v447
    %449 = vmatprep.mubr.bf16.mxu0 0
    %450 = vmatmul.mubr.bf16.gmra.mxu0 %v223
    %v451 = vpop.f32.mrf.mxu0
    %v452 = vadd.f32 %v172, %v451
    %v453 = vpop.f32.mrf.mxu0
    %v454 = vadd.f32 %v176, %v453
    %v455 = vpop.f32.mrf.mxu0
    %v456 = vadd.f32 %v172, %v455
    %v457 = vpop.f32.mrf.mxu0
    %v458 = vadd.f32 %v176, %v457
    %459 = vmatprep.mubr.bf16.mxu0 0
    %460 = vmatmul.mubr.bf16.gmra.mxu0 %v224
    %v461 = vpop.f32.mrf.mxu0
    %v462 = vadd.f32 %v172, %v461
    %v463 = vpop.f32.mrf.mxu0
    %v464 = vadd.f32 %v176, %v463
    %v465 = vpop.f32.mrf.mxu0
    %v466 = vadd.f32 %v172, %v465
    %v467 = vpop.f32.mrf.mxu0
    %v468 = vadd.f32 %v176, %v467
    %469 = vmatprep.mubr.bf16.mxu0 0
    %470 = vmatmul.mubr.bf16.gmra.mxu0 %v225
    %v471 = vpop.f32.mrf.mxu0
    %v472 = vadd.f32 %v172, %v471
    %v473 = vpop.f32.mrf.mxu0
    %v474 = vadd.f32 %v176, %v473
    %v475 = vpop.f32.mrf.mxu0
    %v476 = vadd.f32 %v172, %v475
    %v477 = vpop.f32.mrf.mxu0
    %v478 = vadd.f32 %v176, %v477
    %479 = vmatprep.mubr.bf16.mxu0 0
    %480 = vmatmul.mubr.bf16.gmra.mxu0 %v226
    %v481 = vpop.f32.mrf.mxu0
    %v482 = vadd.f32 %v172, %v481
    %v483 = vpop.f32.mrf.mxu0
    %v484 = vadd.f32 %v176, %v483
    %v485 = vpop.f32.mrf.mxu0
    %v486 = vadd.f32 %v172, %v485
    %v487 = vpop.f32.mrf.mxu0
    %v488 = vadd.f32 %v176, %v487
    %489 = vmatprep.mubr.bf16.mxu0 0
    %490 = vmatmul.mubr.bf16.gmra.mxu0 %v227
    %v491 = vpop.f32.mrf.mxu0
    %v492 = vadd.f32 %v172, %v491
    %v493 = vpop.f32.mrf.mxu0
    %v494 = vadd.f32 %v176, %v493
    %v495 = vpop.f32.mrf.mxu0
    %v496 = vadd.f32 %v172, %v495
    %v497 = vpop.f32.mrf.mxu0
    %v498 = vadd.f32 %v176, %v497
    %499 = vmatprep.mubr.bf16.mxu0 0
    %500 = vmatmul.mubr.bf16.gmra.mxu0 %v228
    %v501 = vpop.f32.mrf.mxu0
    %v502 = vadd.f32 %v172, %v501
    %v503 = vpop.f32.mrf.mxu0
    %v504 = vadd.f32 %v176, %v503
    %v505 = vpop.f32.mrf.mxu0
    %v506 = vadd.f32 %v172, %v505
    %v507 = vpop.f32.mrf.mxu0
    %v508 = vadd.f32 %v176, %v507
    %509 = vdwg.mxu0
    %510 = vmatprep.subr.bf16.mxu0 %v364
    %511 = vmatpush1.bf16.msra.mxu0 %v363
    %512 = vmatprep.subr.bf16.mxu0 %v360
    %513 = vmatpush1.bf16.msra.mxu0 %v359
    %514 = vmatprep.subr.bf16.mxu0 %v356
    %515 = vmatpush1.bf16.msra.mxu0 %v355
    %516 = vmatprep.subr.bf16.mxu0 %v352
    %517 = vmatpush1.bf16.msra.mxu0 %v351
    %518 = vmatprep.subr.bf16.mxu0 %v348
    %519 = vmatpush1.bf16.msra.mxu0 %v347
    %520 = vmatprep.subr.bf16.mxu0 %v344
    %521 = vmatpush1.bf16.msra.mxu0 %v343
    %522 = vmatprep.subr.bf16.mxu0 %v340
    %523 = vmatpush1.bf16.msra.mxu0 %v339
    %524 = vmatprep.subr.bf16.mxu0 %v336
    %525 = vmatpush1.bf16.msra.mxu0 %v335
    %526 = vmatprep.subr.bf16.mxu0 0
    %527 = vmatpush2.bf16.msra.mxu0 0
    %528 = vmatprep.subr.bf16.mxu0 0
    %529 = vmatpush2.bf16.msra.mxu0 0
    %530 = vmatprep.subr.bf16.mxu0 0
    %531 = vmatpush2.bf16.msra.mxu0 0
    %532 = vmatprep.subr.bf16.mxu0 0
    %533 = vmatpush2.bf16.msra.mxu0 0
    %534 = vmatprep.subr.bf16.mxu0 0
    %535 = vmatpush2.bf16.msra.mxu0 0
    %536 = vmatprep.subr.bf16.mxu0 0
    %537 = vmatpush2.bf16.msra.mxu0 0
    %538 = vmatprep.subr.bf16.mxu0 0
    %539 = vmatpush2.bf16.msra.mxu0 0
    %540 = vmatprep.subr.bf16.mxu0 0
    %541 = vmatpush2.bf16.msra.mxu0 0
    %542 = vmatprep.mubr.bf16.mxu0 0
    %543 = vmatmul.mubr.bf16.gmra.mxu0 %v221
    %v544 = vpop.f32.mrf.mxu0
    %v545 = vadd.f32 %v180, %v544
    %v546 = vpop.f32.mrf.mxu0
    %v547 = vadd.f32 %v184, %v546
    %v548 = vpop.f32.mrf.mxu0
    %v549 = vadd.f32 %v180, %v548
    %v550 = vpop.f32.mrf.mxu0
    %v551 = vadd.f32 %v184, %v550
    %552 = vmatprep.mubr.bf16.mxu0 0
    %553 = vmatmul.mubr.bf16.gmra.mxu0 %v222
    %v554 = vpop.f32.mrf.mxu0
    %v555 = vadd.f32 %v180, %v554
    %v556 = vpop.f32.mrf.mxu0
    %v557 = vadd.f32 %v184, %v556
    %v558 = vpop.f32.mrf.mxu0
    %v559 = vadd.f32 %v180, %v558
    %v560 = vpop.f32.mrf.mxu0
    %v561 = vadd.f32 %v184, %v560
    %562 = vmatprep.mubr.bf16.mxu0 0
    %563 = vmatmul.mubr.bf16.gmra.mxu0 %v223
    %v564 = vpop.f32.mrf.mxu0
    %v565 = vadd.f32 %v180, %v564
    %v566 = vpop.f32.mrf.mxu0
    %v567 = vadd.f32 %v184, %v566
    %v568 = vpop.f32.mrf.mxu0
    %v569 = vadd.f32 %v180, %v568
    %v570 = vpop.f32.mrf.mxu0
    %v571 = vadd.f32 %v184, %v570
    %572 = vmatprep.mubr.bf16.mxu0 0
    %573 = vmatmul.mubr.bf16.gmra.mxu0 %v224
    %v574 = vpop.f32.mrf.mxu0
    %v575 = vadd.f32 %v180, %v574
    %v576 = vpop.f32.mrf.mxu0
    %v577 = vadd.f32 %v184, %v576
    %v578 = vpop.f32.mrf.mxu0
    %v579 = vadd.f32 %v180, %v578
    %v580 = vpop.f32.mrf.mxu0
    %v581 = vadd.f32 %v184, %v580
    %582 = vmatprep.mubr.bf16.mxu0 0
    %583 = vmatmul.mubr.bf16.gmra.mxu0 %v225
    %v584 = vpop.f32.mrf.mxu0
    %v585 = vadd.f32 %v180, %v584
    %v586 = vpop.f32.mrf.mxu0
    %v587 = vadd.f32 %v184, %v586
    %v588 = vpop.f32.mrf.mxu0
    %v589 = vadd.f32 %v180, %v588
    %v590 = vpop.f32.mrf.mxu0
    %v591 = vadd.f32 %v184, %v590
    %592 = vmatprep.mubr.bf16.mxu0 0
    %593 = vmatmul.mubr.bf16.gmra.mxu0 %v226
    %v594 = vpop.f32.mrf.mxu0
    %v595 = vadd.f32 %v180, %v594
    %v596 = vpop.f32.mrf.mxu0
    %v597 = vadd.f32 %v184, %v596
    %v598 = vpop.f32.mrf.mxu0
    %v599 = vadd.f32 %v180, %v598
    %v600 = vpop.f32.mrf.mxu0
    %v601 = vadd.f32 %v184, %v600
    %602 = vmatprep.mubr.bf16.mxu0 0
    %603 = vmatmul.mubr.bf16.gmra.mxu0 %v227
    %v604 = vpop.f32.mrf.mxu0
    %v605 = vadd.f32 %v180, %v604
    %v606 = vpop.f32.mrf.mxu0
    %v607 = vadd.f32 %v184, %v606
    %v608 = vpop.f32.mrf.mxu0
    %v609 = vadd.f32 %v180, %v608
    %v610 = vpop.f32.mrf.mxu0
    %v611 = vadd.f32 %v184, %v610
    %612 = vmatprep.mubr.bf16.mxu0 0
    %613 = vmatmul.mubr.bf16.gmra.mxu0 %v228
    %v614 = vpop.f32.mrf.mxu0
    %v615 = vadd.f32 %v180, %v614
    %v616 = vpop.f32.mrf.mxu0
    %v617 = vadd.f32 %v184, %v616
    %v618 = vpop.f32.mrf.mxu0
    %v619 = vadd.f32 %v180, %v618
    %v620 = vpop.f32.mrf.mxu0
    %v621 = vadd.f32 %v184, %v620
    %622 = vdwg.mxu0
    %v623 = vpack.c.bf16 %v436, %v432
    %v624 = vpack.c.bf16 %v438, %v434
    %v625 = vpack.c.bf16 %v549, %v545
    %v626 = vpack.c.bf16 %v551, %v547
    %v627 = vpack.c.bf16 %v446, %v442
    %v628 = vpack.c.bf16 %v448, %v444
    %v629 = vpack.c.bf16 %v559, %v555
    %v630 = vpack.c.bf16 %v561, %v557
    %v631 = vpack.c.bf16 %v456, %v452
    %v632 = vpack.c.bf16 %v458, %v454
    %v633 = vpack.c.bf16 %v569, %v565
    %v634 = vpack.c.bf16 %v571, %v567
    %v635 = vpack.c.bf16 %v466, %v462
    %v636 = vpack.c.bf16 %v468, %v464
    %v637 = vpack.c.bf16 %v579, %v575
    %v638 = vpack.c.bf16 %v581, %v577
    %v639 = vpack.c.bf16 %v476, %v472
    %v640 = vpack.c.bf16 %v478, %v474
    %v641 = vpack.c.bf16 %v589, %v585
    %v642 = vpack.c.bf16 %v591, %v587
    %v643 = vpack.c.bf16 %v486, %v482
    %v644 = vpack.c.bf16 %v488, %v484
    %v645 = vpack.c.bf16 %v599, %v595
    %v646 = vpack.c.bf16 %v601, %v597
    %v647 = vpack.c.bf16 %v496, %v492
    %v648 = vpack.c.bf16 %v498, %v494
    %v649 = vpack.c.bf16 %v609, %v605
    %v650 = vpack.c.bf16 %v611, %v607
    %v651 = vpack.c.bf16 %v506, %v502
    %v652 = vpack.c.bf16 %v508, %v504
    %v653 = vpack.c.bf16 %v619, %v615
    %v654 = vpack.c.bf16 %v621, %v617
    %v687 = vunpack.c.l.b16 %v623
    %v688 = vunpack.c.l.b16 %v624
    %v689 = vunpack.c.l.b16 %v625
    %v690 = vunpack.c.l.b16 %v626
    %v691 = vunpack.c.h.b16 %v623
    %v692 = vunpack.c.h.b16 %v624
    %v693 = vunpack.c.h.b16 %v625
    %v694 = vunpack.c.h.b16 %v626
    %v695 = vunpack.c.l.b16 %v627
    %v696 = vunpack.c.l.b16 %v628
    %v697 = vunpack.c.l.b16 %v629
    %v698 = vunpack.c.l.b16 %v630
    %v699 = vunpack.c.h.b16 %v627
    %v700 = vunpack.c.h.b16 %v628
    %v701 = vunpack.c.h.b16 %v629
    %v702 = vunpack.c.h.b16 %v630
    %v703 = vunpack.c.l.b16 %v631
    %v704 = vunpack.c.l.b16 %v632
    %v705 = vunpack.c.l.b16 %v633
    %v706 = vunpack.c.l.b16 %v634
    %v707 = vunpack.c.h.b16 %v631
    %v708 = vunpack.c.h.b16 %v632
    %v709 = vunpack.c.h.b16 %v633
    %v710 = vunpack.c.h.b16 %v634
    %v711 = vunpack.c.l.b16 %v635
    %v712 = vunpack.c.l.b16 %v636
    %v713 = vunpack.c.l.b16 %v637
    %v714 = vunpack.c.l.b16 %v638
    %v715 = vunpack.c.h.b16 %v635
    %v716 = vunpack.c.h.b16 %v636
    %v717 = vunpack.c.h.b16 %v637
    %v718 = vunpack.c.h.b16 %v638
    %v719 = vunpack.c.l.b16 %v639
    %v720 = vunpack.c.l.b16 %v640
    %v721 = vunpack.c.l.b16 %v641
    %v722 = vunpack.c.l.b16 %v642
    %v723 = vunpack.c.h.b16 %v639
    %v724 = vunpack.c.h.b16 %v640
    %v725 = vunpack.c.h.b16 %v641
    %v726 = vunpack.c.h.b16 %v642
    %v727 = vunpack.c.l.b16 %v643
    %v728 = vunpack.c.l.b16 %v644
    %v729 = vunpack.c.l.b16 %v645
    %v730 = vunpack.c.l.b16 %v646
    %v731 = vunpack.c.h.b16 %v643
    %v732 = vunpack.c.h.b16 %v644
    %v733 = vunpack.c.h.b16 %v645
    %v734 = vunpack.c.h.b16 %v646
    %v735 = vunpack.c.l.b16 %v647
    %v736 = vunpack.c.l.b16 %v648
    %v737 = vunpack.c.l.b16 %v649
    %v738 = vunpack.c.l.b16 %v650
    %v739 = vunpack.c.h.b16 %v647
    %v740 = vunpack.c.h.b16 %v648
    %v741 = vunpack.c.h.b16 %v649
    %v742 = vunpack.c.h.b16 %v650
    %v743 = vunpack.c.l.b16 %v651
    %v744 = vunpack.c.l.b16 %v652
    %v745 = vunpack.c.l.b16 %v653
    %v746 = vunpack.c.l.b16 %v654
    %v747 = vunpack.c.h.b16 %v651
    %v748 = vunpack.c.h.b16 %v652
    %v749 = vunpack.c.h.b16 %v653
    %v750 = vunpack.c.h.b16 %v654
    %v751 = vpack.c.b16 %v688, %v687
    %v752 = vpack.c.b16 %v690, %v689
    %v753 = vpack.c.b16 %v692, %v691
    %v754 = vpack.c.b16 %v694, %v693
    %v755 = vpack.c.b16 %v696, %v695
    %v756 = vpack.c.b16 %v698, %v697
    %v757 = vpack.c.b16 %v700, %v699
    %v758 = vpack.c.b16 %v702, %v701
    %v759 = vpack.c.b16 %v704, %v703
    %v760 = vpack.c.b16 %v706, %v705
    %v761 = vpack.c.b16 %v708, %v707
    %v762 = vpack.c.b16 %v710, %v709
    %v763 = vpack.c.b16 %v712, %v711
    %v764 = vpack.c.b16 %v714, %v713
    %v765 = vpack.c.b16 %v716, %v715
    %v766 = vpack.c.b16 %v718, %v717
    %v767 = vpack.c.b16 %v720, %v719
    %v768 = vpack.c.b16 %v722, %v721
    %v769 = vpack.c.b16 %v724, %v723
    %v770 = vpack.c.b16 %v726, %v725
    %v771 = vpack.c.b16 %v728, %v727
    %v772 = vpack.c.b16 %v730, %v729
    %v773 = vpack.c.b16 %v732, %v731
    %v774 = vpack.c.b16 %v734, %v733
    %v775 = vpack.c.b16 %v736, %v735
    %v776 = vpack.c.b16 %v738, %v737
    %v777 = vpack.c.b16 %v740, %v739
    %v778 = vpack.c.b16 %v742, %v741
    %v779 = vpack.c.b16 %v744, %v743
    %v780 = vpack.c.b16 %v746, %v745
    %v781 = vpack.c.b16 %v748, %v747
    %v782 = vpack.c.b16 %v750, %v749
    %815 = vst [vmem:[#allocation2] sm:$0xff] %v751
    %816 = vst [vmem:[#allocation2 + $0x8] sm:$0xff] %v752
    %817 = vst [vmem:[#allocation2 + $0x10] sm:$0xff] %v753
    %818 = vst [vmem:[#allocation2 + $0x18] sm:$0xff] %v754
    %819 = vst [vmem:[#allocation2 + $0x20] sm:$0xff] %v755
    %820 = vst [vmem:[#allocation2 + $0x28] sm:$0xff] %v756
    %821 = vst [vmem:[#allocation2 + $0x30] sm:$0xff] %v757
    %822 = vst [vmem:[#allocation2 + $0x38] sm:$0xff] %v758
    %823 = vst [vmem:[#allocation2 + $0x40] sm:$0xff] %v759
    %824 = vst [vmem:[#allocation2 + $0x48] sm:$0xff] %v760
    %825 = vst [vmem:[#allocation2 + $0x50] sm:$0xff] %v761
    %826 = vst [vmem:[#allocation2 + $0x58] sm:$0xff] %v762
    %827 = vst [vmem:[#allocation2 + $0x60] sm:$0xff] %v763
    %828 = vst [vmem:[#allocation2 + $0x68] sm:$0xff] %v764
    %829 = vst [vmem:[#allocation2 + $0x70] sm:$0xff] %v765
    %830 = vst [vmem:[#allocation2 + $0x78] sm:$0xff] %v766
    %831 = vst [vmem:[#allocation2 + $0x80] sm:$0xff] %v767
    %832 = vst [vmem:[#allocation2 + $0x88] sm:$0xff] %v768
    %833 = vst [vmem:[#allocation2 + $0x90] sm:$0xff] %v769
    %834 = vst [vmem:[#allocation2 + $0x98] sm:$0xff] %v770
    %835 = vst [vmem:[#allocation2 + $0xa0] sm:$0xff] %v771
    %836 = vst [vmem:[#allocation2 + $0xa8] sm:$0xff] %v772
    %837 = vst [vmem:[#allocation2 + $0xb0] sm:$0xff] %v773
    %838 = vst [vmem:[#allocation2 + $0xb8] sm:$0xff] %v774
    %839 = vst [vmem:[#allocation2 + $0xc0] sm:$0xff] %v775
    %840 = vst [vmem:[#allocation2 + $0xc8] sm:$0xff] %v776
    %841 = vst [vmem:[#allocation2 + $0xd0] sm:$0xff] %v777
    %842 = vst [vmem:[#allocation2 + $0xd8] sm:$0xff] %v778
    %843 = vst [vmem:[#allocation2 + $0xe0] sm:$0xff] %v779
    %844 = vst [vmem:[#allocation2 + $0xe8] sm:$0xff] %v780
    %845 = vst [vmem:[#allocation2 + $0xf0] sm:$0xff] %v781
    %846 = vst [vmem:[#allocation2 + $0xf8] sm:$0xff] %v782
    %v847 = vld [vmem:[#allocation9] sm:$0xff]
    %v848 = vld [vmem:[#allocation9 + $0x8] sm:$0xff]
    %v849 = vld [vmem:[#allocation9 + $0x10] sm:$0xff]
    %v850 = vld [vmem:[#allocation9 + $0x18] sm:$0xff]
    %v851 = vld [vmem:[#allocation9 + $0x20] sm:$0xff]
    %v852 = vld [vmem:[#allocation9 + $0x28] sm:$0xff]
    %v853 = vld [vmem:[#allocation9 + $0x30] sm:$0xff]
    %v854 = vld [vmem:[#allocation9 + $0x38] sm:$0xff]
    %v855 = vld [vmem:[#allocation9 + $0x40] sm:$0xff]
    %v856 = vld [vmem:[#allocation9 + $0x48] sm:$0xff]
    %v857 = vld [vmem:[#allocation9 + $0x50] sm:$0xff]
    %v858 = vld [vmem:[#allocation9 + $0x58] sm:$0xff]
    %v859 = vld [vmem:[#allocation9 + $0x60] sm:$0xff]
    %v860 = vld [vmem:[#allocation9 + $0x68] sm:$0xff]
    %v861 = vld [vmem:[#allocation9 + $0x70] sm:$0xff]
    %v862 = vld [vmem:[#allocation9 + $0x78] sm:$0xff]
    %v863 = vld [vmem:[#allocation9 + $0x80] sm:$0xff]
    %v864 = vld [vmem:[#allocation9 + $0x88] sm:$0xff]
    %v865 = vld [vmem:[#allocation9 + $0x90] sm:$0xff]
    %v866 = vld [vmem:[#allocation9 + $0x98] sm:$0xff]
    %v867 = vld [vmem:[#allocation9 + $0xa0] sm:$0xff]
    %v868 = vld [vmem:[#allocation9 + $0xa8] sm:$0xff]
    %v869 = vld [vmem:[#allocation9 + $0xb0] sm:$0xff]
    %v870 = vld [vmem:[#allocation9 + $0xb8] sm:$0xff]
    %v871 = vld [vmem:[#allocation9 + $0xc0] sm:$0xff]
    %v872 = vld [vmem:[#allocation9 + $0xc8] sm:$0xff]
    %v873 = vld [vmem:[#allocation9 + $0xd0] sm:$0xff]
    %v874 = vld [vmem:[#allocation9 + $0xd8] sm:$0xff]
    %v875 = vld [vmem:[#allocation9 + $0xe0] sm:$0xff]
    %v876 = vld [vmem:[#allocation9 + $0xe8] sm:$0xff]
    %v877 = vld [vmem:[#allocation9 + $0xf0] sm:$0xff]
    %v878 = vld [vmem:[#allocation9 + $0xf8] sm:$0xff]
    %v879 = vld [vmem:[#allocation2] sm:$0xff]
    %v880 = vld [vmem:[#allocation2 + $0x8] sm:$0xff]
    %v881 = vld [vmem:[#allocation2 + $0x10] sm:$0xff]
    %v882 = vld [vmem:[#allocation2 + $0x18] sm:$0xff]
    %v883 = vunpack.c.l.bf16 %v879
    %v884 = vunpack.c.h.bf16 %v879
    %v885 = vunpack.c.l.bf16 %v880
    %v886 = vunpack.c.h.bf16 %v880
    %v887 = vunpack.c.l.bf16 %v881
    %v888 = vunpack.c.h.bf16 %v881
    %v889 = vunpack.c.l.bf16 %v882
    %v890 = vunpack.c.h.bf16 %v882
    %v923 = vunpack.c.l.b16 %v847
    %v924 = vunpack.c.h.b16 %v847
    %v925 = vunpack.c.l.b16 %v848
    %v926 = vunpack.c.h.b16 %v848
    %v927 = vunpack.c.l.b16 %v849
    %v928 = vunpack.c.h.b16 %v849
    %v929 = vunpack.c.l.b16 %v850
    %v930 = vunpack.c.h.b16 %v850
    %v931 = vunpack.c.l.b16 %v851
    %v932 = vunpack.c.h.b16 %v851
    %v933 = vunpack.c.l.b16 %v852
    %v934 = vunpack.c.h.b16 %v852
    %v935 = vunpack.c.l.b16 %v853
    %v936 = vunpack.c.h.b16 %v853
    %v937 = vunpack.c.l.b16 %v854
    %v938 = vunpack.c.h.b16 %v854
    %v939 = vunpack.c.l.b16 %v855
    %v940 = vunpack.c.h.b16 %v855
    %v941 = vunpack.c.l.b16 %v856
    %v942 = vunpack.c.h.b16 %v856
    %v943 = vunpack.c.l.b16 %v857
    %v944 = vunpack.c.h.b16 %v857
    %v945 = vunpack.c.l.b16 %v858
    %v946 = vunpack.c.h.b16 %v858
    %v947 = vunpack.c.l.b16 %v859
    %v948 = vunpack.c.h.b16 %v859
    %v949 = vunpack.c.l.b16 %v860
    %v950 = vunpack.c.h.b16 %v860
    %v951 = vunpack.c.l.b16 %v861
    %v952 = vunpack.c.h.b16 %v861
    %v953 = vunpack.c.l.b16 %v862
    %v954 = vunpack.c.h.b16 %v862
    %v955 = vunpack.c.l.b16 %v863
    %v956 = vunpack.c.h.b16 %v863
    %v957 = vunpack.c.l.b16 %v864
    %v958 = vunpack.c.h.b16 %v864
    %v959 = vunpack.c.l.b16 %v865
    %v960 = vunpack.c.h.b16 %v865
    %v961 = vunpack.c.l.b16 %v866
    %v962 = vunpack.c.h.b16 %v866
    %v963 = vunpack.c.l.b16 %v867
    %v964 = vunpack.c.h.b16 %v867
    %v965 = vunpack.c.l.b16 %v868
    %v966 = vunpack.c.h.b16 %v868
    %v967 = vunpack.c.l.b16 %v869
    %v968 = vunpack.c.h.b16 %v869
    %v969 = vunpack.c.l.b16 %v870
    %v970 = vunpack.c.h.b16 %v870
    %v971 = vunpack.c.l.b16 %v871
    %v972 = vunpack.c.h.b16 %v871
    %v973 = vunpack.c.l.b16 %v872
    %v974 = vunpack.c.h.b16 %v872
    %v975 = vunpack.c.l.b16 %v873
    %v976 = vunpack.c.h.b16 %v873
    %v977 = vunpack.c.l.b16 %v874
    %v978 = vunpack.c.h.b16 %v874
    %v979 = vunpack.c.l.b16 %v875
    %v980 = vunpack.c.h.b16 %v875
    %v981 = vunpack.c.l.b16 %v876
    %v982 = vunpack.c.h.b16 %v876
    %v983 = vunpack.c.l.b16 %v877
    %v984 = vunpack.c.h.b16 %v877
    %v985 = vunpack.c.l.b16 %v878
    %v986 = vunpack.c.h.b16 %v878
    %v987 = vpack.c.b16 %v927, %v923
    %v988 = vpack.c.b16 %v928, %v924
    %v989 = vpack.c.b16 %v929, %v925
    %v990 = vpack.c.b16 %v930, %v926
    %v991 = vpack.c.b16 %v935, %v931
    %v992 = vpack.c.b16 %v936, %v932
    %v993 = vpack.c.b16 %v937, %v933
    %v994 = vpack.c.b16 %v938, %v934
    %v995 = vpack.c.b16 %v943, %v939
    %v996 = vpack.c.b16 %v944, %v940
    %v997 = vpack.c.b16 %v945, %v941
    %v998 = vpack.c.b16 %v946, %v942
    %v999 = vpack.c.b16 %v951, %v947
    %v1000 = vpack.c.b16 %v952, %v948
    %v1001 = vpack.c.b16 %v953, %v949
    %v1002 = vpack.c.b16 %v954, %v950
    %v1003 = vpack.c.b16 %v959, %v955
    %v1004 = vpack.c.b16 %v960, %v956
    %v1005 = vpack.c.b16 %v961, %v957
    %v1006 = vpack.c.b16 %v962, %v958
    %v1007 = vpack.c.b16 %v967, %v963
    %v1008 = vpack.c.b16 %v968, %v964
    %v1009 = vpack.c.b16 %v969, %v965
    %v1010 = vpack.c.b16 %v970, %v966
    %v1011 = vpack.c.b16 %v975, %v971
    %v1012 = vpack.c.b16 %v976, %v972
    %v1013 = vpack.c.b16 %v977, %v973
    %v1014 = vpack.c.b16 %v978, %v974
    %v1015 = vpack.c.b16 %v983, %v979
    %v1016 = vpack.c.b16 %v984, %v980
    %v1017 = vpack.c.b16 %v985, %v981
    %v1018 = vpack.c.b16 %v986, %v982
    %1051 = vmatprep.subr.bf16.mxu0 %v1016
    %1052 = vmatpush1.bf16.msra.mxu0 %v1015
    %1053 = vmatprep.subr.bf16.mxu0 %v1012
    %1054 = vmatpush1.bf16.msra.mxu0 %v1011
    %1055 = vmatprep.subr.bf16.mxu0 %v1008
    %1056 = vmatpush1.bf16.msra.mxu0 %v1007
    %1057 = vmatprep.subr.bf16.mxu0 %v1004
    %1058 = vmatpush1.bf16.msra.mxu0 %v1003
    %1059 = vmatprep.subr.bf16.mxu0 %v1000
    %1060 = vmatpush1.bf16.msra.mxu0 %v999
    %1061 = vmatprep.subr.bf16.mxu0 %v996
    %1062 = vmatpush1.bf16.msra.mxu0 %v995
    %1063 = vmatprep.subr.bf16.mxu0 %v992
    %1064 = vmatpush1.bf16.msra.mxu0 %v991
    %1065 = vmatprep.subr.bf16.mxu0 %v988
    %1066 = vmatpush1.bf16.msra.mxu0 %v987
    %1067 = vmatprep.subr.bf16.mxu0 0
    %1068 = vmatpush2.bf16.msra.mxu0 0
    %1069 = vmatprep.subr.bf16.mxu0 0
    %1070 = vmatpush2.bf16.msra.mxu0 0
    %1071 = vmatprep.subr.bf16.mxu0 0
    %1072 = vmatpush2.bf16.msra.mxu0 0
    %1073 = vmatprep.subr.bf16.mxu0 0
    %1074 = vmatpush2.bf16.msra.mxu0 0
    %1075 = vmatprep.subr.bf16.mxu0 0
    %1076 = vmatpush2.bf16.msra.mxu0 0
    %1077 = vmatprep.subr.bf16.mxu0 0
    %1078 = vmatpush2.bf16.msra.mxu0 0
    %1079 = vmatprep.subr.bf16.mxu0 0
    %1080 = vmatpush2.bf16.msra.mxu0 0
    %1081 = vmatprep.subr.bf16.mxu0 0
    %1082 = vmatpush2.bf16.msra.mxu0 0
    %1083 = vmatprep.mubr.bf16.mxu0 0
    %1084 = vmatmul.mubr.bf16.gmra.mxu0 0
    %v1085 = vpop.f32.mrf.mxu0
    %v1086 = vadd.f32 0.0, %v1085
    %v1087 = vpop.f32.mrf.mxu0
    %v1088 = vadd.f32 0.0, %v1087
    %v1089 = vpop.f32.mrf.mxu0
    %v1090 = vadd.f32 0.0, %v1089
    %v1091 = vpop.f32.mrf.mxu0
    %v1092 = vadd.f32 0.0, %v1091
    %1093 = vdwg.mxu0
    %1094 = vmatprep.subr.bf16.mxu0 %v1018
    %1095 = vmatpush1.bf16.msra.mxu0 %v1017
    %1096 = vmatprep.subr.bf16.mxu0 %v1014
    %1097 = vmatpush1.bf16.msra.mxu0 %v1013
    %1098 = vmatprep.subr.bf16.mxu0 %v1010
    %1099 = vmatpush1.bf16.msra.mxu0 %v1009
    %1100 = vmatprep.subr.bf16.mxu0 %v1006
    %1101 = vmatpush1.bf16.msra.mxu0 %v1005
    %1102 = vmatprep.subr.bf16.mxu0 %v1002
    %1103 = vmatpush1.bf16.msra.mxu0 %v1001
    %1104 = vmatprep.subr.bf16.mxu0 %v998
    %1105 = vmatpush1.bf16.msra.mxu0 %v997
    %1106 = vmatprep.subr.bf16.mxu0 %v994
    %1107 = vmatpush1.bf16.msra.mxu0 %v993
    %1108 = vmatprep.subr.bf16.mxu0 %v990
    %1109 = vmatpush1.bf16.msra.mxu0 %v989
    %1110 = vmatprep.subr.bf16.mxu0 0
    %1111 = vmatpush2.bf16.msra.mxu0 0
    %1112 = vmatprep.subr.bf16.mxu0 0
    %1113 = vmatpush2.bf16.msra.mxu0 0
    %1114 = vmatprep.subr.bf16.mxu0 0
    %1115 = vmatpush2.bf16.msra.mxu0 0
    %1116 = vmatprep.subr.bf16.mxu0 0
    %1117 = vmatpush2.bf16.msra.mxu0 0
    %1118 = vmatprep.subr.bf16.mxu0 0
    %1119 = vmatpush2.bf16.msra.mxu0 0
    %1120 = vmatprep.subr.bf16.mxu0 0
    %1121 = vmatpush2.bf16.msra.mxu0 0
    %1122 = vmatprep.subr.bf16.mxu0 0
    %1123 = vmatpush2.bf16.msra.mxu0 0
    %1124 = vmatprep.subr.bf16.mxu0 0
    %1125 = vmatpush2.bf16.msra.mxu0 0
    %1126 = vmatprep.mubr.bf16.mxu0 0
    %1127 = vmatmul.mubr.bf16.gmra.mxu0 0
    %v1128 = vpop.f32.mrf.mxu0
    %v1129 = vadd.f32 0.0, %v1128
    %v1130 = vpop.f32.mrf.mxu0
    %v1131 = vadd.f32 0.0, %v1130
    %v1132 = vpop.f32.mrf.mxu0
    %v1133 = vadd.f32 0.0, %v1132
    %v1134 = vpop.f32.mrf.mxu0
    %v1135 = vadd.f32 0.0, %v1134
    %1136 = vdwg.mxu0
    %v1137 = vadd.f32 %v883, %v1086
    %v1138 = vadd.f32 %v884, %v1088
    %v1139 = vadd.f32 %v885, %v1129
    %v1140 = vadd.f32 %v886, %v1131
    %v1141 = vadd.f32 %v887, %v1090
    %v1142 = vadd.f32 %v888, %v1092
    %v1143 = vadd.f32 %v889, %v1133
    %v1144 = vadd.f32 %v890, %v1135
    %v1145 = vmul.f32 %v1137, 0.5
    %v1146 = vmul.f32 %v1141, 0.5
    %v1147 = vtanh.pop %v1145
    %v1148 = vtanh.pop %v1146
    %v1149 = vadd.f32 %v1147, 1.0
    %v1150 = vadd.f32 %v1148, 1.0
    %v1151 = vmul.f32 %v1149, 0.5
    %v1152 = vmul.f32 %v1150, 0.5
    %v1153 = vmul.f32 %v1138, 0.5
    %v1154 = vmul.f32 %v1142, 0.5
    %v1155 = vtanh.pop %v1153
    %v1156 = vtanh.pop %v1154
    %v1157 = vadd.f32 %v1155, 1.0
    %v1158 = vadd.f32 %v1156, 1.0
    %v1159 = vmul.f32 %v1157, 0.5
    %v1160 = vmul.f32 %v1158, 0.5
    %v1161 = vtanh.pop %v1139
    %v1162 = vtanh.pop %v1143
    %v1163 = vmul.f32 %v1140, 0.5
    %v1164 = vmul.f32 %v1144, 0.5
    %v1165 = vtanh.pop %v1163
    %v1166 = vtanh.pop %v1164
    %v1167 = vadd.f32 %v1165, 1.0
    %v1168 = vadd.f32 %v1166, 1.0
    %v1169 = vmul.f32 %v1167, 0.5
    %v1170 = vmul.f32 %v1168, 0.5
    %v1171 = vmul.f32 %v1159, 0.0
    %v1172 = vmul.f32 %v1160, 0.0
    %v1173 = vmul.f32 %v1151, %v1161
    %v1174 = vmul.f32 %v1152, %v1162
    %v1175 = vadd.f32 %v1171, %v1173
    %v1176 = vadd.f32 %v1172, %v1174
    %v1177 = vtanh.pop %v1175
    %v1178 = vtanh.pop %v1176
    %v1179 = vmul.f32 %v1169, %v1177
    %v1180 = vmul.f32 %v1170, %v1178
    %v1181 = vpack.c.bf16 %v1180, %v1179
    %v1183 = vunpack.c.l.b16 %v1181
    %v1184 = vunpack.c.h.b16 %v1181
    %v1185 = vpack.c.b16 %v1183, %v1183
    %v1186 = vpack.c.b16 %v1184, %v1184
    %1189 = vst [vmem:[#allocation3] sm:$0xf] %v1185
    %1190 = vst [vmem:[#allocation3 + $0x4] sm:$0xf] %v1186
    %s1191 = scalar_lea.vmem [#allocation2], 32
    %v1192 = vld [vmem:[%s1191] sm:$0xff]
    %v1193 = vld [vmem:[%s1191 + $0x8] sm:$0xff]
    %v1194 = vld [vmem:[%s1191 + $0x10] sm:$0xff]
    %v1195 = vld [vmem:[%s1191 + $0x18] sm:$0xff]
    %v1196 = vunpack.c.l.bf16 %v1192
    %v1197 = vunpack.c.h.bf16 %v1192
    %v1198 = vunpack.c.l.bf16 %v1193
    %v1199 = vunpack.c.h.bf16 %v1193
    %v1200 = vunpack.c.l.bf16 %v1194
    %v1201 = vunpack.c.h.bf16 %v1194
    %v1202 = vunpack.c.l.bf16 %v1195
    %v1203 = vunpack.c.h.bf16 %v1195
    %1204 = vmatprep.subr.bf16.mxu0 %v1016
    %1205 = vmatpush1.bf16.msra.mxu0 %v1015
    %1206 = vmatprep.subr.bf16.mxu0 %v1012
    %1207 = vmatpush1.bf16.msra.mxu0 %v1011
    %1208 = vmatprep.subr.bf16.mxu0 %v1008
    %1209 = vmatpush1.bf16.msra.mxu0 %v1007
    %1210 = vmatprep.subr.bf16.mxu0 %v1004
    %1211 = vmatpush1.bf16.msra.mxu0 %v1003
    %1212 = vmatprep.subr.bf16.mxu0 %v1000
    %1213 = vmatpush1.bf16.msra.mxu0 %v999
    %1214 = vmatprep.subr.bf16.mxu0 %v996
    %1215 = vmatpush1.bf16.msra.mxu0 %v995
    %1216 = vmatprep.subr.bf16.mxu0 %v992
    %1217 = vmatpush1.bf16.msra.mxu0 %v991
    %1218 = vmatprep.subr.bf16.mxu0 %v988
    %1219 = vmatpush1.bf16.msra.mxu0 %v987
    %1220 = vmatprep.subr.bf16.mxu0 0
    %1221 = vmatpush2.bf16.msra.mxu0 0
    %1222 = vmatprep.subr.bf16.mxu0 0
    %1223 = vmatpush2.bf16.msra.mxu0 0
    %1224 = vmatprep.subr.bf16.mxu0 0
    %1225 = vmatpush2.bf16.msra.mxu0 0
    %1226 = vmatprep.subr.bf16.mxu0 0
    %1227 = vmatpush2.bf16.msra.mxu0 0
    %1228 = vmatprep.subr.bf16.mxu0 0
    %1229 = vmatpush2.bf16.msra.mxu0 0
    %1230 = vmatprep.subr.bf16.mxu0 0
    %1231 = vmatpush2.bf16.msra.mxu0 0
    %1232 = vmatprep.subr.bf16.mxu0 0
    %1233 = vmatpush2.bf16.msra.mxu0 0
    %1234 = vmatprep.subr.bf16.mxu0 0
    %1235 = vmatpush2.bf16.msra.mxu0 0
    %1236 = vmatprep.mubr.bf16.mxu0 0
    %1237 = vmatmul.mubr.bf16.gmra.mxu0 %v1181
    %v1238 = vpop.f32.mrf.mxu0
    %v1239 = vadd.f32 0.0, %v1238
    %v1240 = vpop.f32.mrf.mxu0
    %v1241 = vadd.f32 0.0, %v1240
    %v1242 = vpop.f32.mrf.mxu0
    %v1243 = vadd.f32 0.0, %v1242
    %v1244 = vpop.f32.mrf.mxu0
    %v1245 = vadd.f32 0.0, %v1244
    %1246 = vdwg.mxu0
    %1247 = vmatprep.subr.bf16.mxu0 %v1018
    %1248 = vmatpush1.bf16.msra.mxu0 %v1017
    %1249 = vmatprep.subr.bf16.mxu0 %v1014
    %1250 = vmatpush1.bf16.msra.mxu0 %v1013
    %1251 = vmatprep.subr.bf16.mxu0 %v1010
    %1252 = vmatpush1.bf16.msra.mxu0 %v1009
    %1253 = vmatprep.subr.bf16.mxu0 %v1006
    %1254 = vmatpush1.bf16.msra.mxu0 %v1005
    %1255 = vmatprep.subr.bf16.mxu0 %v1002
    %1256 = vmatpush1.bf16.msra.mxu0 %v1001
    %1257 = vmatprep.subr.bf16.mxu0 %v998
    %1258 = vmatpush1.bf16.msra.mxu0 %v997
    %1259 = vmatprep.subr.bf16.mxu0 %v994
    %1260 = vmatpush1.bf16.msra.mxu0 %v993
    %1261 = vmatprep.subr.bf16.mxu0 %v990
    %1262 = vmatpush1.bf16.msra.mxu0 %v989
    %1263 = vmatprep.subr.bf16.mxu0 0
    %1264 = vmatpush2.bf16.msra.mxu0 0
    %1265 = vmatprep.subr.bf16.mxu0 0
    %1266 = vmatpush2.bf16.msra.mxu0 0
    %1267 = vmatprep.subr.bf16.mxu0 0
    %1268 = vmatpush2.bf16.msra.mxu0 0
    %1269 = vmatprep.subr.bf16.mxu0 0
    %1270 = vmatpush2.bf16.msra.mxu0 0
    %1271 = vmatprep.subr.bf16.mxu0 0
    %1272 = vmatpush2.bf16.msra.mxu0 0
    %1273 = vmatprep.subr.bf16.mxu0 0
    %1274 = vmatpush2.bf16.msra.mxu0 0
    %1275 = vmatprep.subr.bf16.mxu0 0
    %1276 = vmatpush2.bf16.msra.mxu0 0
    %1277 = vmatprep.subr.bf16.mxu0 0
    %1278 = vmatpush2.bf16.msra.mxu0 0
    %1279 = vmatprep.mubr.bf16.mxu0 0
    %1280 = vmatmul.mubr.bf16.gmra.mxu0 %v1181
    %v1281 = vpop.f32.mrf.mxu0
    %v1282 = vadd.f32 0.0, %v1281
    %v1283 = vpop.f32.mrf.mxu0
    %v1284 = vadd.f32 0.0, %v1283
    %v1285 = vpop.f32.mrf.mxu0
    %v1286 = vadd.f32 0.0, %v1285
    %v1287 = vpop.f32.mrf.mxu0
    %v1288 = vadd.f32 0.0, %v1287
    %1289 = vdwg.mxu0
    %v1290 = vadd.f32 %v1196, %v1239
    %v1291 = vadd.f32 %v1197, %v1241
    %v1292 = vadd.f32 %v1198, %v1282
    %v1293 = vadd.f32 %v1199, %v1284
    %v1294 = vadd.f32 %v1200, %v1243
    %v1295 = vadd.f32 %v1201, %v1245
    %v1296 = vadd.f32 %v1202, %v1286
    %v1297 = vadd.f32 %v1203, %v1288
    %v1298 = vmul.f32 %v1290, 0.5
    %v1299 = vmul.f32 %v1294, 0.5
    %v1300 = vtanh.pop %v1298
    %v1301 = vtanh.pop %v1299
    %v1302 = vadd.f32 %v1300, 1.0
    %v1303 = vadd.f32 %v1301, 1.0
    %v1304 = vmul.f32 %v1302, 0.5
    %v1305 = vmul.f32 %v1303, 0.5
    %v1306 = vmul.f32 %v1291, 0.5
    %v1307 = vmul.f32 %v1295, 0.5
    %v1308 = vtanh.pop %v1306
    %v1309 = vtanh.pop %v1307
    %v1310 = vadd.f32 %v1308, 1.0
    %v1311 = vadd.f32 %v1309, 1.0
    %v1312 = vmul.f32 %v1310, 0.5
    %v1313 = vmul.f32 %v1311, 0.5
    %v1314 = vtanh.pop %v1292
    %v1315 = vtanh.pop %v1296
    %v1316 = vmul.f32 %v1293, 0.5
    %v1317 = vmul.f32 %v1297, 0.5
    %v1318 = vtanh.pop %v1316
    %v1319 = vtanh.pop %v1317
    %v1320 = vadd.f32 %v1318, 1.0
    %v1321 = vadd.f32 %v1319, 1.0
    %v1322 = vmul.f32 %v1320, 0.5
    %v1323 = vmul.f32 %v1321, 0.5
    %v1324 = vmul.f32 %v1312, %v1175
    %v1325 = vmul.f32 %v1313, %v1176
    %v1326 = vmul.f32 %v1304, %v1314
    %v1327 = vmul.f32 %v1305, %v1315
    %v1328 = vadd.f32 %v1324, %v1326
    %v1329 = vadd.f32 %v1325, %v1327
    %v1330 = vtanh.pop %v1328
    %v1331 = vtanh.pop %v1329
    %v1332 = vmul.f32 %v1322, %v1330
    %v1333 = vmul.f32 %v1323, %v1331
    %v1334 = vpack.c.bf16 %v1333, %v1332
    %v1336 = vunpack.c.l.b16 %v1334
    %v1337 = vunpack.c.h.b16 %v1334
    %v1338 = vpack.c.b16 %v1336, %v1336
    %v1339 = vpack.c.b16 %v1337, %v1337
    %s1342 = scalar_lea.vmem [#allocation3], 8
    %1343 = vst [vmem:[%s1342] sm:$0xf] %v1338
    %1344 = vst [vmem:[%s1342 + $0x4] sm:$0xf] %v1339
    %s1345 = scalar_lea.vmem [#allocation2], 64
    %v1346 = vld [vmem:[%s1345] sm:$0xff]
    %v1347 = vld [vmem:[%s1345 + $0x8] sm:$0xff]
    %v1348 = vld [vmem:[%s1345 + $0x10] sm:$0xff]
    %v1349 = vld [vmem:[%s1345 + $0x18] sm:$0xff]
    %v1350 = vunpack.c.l.bf16 %v1346
    %v1351 = vunpack.c.h.bf16 %v1346
    %v1352 = vunpack.c.l.bf16 %v1347
    %v1353 = vunpack.c.h.bf16 %v1347
    %v1354 = vunpack.c.l.bf16 %v1348
    %v1355 = vunpack.c.h.bf16 %v1348
    %v1356 = vunpack.c.l.bf16 %v1349
    %v1357 = vunpack.c.h.bf16 %v1349
    %1358 = vmatprep.subr.bf16.mxu0 %v1016
    %1359 = vmatpush1.bf16.msra.mxu0 %v1015
    %1360 = vmatprep.subr.bf16.mxu0 %v1012
    %1361 = vmatpush1.bf16.msra.mxu0 %v1011
    %1362 = vmatprep.subr.bf16.mxu0 %v1008
    %1363 = vmatpush1.bf16.msra.mxu0 %v1007
    %1364 = vmatprep.subr.bf16.mxu0 %v1004
    %1365 = vmatpush1.bf16.msra.mxu0 %v1003
    %1366 = vmatprep.subr.bf16.mxu0 %v1000
    %1367 = vmatpush1.bf16.msra.mxu0 %v999
    %1368 = vmatprep.subr.bf16.mxu0 %v996
    %1369 = vmatpush1.bf16.msra.mxu0 %v995
    %1370 = vmatprep.subr.bf16.mxu0 %v992
    %1371 = vmatpush1.bf16.msra.mxu0 %v991
    %1372 = vmatprep.subr.bf16.mxu0 %v988
    %1373 = vmatpush1.bf16.msra.mxu0 %v987
    %1374 = vmatprep.subr.bf16.mxu0 0
    %1375 = vmatpush2.bf16.msra.mxu0 0
    %1376 = vmatprep.subr.bf16.mxu0 0
    %1377 = vmatpush2.bf16.msra.mxu0 0
    %1378 = vmatprep.subr.bf16.mxu0 0
    %1379 = vmatpush2.bf16.msra.mxu0 0
    %1380 = vmatprep.subr.bf16.mxu0 0
    %1381 = vmatpush2.bf16.msra.mxu0 0
    %1382 = vmatprep.subr.bf16.mxu0 0
    %1383 = vmatpush2.bf16.msra.mxu0 0
    %1384 = vmatprep.subr.bf16.mxu0 0
    %1385 = vmatpush2.bf16.msra.mxu0 0
    %1386 = vmatprep.subr.bf16.mxu0 0
    %1387 = vmatpush2.bf16.msra.mxu0 0
    %1388 = vmatprep.subr.bf16.mxu0 0
    %1389 = vmatpush2.bf16.msra.mxu0 0
    %1390 = vmatprep.mubr.bf16.mxu0 0
    %1391 = vmatmul.mubr.bf16.gmra.mxu0 %v1334
    %v1392 = vpop.f32.mrf.mxu0
    %v1393 = vadd.f32 0.0, %v1392
    %v1394 = vpop.f32.mrf.mxu0
    %v1395 = vadd.f32 0.0, %v1394
    %v1396 = vpop.f32.mrf.mxu0
    %v1397 = vadd.f32 0.0, %v1396
    %v1398 = vpop.f32.mrf.mxu0
    %v1399 = vadd.f32 0.0, %v1398
    %1400 = vdwg.mxu0
    %1401 = vmatprep.subr.bf16.mxu0 %v1018
    %1402 = vmatpush1.bf16.msra.mxu0 %v1017
    %1403 = vmatprep.subr.bf16.mxu0 %v1014
    %1404 = vmatpush1.bf16.msra.mxu0 %v1013
    %1405 = vmatprep.subr.bf16.mxu0 %v1010
    %1406 = vmatpush1.bf16.msra.mxu0 %v1009
    %1407 = vmatprep.subr.bf16.mxu0 %v1006
    %1408 = vmatpush1.bf16.msra.mxu0 %v1005
    %1409 = vmatprep.subr.bf16.mxu0 %v1002
    %1410 = vmatpush1.bf16.msra.mxu0 %v1001
    %1411 = vmatprep.subr.bf16.mxu0 %v998
    %1412 = vmatpush1.bf16.msra.mxu0 %v997
    %1413 = vmatprep.subr.bf16.mxu0 %v994
    %1414 = vmatpush1.bf16.msra.mxu0 %v993
    %1415 = vmatprep.subr.bf16.mxu0 %v990
    %1416 = vmatpush1.bf16.msra.mxu0 %v989
    %1417 = vmatprep.subr.bf16.mxu0 0
    %1418 = vmatpush2.bf16.msra.mxu0 0
    %1419 = vmatprep.subr.bf16.mxu0 0
    %1420 = vmatpush2.bf16.msra.mxu0 0
    %1421 = vmatprep.subr.bf16.mxu0 0
    %1422 = vmatpush2.bf16.msra.mxu0 0
    %1423 = vmatprep.subr.bf16.mxu0 0
    %1424 = vmatpush2.bf16.msra.mxu0 0
    %1425 = vmatprep.subr.bf16.mxu0 0
    %1426 = vmatpush2.bf16.msra.mxu0 0
    %1427 = vmatprep.subr.bf16.mxu0 0
    %1428 = vmatpush2.bf16.msra.mxu0 0
    %1429 = vmatprep.subr.bf16.mxu0 0
    %1430 = vmatpush2.bf16.msra.mxu0 0
    %1431 = vmatprep.subr.bf16.mxu0 0
    %1432 = vmatpush2.bf16.msra.mxu0 0
    %1433 = vmatprep.mubr.bf16.mxu0 0
    %1434 = vmatmul.mubr.bf16.gmra.mxu0 %v1334
    %v1435 = vpop.f32.mrf.mxu0
    %v1436 = vadd.f32 0.0, %v1435
    %v1437 = vpop.f32.mrf.mxu0
    %v1438 = vadd.f32 0.0, %v1437
    %v1439 = vpop.f32.mrf.mxu0
    %v1440 = vadd.f32 0.0, %v1439
    %v1441 = vpop.f32.mrf.mxu0
    %v1442 = vadd.f32 0.0, %v1441
    %1443 = vdwg.mxu0
    %v1444 = vadd.f32 %v1350, %v1393
    %v1445 = vadd.f32 %v1351, %v1395
    %v1446 = vadd.f32 %v1352, %v1436
    %v1447 = vadd.f32 %v1353, %v1438
    %v1448 = vadd.f32 %v1354, %v1397
    %v1449 = vadd.f32 %v1355, %v1399
    %v1450 = vadd.f32 %v1356, %v1440
    %v1451 = vadd.f32 %v1357, %v1442
    %v1452 = vmul.f32 %v1444, 0.5
    %v1453 = vmul.f32 %v1448, 0.5
    %v1454 = vtanh.pop %v1452
    %v1455 = vtanh.pop %v1453
    %v1456 = vadd.f32 %v1454, 1.0
    %v1457 = vadd.f32 %v1455, 1.0
    %v1458 = vmul.f32 %v1456, 0.5
    %v1459 = vmul.f32 %v1457, 0.5
    %v1460 = vmul.f32 %v1445, 0.5
    %v1461 = vmul.f32 %v1449, 0.5
    %v1462 = vtanh.pop %v1460
    %v1463 = vtanh.pop %v1461
    %v1464 = vadd.f32 %v1462, 1.0
    %v1465 = vadd.f32 %v1463, 1.0
    %v1466 = vmul.f32 %v1464, 0.5
    %v1467 = vmul.f32 %v1465, 0.5
    %v1468 = vtanh.pop %v1446
    %v1469 = vtanh.pop %v1450
    %v1470 = vmul.f32 %v1447, 0.5
    %v1471 = vmul.f32 %v1451, 0.5
    %v1472 = vtanh.pop %v1470
    %v1473 = vtanh.pop %v1471
    %v1474 = vadd.f32 %v1472, 1.0
    %v1475 = vadd.f32 %v1473, 1.0
    %v1476 = vmul.f32 %v1474, 0.5
    %v1477 = vmul.f32 %v1475, 0.5
    %v1478 = vmul.f32 %v1466, %v1328
    %v1479 = vmul.f32 %v1467, %v1329
    %v1480 = vmul.f32 %v1458, %v1468
    %v1481 = vmul.f32 %v1459, %v1469
    %v1482 = vadd.f32 %v1478, %v1480
    %v1483 = vadd.f32 %v1479, %v1481
    %v1484 = vtanh.pop %v1482
    %v1485 = vtanh.pop %v1483
    %v1486 = vmul.f32 %v1476, %v1484
    %v1487 = vmul.f32 %v1477, %v1485
    %v1488 = vpack.c.bf16 %v1487, %v1486
    %v1490 = vunpack.c.l.b16 %v1488
    %v1491 = vunpack.c.h.b16 %v1488
    %v1492 = vpack.c.b16 %v1490, %v1490
    %v1493 = vpack.c.b16 %v1491, %v1491
    %s1496 = scalar_lea.vmem [#allocation3], 16
    %1497 = vst [vmem:[%s1496] sm:$0xf] %v1492
    %1498 = vst [vmem:[%s1496 + $0x4] sm:$0xf] %v1493
    %s1499 = scalar_lea.vmem [#allocation2], 96
    %v1500 = vld [vmem:[%s1499] sm:$0xff]
    %v1501 = vld [vmem:[%s1499 + $0x8] sm:$0xff]
    %v1502 = vld [vmem:[%s1499 + $0x10] sm:$0xff]
    %v1503 = vld [vmem:[%s1499 + $0x18] sm:$0xff]
    %v1504 = vunpack.c.l.bf16 %v1500
    %v1505 = vunpack.c.h.bf16 %v1500
    %v1506 = vunpack.c.l.bf16 %v1501
    %v1507 = vunpack.c.h.bf16 %v1501
    %v1508 = vunpack.c.l.bf16 %v1502
    %v1509 = vunpack.c.h.bf16 %v1502
    %v1510 = vunpack.c.l.bf16 %v1503
    %v1511 = vunpack.c.h.bf16 %v1503
    %1512 = vmatprep.subr.bf16.mxu0 %v1016
    %1513 = vmatpush1.bf16.msra.mxu0 %v1015
    %1514 = vmatprep.subr.bf16.mxu0 %v1012
    %1515 = vmatpush1.bf16.msra.mxu0 %v1011
    %1516 = vmatprep.subr.bf16.mxu0 %v1008
    %1517 = vmatpush1.bf16.msra.mxu0 %v1007
    %1518 = vmatprep.subr.bf16.mxu0 %v1004
    %1519 = vmatpush1.bf16.msra.mxu0 %v1003
    %1520 = vmatprep.subr.bf16.mxu0 %v1000
    %1521 = vmatpush1.bf16.msra.mxu0 %v999
    %1522 = vmatprep.subr.bf16.mxu0 %v996
    %1523 = vmatpush1.bf16.msra.mxu0 %v995
    %1524 = vmatprep.subr.bf16.mxu0 %v992
    %1525 = vmatpush1.bf16.msra.mxu0 %v991
    %1526 = vmatprep.subr.bf16.mxu0 %v988
    %1527 = vmatpush1.bf16.msra.mxu0 %v987
    %1528 = vmatprep.subr.bf16.mxu0 0
    %1529 = vmatpush2.bf16.msra.mxu0 0
    %1530 = vmatprep.subr.bf16.mxu0 0
    %1531 = vmatpush2.bf16.msra.mxu0 0
    %1532 = vmatprep.subr.bf16.mxu0 0
    %1533 = vmatpush2.bf16.msra.mxu0 0
    %1534 = vmatprep.subr.bf16.mxu0 0
    %1535 = vmatpush2.bf16.msra.mxu0 0
    %1536 = vmatprep.subr.bf16.mxu0 0
    %1537 = vmatpush2.bf16.msra.mxu0 0
    %1538 = vmatprep.subr.bf16.mxu0 0
    %1539 = vmatpush2.bf16.msra.mxu0 0
    %1540 = vmatprep.subr.bf16.mxu0 0
    %1541 = vmatpush2.bf16.msra.mxu0 0
    %1542 = vmatprep.subr.bf16.mxu0 0
    %1543 = vmatpush2.bf16.msra.mxu0 0
    %1544 = vmatprep.mubr.bf16.mxu0 0
    %1545 = vmatmul.mubr.bf16.gmra.mxu0 %v1488
    %v1546 = vpop.f32.mrf.mxu0
    %v1547 = vadd.f32 0.0, %v1546
    %v1548 = vpop.f32.mrf.mxu0
    %v1549 = vadd.f32 0.0, %v1548
    %v1550 = vpop.f32.mrf.mxu0
    %v1551 = vadd.f32 0.0, %v1550
    %v1552 = vpop.f32.mrf.mxu0
    %v1553 = vadd.f32 0.0, %v1552
    %1554 = vdwg.mxu0
    %1555 = vmatprep.subr.bf16.mxu0 %v1018
    %1556 = vmatpush1.bf16.msra.mxu0 %v1017
    %1557 = vmatprep.subr.bf16.mxu0 %v1014
    %1558 = vmatpush1.bf16.msra.mxu0 %v1013
    %1559 = vmatprep.subr.bf16.mxu0 %v1010
    %1560 = vmatpush1.bf16.msra.mxu0 %v1009
    %1561 = vmatprep.subr.bf16.mxu0 %v1006
    %1562 = vmatpush1.bf16.msra.mxu0 %v1005
    %1563 = vmatprep.subr.bf16.mxu0 %v1002
    %1564 = vmatpush1.bf16.msra.mxu0 %v1001
    %1565 = vmatprep.subr.bf16.mxu0 %v998
    %1566 = vmatpush1.bf16.msra.mxu0 %v997
    %1567 = vmatprep.subr.bf16.mxu0 %v994
    %1568 = vmatpush1.bf16.msra.mxu0 %v993
    %1569 = vmatprep.subr.bf16.mxu0 %v990
    %1570 = vmatpush1.bf16.msra.mxu0 %v989
    %1571 = vmatprep.subr.bf16.mxu0 0
    %1572 = vmatpush2.bf16.msra.mxu0 0
    %1573 = vmatprep.subr.bf16.mxu0 0
    %1574 = vmatpush2.bf16.msra.mxu0 0
    %1575 = vmatprep.subr.bf16.mxu0 0
    %1576 = vmatpush2.bf16.msra.mxu0 0
    %1577 = vmatprep.subr.bf16.mxu0 0
    %1578 = vmatpush2.bf16.msra.mxu0 0
    %1579 = vmatprep.subr.bf16.mxu0 0
    %1580 = vmatpush2.bf16.msra.mxu0 0
    %1581 = vmatprep.subr.bf16.mxu0 0
    %1582 = vmatpush2.bf16.msra.mxu0 0
    %1583 = vmatprep.subr.bf16.mxu0 0
    %1584 = vmatpush2.bf16.msra.mxu0 0
    %1585 = vmatprep.subr.bf16.mxu0 0
    %1586 = vmatpush2.bf16.msra.mxu0 0
    %1587 = vmatprep.mubr.bf16.mxu0 0
    %1588 = vmatmul.mubr.bf16.gmra.mxu0 %v1488
    %v1589 = vpop.f32.mrf.mxu0
    %v1590 = vadd.f32 0.0, %v1589
    %v1591 = vpop.f32.mrf.mxu0
    %v1592 = vadd.f32 0.0, %v1591
    %v1593 = vpop.f32.mrf.mxu0
    %v1594 = vadd.f32 0.0, %v1593
    %v1595 = vpop.f32.mrf.mxu0
    %v1596 = vadd.f32 0.0, %v1595
    %1597 = vdwg.mxu0
    %v1598 = vadd.f32 %v1504, %v1547
    %v1599 = vadd.f32 %v1505, %v1549
    %v1600 = vadd.f32 %v1506, %v1590
    %v1601 = vadd.f32 %v1507, %v1592
    %v1602 = vadd.f32 %v1508, %v1551
    %v1603 = vadd.f32 %v1509, %v1553
    %v1604 = vadd.f32 %v1510, %v1594
    %v1605 = vadd.f32 %v1511, %v1596
    %v1606 = vmul.f32 %v1598, 0.5
    %v1607 = vmul.f32 %v1602, 0.5
    %v1608 = vtanh.pop %v1606
    %v1609 = vtanh.pop %v1607
    %v1610 = vadd.f32 %v1608, 1.0
    %v1611 = vadd.f32 %v1609, 1.0
    %v1612 = vmul.f32 %v1610, 0.5
    %v1613 = vmul.f32 %v1611, 0.5
    %v1614 = vmul.f32 %v1599, 0.5
    %v1615 = vmul.f32 %v1603, 0.5
    %v1616 = vtanh.pop %v1614
    %v1617 = vtanh.pop %v1615
    %v1618 = vadd.f32 %v1616, 1.0
    %v1619 = vadd.f32 %v1617, 1.0
    %v1620 = vmul.f32 %v1618, 0.5
    %v1621 = vmul.f32 %v1619, 0.5
    %v1622 = vtanh.pop %v1600
    %v1623 = vtanh.pop %v1604
    %v1624 = vmul.f32 %v1601, 0.5
    %v1625 = vmul.f32 %v1605, 0.5
    %v1626 = vtanh.pop %v1624
    %v1627 = vtanh.pop %v1625
    %v1628 = vadd.f32 %v1626, 1.0
    %v1629 = vadd.f32 %v1627, 1.0
    %v1630 = vmul.f32 %v1628, 0.5
    %v1631 = vmul.f32 %v1629, 0.5
    %v1632 = vmul.f32 %v1620, %v1482
    %v1633 = vmul.f32 %v1621, %v1483
    %v1634 = vmul.f32 %v1612, %v1622
    %v1635 = vmul.f32 %v1613, %v1623
    %v1636 = vadd.f32 %v1632, %v1634
    %v1637 = vadd.f32 %v1633, %v1635
    %v1638 = vtanh.pop %v1636
    %v1639 = vtanh.pop %v1637
    %v1640 = vmul.f32 %v1630, %v1638
    %v1641 = vmul.f32 %v1631, %v1639
    %v1642 = vpack.c.bf16 %v1641, %v1640
    %v1644 = vunpack.c.l.b16 %v1642
    %v1645 = vunpack.c.h.b16 %v1642
    %v1646 = vpack.c.b16 %v1644, %v1644
    %v1647 = vpack.c.b16 %v1645, %v1645
    %s1650 = scalar_lea.vmem [#allocation3], 24
    %1651 = vst [vmem:[%s1650] sm:$0xf] %v1646
    %1652 = vst [vmem:[%s1650 + $0x4] sm:$0xf] %v1647
    %s1653 = scalar_lea.vmem [#allocation2], 128
    %v1654 = vld [vmem:[%s1653] sm:$0xff]
    %v1655 = vld [vmem:[%s1653 + $0x8] sm:$0xff]
    %v1656 = vld [vmem:[%s1653 + $0x10] sm:$0xff]
    %v1657 = vld [vmem:[%s1653 + $0x18] sm:$0xff]
    %v1658 = vunpack.c.l.bf16 %v1654
    %v1659 = vunpack.c.h.bf16 %v1654
    %v1660 = vunpack.c.l.bf16 %v1655
    %v1661 = vunpack.c.h.bf16 %v1655
    %v1662 = vunpack.c.l.bf16 %v1656
    %v1663 = vunpack.c.h.bf16 %v1656
    %v1664 = vunpack.c.l.bf16 %v1657
    %v1665 = vunpack.c.h.bf16 %v1657
    %1666 = vmatprep.subr.bf16.mxu0 %v1016
    %1667 = vmatpush1.bf16.msra.mxu0 %v1015
    %1668 = vmatprep.subr.bf16.mxu0 %v1012
    %1669 = vmatpush1.bf16.msra.mxu0 %v1011
    %1670 = vmatprep.subr.bf16.mxu0 %v1008
    %1671 = vmatpush1.bf16.msra.mxu0 %v1007
    %1672 = vmatprep.subr.bf16.mxu0 %v1004
    %1673 = vmatpush1.bf16.msra.mxu0 %v1003
    %1674 = vmatprep.subr.bf16.mxu0 %v1000
    %1675 = vmatpush1.bf16.msra.mxu0 %v999
    %1676 = vmatprep.subr.bf16.mxu0 %v996
    %1677 = vmatpush1.bf16.msra.mxu0 %v995
    %1678 = vmatprep.subr.bf16.mxu0 %v992
    %1679 = vmatpush1.bf16.msra.mxu0 %v991
    %1680 = vmatprep.subr.bf16.mxu0 %v988
    %1681 = vmatpush1.bf16.msra.mxu0 %v987
    %1682 = vmatprep.subr.bf16.mxu0 0
    %1683 = vmatpush2.bf16.msra.mxu0 0
    %1684 = vmatprep.subr.bf16.mxu0 0
    %1685 = vmatpush2.bf16.msra.mxu0 0
    %1686 = vmatprep.subr.bf16.mxu0 0
    %1687 = vmatpush2.bf16.msra.mxu0 0
    %1688 = vmatprep.subr.bf16.mxu0 0
    %1689 = vmatpush2.bf16.msra.mxu0 0
    %1690 = vmatprep.subr.bf16.mxu0 0
    %1691 = vmatpush2.bf16.msra.mxu0 0
    %1692 = vmatprep.subr.bf16.mxu0 0
    %1693 = vmatpush2.bf16.msra.mxu0 0
    %1694 = vmatprep.subr.bf16.mxu0 0
    %1695 = vmatpush2.bf16.msra.mxu0 0
    %1696 = vmatprep.subr.bf16.mxu0 0
    %1697 = vmatpush2.bf16.msra.mxu0 0
    %1698 = vmatprep.mubr.bf16.mxu0 0
    %1699 = vmatmul.mubr.bf16.gmra.mxu0 %v1642
    %v1700 = vpop.f32.mrf.mxu0
    %v1701 = vadd.f32 0.0, %v1700
    %v1702 = vpop.f32.mrf.mxu0
    %v1703 = vadd.f32 0.0, %v1702
    %v1704 = vpop.f32.mrf.mxu0
    %v1705 = vadd.f32 0.0, %v1704
    %v1706 = vpop.f32.mrf.mxu0
    %v1707 = vadd.f32 0.0, %v1706
    %1708 = vdwg.mxu0
    %1709 = vmatprep.subr.bf16.mxu0 %v1018
    %1710 = vmatpush1.bf16.msra.mxu0 %v1017
    %1711 = vmatprep.subr.bf16.mxu0 %v1014
    %1712 = vmatpush1.bf16.msra.mxu0 %v1013
    %1713 = vmatprep.subr.bf16.mxu0 %v1010
    %1714 = vmatpush1.bf16.msra.mxu0 %v1009
    %1715 = vmatprep.subr.bf16.mxu0 %v1006
    %1716 = vmatpush1.bf16.msra.mxu0 %v1005
    %1717 = vmatprep.subr.bf16.mxu0 %v1002
    %1718 = vmatpush1.bf16.msra.mxu0 %v1001
    %1719 = vmatprep.subr.bf16.mxu0 %v998
    %1720 = vmatpush1.bf16.msra.mxu0 %v997
    %1721 = vmatprep.subr.bf16.mxu0 %v994
    %1722 = vmatpush1.bf16.msra.mxu0 %v993
    %1723 = vmatprep.subr.bf16.mxu0 %v990
    %1724 = vmatpush1.bf16.msra.mxu0 %v989
    %1725 = vmatprep.subr.bf16.mxu0 0
    %1726 = vmatpush2.bf16.msra.mxu0 0
    %1727 = vmatprep.subr.bf16.mxu0 0
    %1728 = vmatpush2.bf16.msra.mxu0 0
    %1729 = vmatprep.subr.bf16.mxu0 0
    %1730 = vmatpush2.bf16.msra.mxu0 0
    %1731 = vmatprep.subr.bf16.mxu0 0
    %1732 = vmatpush2.bf16.msra.mxu0 0
    %1733 = vmatprep.subr.bf16.mxu0 0
    %1734 = vmatpush2.bf16.msra.mxu0 0
    %1735 = vmatprep.subr.bf16.mxu0 0
    %1736 = vmatpush2.bf16.msra.mxu0 0
    %1737 = vmatprep.subr.bf16.mxu0 0
    %1738 = vmatpush2.bf16.msra.mxu0 0
    %1739 = vmatprep.subr.bf16.mxu0 0
    %1740 = vmatpush2.bf16.msra.mxu0 0
    %1741 = vmatprep.mubr.bf16.mxu0 0
    %1742 = vmatmul.mubr.bf16.gmra.mxu0 %v1642
    %v1743 = vpop.f32.mrf.mxu0
    %v1744 = vadd.f32 0.0, %v1743
    %v1745 = vpop.f32.mrf.mxu0
    %v1746 = vadd.f32 0.0, %v1745
    %v1747 = vpop.f32.mrf.mxu0
    %v1748 = vadd.f32 0.0, %v1747
    %v1749 = vpop.f32.mrf.mxu0
    %v1750 = vadd.f32 0.0, %v1749
    %1751 = vdwg.mxu0
    %v1752 = vadd.f32 %v1658, %v1701
    %v1753 = vadd.f32 %v1659, %v1703
    %v1754 = vadd.f32 %v1660, %v1744
    %v1755 = vadd.f32 %v1661, %v1746
    %v1756 = vadd.f32 %v1662, %v1705
    %v1757 = vadd.f32 %v1663, %v1707
    %v1758 = vadd.f32 %v1664, %v1748
    %v1759 = vadd.f32 %v1665, %v1750
    %v1760 = vmul.f32 %v1752, 0.5
    %v1761 = vmul.f32 %v1756, 0.5
    %v1762 = vtanh.pop %v1760
    %v1763 = vtanh.pop %v1761
    %v1764 = vadd.f32 %v1762, 1.0
    %v1765 = vadd.f32 %v1763, 1.0
    %v1766 = vmul.f32 %v1764, 0.5
    %v1767 = vmul.f32 %v1765, 0.5
    %v1768 = vmul.f32 %v1753, 0.5
    %v1769 = vmul.f32 %v1757, 0.5
    %v1770 = vtanh.pop %v1768
    %v1771 = vtanh.pop %v1769
    %v1772 = vadd.f32 %v1770, 1.0
    %v1773 = vadd.f32 %v1771, 1.0
    %v1774 = vmul.f32 %v1772, 0.5
    %v1775 = vmul.f32 %v1773, 0.5
    %v1776 = vtanh.pop %v1754
    %v1777 = vtanh.pop %v1758
    %v1778 = vmul.f32 %v1755, 0.5
    %v1779 = vmul.f32 %v1759, 0.5
    %v1780 = vtanh.pop %v1778
    %v1781 = vtanh.pop %v1779
    %v1782 = vadd.f32 %v1780, 1.0
    %v1783 = vadd.f32 %v1781, 1.0
    %v1784 = vmul.f32 %v1782, 0.5
    %v1785 = vmul.f32 %v1783, 0.5
    %v1786 = vmul.f32 %v1774, %v1636
    %v1787 = vmul.f32 %v1775, %v1637
    %v1788 = vmul.f32 %v1766, %v1776
    %v1789 = vmul.f32 %v1767, %v1777
    %v1790 = vadd.f32 %v1786, %v1788
    %v1791 = vadd.f32 %v1787, %v1789
    %v1792 = vtanh.pop %v1790
    %v1793 = vtanh.pop %v1791
    %v1794 = vmul.f32 %v1784, %v1792
    %v1795 = vmul.f32 %v1785, %v1793
    %v1796 = vpack.c.bf16 %v1795, %v1794
    %v1798 = vunpack.c.l.b16 %v1796
    %v1799 = vunpack.c.h.b16 %v1796
    %v1800 = vpack.c.b16 %v1798, %v1798
    %v1801 = vpack.c.b16 %v1799, %v1799
    %s1804 = scalar_lea.vmem [#allocation3], 32
    %1805 = vst [vmem:[%s1804] sm:$0xf] %v1800
    %1806 = vst [vmem:[%s1804 + $0x4] sm:$0xf] %v1801
    %s1807 = scalar_lea.vmem [#allocation2], 160
    %v1808 = vld [vmem:[%s1807] sm:$0xff]
    %v1809 = vld [vmem:[%s1807 + $0x8] sm:$0xff]
    %v1810 = vld [vmem:[%s1807 + $0x10] sm:$0xff]
    %v1811 = vld [vmem:[%s1807 + $0x18] sm:$0xff]
    %v1812 = vunpack.c.l.bf16 %v1808
    %v1813 = vunpack.c.h.bf16 %v1808
    %v1814 = vunpack.c.l.bf16 %v1809
    %v1815 = vunpack.c.h.bf16 %v1809
    %v1816 = vunpack.c.l.bf16 %v1810
    %v1817 = vunpack.c.h.bf16 %v1810
    %v1818 = vunpack.c.l.bf16 %v1811
    %v1819 = vunpack.c.h.bf16 %v1811
    %1820 = vmatprep.subr.bf16.mxu0 %v1016
    %1821 = vmatpush1.bf16.msra.mxu0 %v1015
    %1822 = vmatprep.subr.bf16.mxu0 %v1012
    %1823 = vmatpush1.bf16.msra.mxu0 %v1011
    %1824 = vmatprep.subr.bf16.mxu0 %v1008
    %1825 = vmatpush1.bf16.msra.mxu0 %v1007
    %1826 = vmatprep.subr.bf16.mxu0 %v1004
    %1827 = vmatpush1.bf16.msra.mxu0 %v1003
    %1828 = vmatprep.subr.bf16.mxu0 %v1000
    %1829 = vmatpush1.bf16.msra.mxu0 %v999
    %1830 = vmatprep.subr.bf16.mxu0 %v996
    %1831 = vmatpush1.bf16.msra.mxu0 %v995
    %1832 = vmatprep.subr.bf16.mxu0 %v992
    %1833 = vmatpush1.bf16.msra.mxu0 %v991
    %1834 = vmatprep.subr.bf16.mxu0 %v988
    %1835 = vmatpush1.bf16.msra.mxu0 %v987
    %1836 = vmatprep.subr.bf16.mxu0 0
    %1837 = vmatpush2.bf16.msra.mxu0 0
    %1838 = vmatprep.subr.bf16.mxu0 0
    %1839 = vmatpush2.bf16.msra.mxu0 0
    %1840 = vmatprep.subr.bf16.mxu0 0
    %1841 = vmatpush2.bf16.msra.mxu0 0
    %1842 = vmatprep.subr.bf16.mxu0 0
    %1843 = vmatpush2.bf16.msra.mxu0 0
    %1844 = vmatprep.subr.bf16.mxu0 0
    %1845 = vmatpush2.bf16.msra.mxu0 0
    %1846 = vmatprep.subr.bf16.mxu0 0
    %1847 = vmatpush2.bf16.msra.mxu0 0
    %1848 = vmatprep.subr.bf16.mxu0 0
    %1849 = vmatpush2.bf16.msra.mxu0 0
    %1850 = vmatprep.subr.bf16.mxu0 0
    %1851 = vmatpush2.bf16.msra.mxu0 0
    %1852 = vmatprep.mubr.bf16.mxu0 0
    %1853 = vmatmul.mubr.bf16.gmra.mxu0 %v1796
    %v1854 = vpop.f32.mrf.mxu0
    %v1855 = vadd.f32 0.0, %v1854
    %v1856 = vpop.f32.mrf.mxu0
    %v1857 = vadd.f32 0.0, %v1856
    %v1858 = vpop.f32.mrf.mxu0
    %v1859 = vadd.f32 0.0, %v1858
    %v1860 = vpop.f32.mrf.mxu0
    %v1861 = vadd.f32 0.0, %v1860
    %1862 = vdwg.mxu0
    %1863 = vmatprep.subr.bf16.mxu0 %v1018
    %1864 = vmatpush1.bf16.msra.mxu0 %v1017
    %1865 = vmatprep.subr.bf16.mxu0 %v1014
    %1866 = vmatpush1.bf16.msra.mxu0 %v1013
    %1867 = vmatprep.subr.bf16.mxu0 %v1010
    %1868 = vmatpush1.bf16.msra.mxu0 %v1009
    %1869 = vmatprep.subr.bf16.mxu0 %v1006
    %1870 = vmatpush1.bf16.msra.mxu0 %v1005
    %1871 = vmatprep.subr.bf16.mxu0 %v1002
    %1872 = vmatpush1.bf16.msra.mxu0 %v1001
    %1873 = vmatprep.subr.bf16.mxu0 %v998
    %1874 = vmatpush1.bf16.msra.mxu0 %v997
    %1875 = vmatprep.subr.bf16.mxu0 %v994
    %1876 = vmatpush1.bf16.msra.mxu0 %v993
    %1877 = vmatprep.subr.bf16.mxu0 %v990
    %1878 = vmatpush1.bf16.msra.mxu0 %v989
    %1879 = vmatprep.subr.bf16.mxu0 0
    %1880 = vmatpush2.bf16.msra.mxu0 0
    %1881 = vmatprep.subr.bf16.mxu0 0
    %1882 = vmatpush2.bf16.msra.mxu0 0
    %1883 = vmatprep.subr.bf16.mxu0 0
    %1884 = vmatpush2.bf16.msra.mxu0 0
    %1885 = vmatprep.subr.bf16.mxu0 0
    %1886 = vmatpush2.bf16.msra.mxu0 0
    %1887 = vmatprep.subr.bf16.mxu0 0
    %1888 = vmatpush2.bf16.msra.mxu0 0
    %1889 = vmatprep.subr.bf16.mxu0 0
    %1890 = vmatpush2.bf16.msra.mxu0 0
    %1891 = vmatprep.subr.bf16.mxu0 0
    %1892 = vmatpush2.bf16.msra.mxu0 0
    %1893 = vmatprep.subr.bf16.mxu0 0
    %1894 = vmatpush2.bf16.msra.mxu0 0
    %1895 = vmatprep.mubr.bf16.mxu0 0
    %1896 = vmatmul.mubr.bf16.gmra.mxu0 %v1796
    %v1897 = vpop.f32.mrf.mxu0
    %v1898 = vadd.f32 0.0, %v1897
    %v1899 = vpop.f32.mrf.mxu0
    %v1900 = vadd.f32 0.0, %v1899
    %v1901 = vpop.f32.mrf.mxu0
    %v1902 = vadd.f32 0.0, %v1901
    %v1903 = vpop.f32.mrf.mxu0
    %v1904 = vadd.f32 0.0, %v1903
    %1905 = vdwg.mxu0
    %v1906 = vadd.f32 %v1812, %v1855
    %v1907 = vadd.f32 %v1813, %v1857
    %v1908 = vadd.f32 %v1814, %v1898
    %v1909 = vadd.f32 %v1815, %v1900
    %v1910 = vadd.f32 %v1816, %v1859
    %v1911 = vadd.f32 %v1817, %v1861
    %v1912 = vadd.f32 %v1818, %v1902
    %v1913 = vadd.f32 %v1819, %v1904
    %v1914 = vmul.f32 %v1906, 0.5
    %v1915 = vmul.f32 %v1910, 0.5
    %v1916 = vtanh.pop %v1914
    %v1917 = vtanh.pop %v1915
    %v1918 = vadd.f32 %v1916, 1.0
    %v1919 = vadd.f32 %v1917, 1.0
    %v1920 = vmul.f32 %v1918, 0.5
    %v1921 = vmul.f32 %v1919, 0.5
    %v1922 = vmul.f32 %v1907, 0.5
    %v1923 = vmul.f32 %v1911, 0.5
    %v1924 = vtanh.pop %v1922
    %v1925 = vtanh.pop %v1923
    %v1926 = vadd.f32 %v1924, 1.0
    %v1927 = vadd.f32 %v1925, 1.0
    %v1928 = vmul.f32 %v1926, 0.5
    %v1929 = vmul.f32 %v1927, 0.5
    %v1930 = vtanh.pop %v1908
    %v1931 = vtanh.pop %v1912
    %v1932 = vmul.f32 %v1909, 0.5
    %v1933 = vmul.f32 %v1913, 0.5
    %v1934 = vtanh.pop %v1932
    %v1935 = vtanh.pop %v1933
    %v1936 = vadd.f32 %v1934, 1.0
    %v1937 = vadd.f32 %v1935, 1.0
    %v1938 = vmul.f32 %v1936, 0.5
    %v1939 = vmul.f32 %v1937, 0.5
    %v1940 = vmul.f32 %v1928, %v1790
    %v1941 = vmul.f32 %v1929, %v1791
    %v1942 = vmul.f32 %v1920, %v1930
    %v1943 = vmul.f32 %v1921, %v1931
    %v1944 = vadd.f32 %v1940, %v1942
    %v1945 = vadd.f32 %v1941, %v1943
    %v1946 = vtanh.pop %v1944
    %v1947 = vtanh.pop %v1945
    %v1948 = vmul.f32 %v1938, %v1946
    %v1949 = vmul.f32 %v1939, %v1947
    %v1950 = vpack.c.bf16 %v1949, %v1948
    %v1952 = vunpack.c.l.b16 %v1950
    %v1953 = vunpack.c.h.b16 %v1950
    %v1954 = vpack.c.b16 %v1952, %v1952
    %v1955 = vpack.c.b16 %v1953, %v1953
    %s1958 = scalar_lea.vmem [#allocation3], 40
    %1959 = vst [vmem:[%s1958] sm:$0xf] %v1954
    %1960 = vst [vmem:[%s1958 + $0x4] sm:$0xf] %v1955
    %s1961 = scalar_lea.vmem [#allocation2], 192
    %v1962 = vld [vmem:[%s1961] sm:$0xff]
    %v1963 = vld [vmem:[%s1961 + $0x8] sm:$0xff]
    %v1964 = vld [vmem:[%s1961 + $0x10] sm:$0xff]
    %v1965 = vld [vmem:[%s1961 + $0x18] sm:$0xff]
    %v1966 = vunpack.c.l.bf16 %v1962
    %v1967 = vunpack.c.h.bf16 %v1962
    %v1968 = vunpack.c.l.bf16 %v1963
    %v1969 = vunpack.c.h.bf16 %v1963
    %v1970 = vunpack.c.l.bf16 %v1964
    %v1971 = vunpack.c.h.bf16 %v1964
    %v1972 = vunpack.c.l.bf16 %v1965
    %v1973 = vunpack.c.h.bf16 %v1965
    %1974 = vmatprep.subr.bf16.mxu0 %v1016
    %1975 = vmatpush1.bf16.msra.mxu0 %v1015
    %1976 = vmatprep.subr.bf16.mxu0 %v1012
    %1977 = vmatpush1.bf16.msra.mxu0 %v1011
    %1978 = vmatprep.subr.bf16.mxu0 %v1008
    %1979 = vmatpush1.bf16.msra.mxu0 %v1007
    %1980 = vmatprep.subr.bf16.mxu0 %v1004
    %1981 = vmatpush1.bf16.msra.mxu0 %v1003
    %1982 = vmatprep.subr.bf16.mxu0 %v1000
    %1983 = vmatpush1.bf16.msra.mxu0 %v999
    %1984 = vmatprep.subr.bf16.mxu0 %v996
    %1985 = vmatpush1.bf16.msra.mxu0 %v995
    %1986 = vmatprep.subr.bf16.mxu0 %v992
    %1987 = vmatpush1.bf16.msra.mxu0 %v991
    %1988 = vmatprep.subr.bf16.mxu0 %v988
    %1989 = vmatpush1.bf16.msra.mxu0 %v987
    %1990 = vmatprep.subr.bf16.mxu0 0
    %1991 = vmatpush2.bf16.msra.mxu0 0
    %1992 = vmatprep.subr.bf16.mxu0 0
    %1993 = vmatpush2.bf16.msra.mxu0 0
    %1994 = vmatprep.subr.bf16.mxu0 0
    %1995 = vmatpush2.bf16.msra.mxu0 0
    %1996 = vmatprep.subr.bf16.mxu0 0
    %1997 = vmatpush2.bf16.msra.mxu0 0
    %1998 = vmatprep.subr.bf16.mxu0 0
    %1999 = vmatpush2.bf16.msra.mxu0 0
    %2000 = vmatprep.subr.bf16.mxu0 0
    %2001 = vmatpush2.bf16.msra.mxu0 0
    %2002 = vmatprep.subr.bf16.mxu0 0
    %2003 = vmatpush2.bf16.msra.mxu0 0
    %2004 = vmatprep.subr.bf16.mxu0 0
    %2005 = vmatpush2.bf16.msra.mxu0 0
    %2006 = vmatprep.mubr.bf16.mxu0 0
    %2007 = vmatmul.mubr.bf16.gmra.mxu0 %v1950
    %v2008 = vpop.f32.mrf.mxu0
    %v2009 = vadd.f32 0.0, %v2008
    %v2010 = vpop.f32.mrf.mxu0
    %v2011 = vadd.f32 0.0, %v2010
    %v2012 = vpop.f32.mrf.mxu0
    %v2013 = vadd.f32 0.0, %v2012
    %v2014 = vpop.f32.mrf.mxu0
    %v2015 = vadd.f32 0.0, %v2014
    %2016 = vdwg.mxu0
    %2017 = vmatprep.subr.bf16.mxu0 %v1018
    %2018 = vmatpush1.bf16.msra.mxu0 %v1017
    %2019 = vmatprep.subr.bf16.mxu0 %v1014
    %2020 = vmatpush1.bf16.msra.mxu0 %v1013
    %2021 = vmatprep.subr.bf16.mxu0 %v1010
    %2022 = vmatpush1.bf16.msra.mxu0 %v1009
    %2023 = vmatprep.subr.bf16.mxu0 %v1006
    %2024 = vmatpush1.bf16.msra.mxu0 %v1005
    %2025 = vmatprep.subr.bf16.mxu0 %v1002
    %2026 = vmatpush1.bf16.msra.mxu0 %v1001
    %2027 = vmatprep.subr.bf16.mxu0 %v998
    %2028 = vmatpush1.bf16.msra.mxu0 %v997
    %2029 = vmatprep.subr.bf16.mxu0 %v994
    %2030 = vmatpush1.bf16.msra.mxu0 %v993
    %2031 = vmatprep.subr.bf16.mxu0 %v990
    %2032 = vmatpush1.bf16.msra.mxu0 %v989
    %2033 = vmatprep.subr.bf16.mxu0 0
    %2034 = vmatpush2.bf16.msra.mxu0 0
    %2035 = vmatprep.subr.bf16.mxu0 0
    %2036 = vmatpush2.bf16.msra.mxu0 0
    %2037 = vmatprep.subr.bf16.mxu0 0
    %2038 = vmatpush2.bf16.msra.mxu0 0
    %2039 = vmatprep.subr.bf16.mxu0 0
    %2040 = vmatpush2.bf16.msra.mxu0 0
    %2041 = vmatprep.subr.bf16.mxu0 0
    %2042 = vmatpush2.bf16.msra.mxu0 0
    %2043 = vmatprep.subr.bf16.mxu0 0
    %2044 = vmatpush2.bf16.msra.mxu0 0
    %2045 = vmatprep.subr.bf16.mxu0 0
    %2046 = vmatpush2.bf16.msra.mxu0 0
    %2047 = vmatprep.subr.bf16.mxu0 0
    %2048 = vmatpush2.bf16.msra.mxu0 0
    %2049 = vmatprep.mubr.bf16.mxu0 0
    %2050 = vmatmul.mubr.bf16.gmra.mxu0 %v1950
    %v2051 = vpop.f32.mrf.mxu0
    %v2052 = vadd.f32 0.0, %v2051
    %v2053 = vpop.f32.mrf.mxu0
    %v2054 = vadd.f32 0.0, %v2053
    %v2055 = vpop.f32.mrf.mxu0
    %v2056 = vadd.f32 0.0, %v2055
    %v2057 = vpop.f32.mrf.mxu0
    %v2058 = vadd.f32 0.0, %v2057
    %2059 = vdwg.mxu0
    %v2060 = vadd.f32 %v1966, %v2009
    %v2061 = vadd.f32 %v1967, %v2011
    %v2062 = vadd.f32 %v1968, %v2052
    %v2063 = vadd.f32 %v1969, %v2054
    %v2064 = vadd.f32 %v1970, %v2013
    %v2065 = vadd.f32 %v1971, %v2015
    %v2066 = vadd.f32 %v1972, %v2056
    %v2067 = vadd.f32 %v1973, %v2058
    %v2068 = vmul.f32 %v2060, 0.5
    %v2069 = vmul.f32 %v2064, 0.5
    %v2070 = vtanh.pop %v2068
    %v2071 = vtanh.pop %v2069
    %v2072 = vadd.f32 %v2070, 1.0
    %v2073 = vadd.f32 %v2071, 1.0
    %v2074 = vmul.f32 %v2072, 0.5
    %v2075 = vmul.f32 %v2073, 0.5
    %v2076 = vmul.f32 %v2061, 0.5
    %v2077 = vmul.f32 %v2065, 0.5
    %v2078 = vtanh.pop %v2076
    %v2079 = vtanh.pop %v2077
    %v2080 = vadd.f32 %v2078, 1.0
    %v2081 = vadd.f32 %v2079, 1.0
    %v2082 = vmul.f32 %v2080, 0.5
    %v2083 = vmul.f32 %v2081, 0.5
    %v2084 = vtanh.pop %v2062
    %v2085 = vtanh.pop %v2066
    %v2086 = vmul.f32 %v2063, 0.5
    %v2087 = vmul.f32 %v2067, 0.5
    %v2088 = vtanh.pop %v2086
    %v2089 = vtanh.pop %v2087
    %v2090 = vadd.f32 %v2088, 1.0
    %v2091 = vadd.f32 %v2089, 1.0
    %v2092 = vmul.f32 %v2090, 0.5
    %v2093 = vmul.f32 %v2091, 0.5
    %v2094 = vmul.f32 %v2082, %v1944
    %v2095 = vmul.f32 %v2083, %v1945
    %v2096 = vmul.f32 %v2074, %v2084
    %v2097 = vmul.f32 %v2075, %v2085
    %v2098 = vadd.f32 %v2094, %v2096
    %v2099 = vadd.f32 %v2095, %v2097
    %v2100 = vtanh.pop %v2098
    %v2101 = vtanh.pop %v2099
    %v2102 = vmul.f32 %v2092, %v2100
    %v2103 = vmul.f32 %v2093, %v2101
    %v2104 = vpack.c.bf16 %v2103, %v2102
    %v2106 = vunpack.c.l.b16 %v2104
    %v2107 = vunpack.c.h.b16 %v2104
    %v2108 = vpack.c.b16 %v2106, %v2106
    %v2109 = vpack.c.b16 %v2107, %v2107
    %s2112 = scalar_lea.vmem [#allocation3], 48
    %2113 = vst [vmem:[%s2112] sm:$0xf] %v2108
    %2114 = vst [vmem:[%s2112 + $0x4] sm:$0xf] %v2109
    %s2115 = scalar_lea.vmem [#allocation2], 224
    %v2116 = vld [vmem:[%s2115] sm:$0xff]
    %v2117 = vld [vmem:[%s2115 + $0x8] sm:$0xff]
    %v2118 = vld [vmem:[%s2115 + $0x10] sm:$0xff]
    %v2119 = vld [vmem:[%s2115 + $0x18] sm:$0xff]
    %v2120 = vunpack.c.l.bf16 %v2116
    %v2121 = vunpack.c.h.bf16 %v2116
    %v2122 = vunpack.c.l.bf16 %v2117
    %v2123 = vunpack.c.h.bf16 %v2117
    %v2124 = vunpack.c.l.bf16 %v2118
    %v2125 = vunpack.c.h.bf16 %v2118
    %v2126 = vunpack.c.l.bf16 %v2119
    %v2127 = vunpack.c.h.bf16 %v2119
    %2128 = vmatprep.subr.bf16.mxu0 %v1016
    %2129 = vmatpush1.bf16.msra.mxu0 %v1015
    %2130 = vmatprep.subr.bf16.mxu0 %v1012
    %2131 = vmatpush1.bf16.msra.mxu0 %v1011
    %2132 = vmatprep.subr.bf16.mxu0 %v1008
    %2133 = vmatpush1.bf16.msra.mxu0 %v1007
    %2134 = vmatprep.subr.bf16.mxu0 %v1004
    %2135 = vmatpush1.bf16.msra.mxu0 %v1003
    %2136 = vmatprep.subr.bf16.mxu0 %v1000
    %2137 = vmatpush1.bf16.msra.mxu0 %v999
    %2138 = vmatprep.subr.bf16.mxu0 %v996
    %2139 = vmatpush1.bf16.msra.mxu0 %v995
    %2140 = vmatprep.subr.bf16.mxu0 %v992
    %2141 = vmatpush1.bf16.msra.mxu0 %v991
    %2142 = vmatprep.subr.bf16.mxu0 %v988
    %2143 = vmatpush1.bf16.msra.mxu0 %v987
    %2144 = vmatprep.subr.bf16.mxu0 0
    %2145 = vmatpush2.bf16.msra.mxu0 0
    %2146 = vmatprep.subr.bf16.mxu0 0
    %2147 = vmatpush2.bf16.msra.mxu0 0
    %2148 = vmatprep.subr.bf16.mxu0 0
    %2149 = vmatpush2.bf16.msra.mxu0 0
    %2150 = vmatprep.subr.bf16.mxu0 0
    %2151 = vmatpush2.bf16.msra.mxu0 0
    %2152 = vmatprep.subr.bf16.mxu0 0
    %2153 = vmatpush2.bf16.msra.mxu0 0
    %2154 = vmatprep.subr.bf16.mxu0 0
    %2155 = vmatpush2.bf16.msra.mxu0 0
    %2156 = vmatprep.subr.bf16.mxu0 0
    %2157 = vmatpush2.bf16.msra.mxu0 0
    %2158 = vmatprep.subr.bf16.mxu0 0
    %2159 = vmatpush2.bf16.msra.mxu0 0
    %2160 = vmatprep.mubr.bf16.mxu0 0
    %2161 = vmatmul.mubr.bf16.gmra.mxu0 %v2104
    %v2162 = vpop.f32.mrf.mxu0
    %v2163 = vadd.f32 0.0, %v2162
    %v2164 = vpop.f32.mrf.mxu0
    %v2165 = vadd.f32 0.0, %v2164
    %v2166 = vpop.f32.mrf.mxu0
    %v2167 = vadd.f32 0.0, %v2166
    %v2168 = vpop.f32.mrf.mxu0
    %v2169 = vadd.f32 0.0, %v2168
    %2170 = vdwg.mxu0
    %2171 = vmatprep.subr.bf16.mxu0 %v1018
    %2172 = vmatpush1.bf16.msra.mxu0 %v1017
    %2173 = vmatprep.subr.bf16.mxu0 %v1014
    %2174 = vmatpush1.bf16.msra.mxu0 %v1013
    %2175 = vmatprep.subr.bf16.mxu0 %v1010
    %2176 = vmatpush1.bf16.msra.mxu0 %v1009
    %2177 = vmatprep.subr.bf16.mxu0 %v1006
    %2178 = vmatpush1.bf16.msra.mxu0 %v1005
    %2179 = vmatprep.subr.bf16.mxu0 %v1002
    %2180 = vmatpush1.bf16.msra.mxu0 %v1001
    %2181 = vmatprep.subr.bf16.mxu0 %v998
    %2182 = vmatpush1.bf16.msra.mxu0 %v997
    %2183 = vmatprep.subr.bf16.mxu0 %v994
    %2184 = vmatpush1.bf16.msra.mxu0 %v993
    %2185 = vmatprep.subr.bf16.mxu0 %v990
    %2186 = vmatpush1.bf16.msra.mxu0 %v989
    %2187 = vmatprep.subr.bf16.mxu0 0
    %2188 = vmatpush2.bf16.msra.mxu0 0
    %2189 = vmatprep.subr.bf16.mxu0 0
    %2190 = vmatpush2.bf16.msra.mxu0 0
    %2191 = vmatprep.subr.bf16.mxu0 0
    %2192 = vmatpush2.bf16.msra.mxu0 0
    %2193 = vmatprep.subr.bf16.mxu0 0
    %2194 = vmatpush2.bf16.msra.mxu0 0
    %2195 = vmatprep.subr.bf16.mxu0 0
    %2196 = vmatpush2.bf16.msra.mxu0 0
    %2197 = vmatprep.subr.bf16.mxu0 0
    %2198 = vmatpush2.bf16.msra.mxu0 0
    %2199 = vmatprep.subr.bf16.mxu0 0
    %2200 = vmatpush2.bf16.msra.mxu0 0
    %2201 = vmatprep.subr.bf16.mxu0 0
    %2202 = vmatpush2.bf16.msra.mxu0 0
    %2203 = vmatprep.mubr.bf16.mxu0 0
    %2204 = vmatmul.mubr.bf16.gmra.mxu0 %v2104
    %v2205 = vpop.f32.mrf.mxu0
    %v2206 = vadd.f32 0.0, %v2205
    %v2207 = vpop.f32.mrf.mxu0
    %v2208 = vadd.f32 0.0, %v2207
    %v2209 = vpop.f32.mrf.mxu0
    %v2210 = vadd.f32 0.0, %v2209
    %v2211 = vpop.f32.mrf.mxu0
    %v2212 = vadd.f32 0.0, %v2211
    %2213 = vdwg.mxu0
    %v2214 = vadd.f32 %v2120, %v2163
    %v2215 = vadd.f32 %v2121, %v2165
    %v2216 = vadd.f32 %v2122, %v2206
    %v2217 = vadd.f32 %v2123, %v2208
    %v2218 = vadd.f32 %v2124, %v2167
    %v2219 = vadd.f32 %v2125, %v2169
    %v2220 = vadd.f32 %v2126, %v2210
    %v2221 = vadd.f32 %v2127, %v2212
    %v2222 = vmul.f32 %v2214, 0.5
    %v2223 = vmul.f32 %v2218, 0.5
    %v2224 = vtanh.pop %v2222
    %v2225 = vtanh.pop %v2223
    %v2226 = vadd.f32 %v2224, 1.0
    %v2227 = vadd.f32 %v2225, 1.0
    %v2228 = vmul.f32 %v2226, 0.5
    %v2229 = vmul.f32 %v2227, 0.5
    %v2230 = vmul.f32 %v2215, 0.5
    %v2231 = vmul.f32 %v2219, 0.5
    %v2232 = vtanh.pop %v2230
    %v2233 = vtanh.pop %v2231
    %v2234 = vadd.f32 %v2232, 1.0
    %v2235 = vadd.f32 %v2233, 1.0
    %v2236 = vmul.f32 %v2234, 0.5
    %v2237 = vmul.f32 %v2235, 0.5
    %v2238 = vtanh.pop %v2216
    %v2239 = vtanh.pop %v2220
    %v2240 = vmul.f32 %v2217, 0.5
    %v2241 = vmul.f32 %v2221, 0.5
    %v2242 = vtanh.pop %v2240
    %v2243 = vtanh.pop %v2241
    %v2244 = vadd.f32 %v2242, 1.0
    %v2245 = vadd.f32 %v2243, 1.0
    %v2246 = vmul.f32 %v2244, 0.5
    %v2247 = vmul.f32 %v2245, 0.5
    %v2248 = vmul.f32 %v2236, %v2098
    %v2249 = vmul.f32 %v2237, %v2099
    %v2250 = vmul.f32 %v2228, %v2238
    %v2251 = vmul.f32 %v2229, %v2239
    %v2252 = vadd.f32 %v2248, %v2250
    %v2253 = vadd.f32 %v2249, %v2251
    %v2254 = vtanh.pop %v2252
    %v2255 = vtanh.pop %v2253
    %v2256 = vmul.f32 %v2246, %v2254
    %v2257 = vmul.f32 %v2247, %v2255
    %v2258 = vpack.c.bf16 %v2257, %v2256
    %v2260 = vunpack.c.l.b16 %v2258
    %v2261 = vunpack.c.h.b16 %v2258
    %v2262 = vpack.c.b16 %v2260, %v2260
    %v2263 = vpack.c.b16 %v2261, %v2261
    %s2266 = scalar_lea.vmem [#allocation3], 56
    %2267 = vst [vmem:[%s2266] sm:$0xf] %v2262
    %2268 = vst [vmem:[%s2266 + $0x4] sm:$0xf] %v2263
    %2269 = vst [vmem:[#allocation16] sm:$0xff] %v2256
    %2270 = vst [vmem:[#allocation16 + $0x8] sm:$0xff] %v2257
    %v2271 = vld [vmem:[#allocation3] sm:$0xf]
    %v2272 = vld [vmem:[#allocation3 + $0x4] sm:$0xf]
    %v2273 = vld [vmem:[#allocation3 + $0x8] sm:$0xf]
    %v2274 = vld [vmem:[#allocation3 + $0xc] sm:$0xf]
    %v2275 = vld [vmem:[#allocation3 + $0x10] sm:$0xf]
    %v2276 = vld [vmem:[#allocation3 + $0x14] sm:$0xf]
    %v2277 = vld [vmem:[#allocation3 + $0x18] sm:$0xf]
    %v2278 = vld [vmem:[#allocation3 + $0x1c] sm:$0xf]
    %v2279 = vld [vmem:[#allocation3 + $0x20] sm:$0xf]
    %v2280 = vld [vmem:[#allocation3 + $0x24] sm:$0xf]
    %v2281 = vld [vmem:[#allocation3 + $0x28] sm:$0xf]
    %v2282 = vld [vmem:[#allocation3 + $0x2c] sm:$0xf]
    %v2283 = vld [vmem:[#allocation3 + $0x30] sm:$0xf]
    %v2284 = vld [vmem:[#allocation3 + $0x34] sm:$0xf]
    %v2285 = vld [vmem:[#allocation3 + $0x38] sm:$0xf]
    %v2286 = vld [vmem:[#allocation3 + $0x3c] sm:$0xf]
    %v2287 = vld [vmem:[#allocation10] sm:$0xff]
    %v2288 = vld [vmem:[#allocation10 + $0x8] sm:$0xff]
    %v2289 = vld [vmem:[#allocation10 + $0x10] sm:$0xff]
    %v2290 = vld [vmem:[#allocation10 + $0x18] sm:$0xff]
    %v2291 = vld [vmem:[#allocation10 + $0x20] sm:$0xff]
    %v2292 = vld [vmem:[#allocation10 + $0x28] sm:$0xff]
    %v2293 = vld [vmem:[#allocation10 + $0x30] sm:$0xff]
    %v2294 = vld [vmem:[#allocation10 + $0x38] sm:$0xff]
    %v2295 = vld [vmem:[#allocation10 + $0x40] sm:$0xff]
    %v2296 = vld [vmem:[#allocation10 + $0x48] sm:$0xff]
    %v2297 = vld [vmem:[#allocation10 + $0x50] sm:$0xff]
    %v2298 = vld [vmem:[#allocation10 + $0x58] sm:$0xff]
    %v2299 = vld [vmem:[#allocation10 + $0x60] sm:$0xff]
    %v2300 = vld [vmem:[#allocation10 + $0x68] sm:$0xff]
    %v2301 = vld [vmem:[#allocation10 + $0x70] sm:$0xff]
    %v2302 = vld [vmem:[#allocation10 + $0x78] sm:$0xff]
    %v2303 = vld [vmem:[#allocation10 + $0x80] sm:$0xff]
    %v2304 = vld [vmem:[#allocation10 + $0x88] sm:$0xff]
    %v2305 = vld [vmem:[#allocation10 + $0x90] sm:$0xff]
    %v2306 = vld [vmem:[#allocation10 + $0x98] sm:$0xff]
    %v2307 = vld [vmem:[#allocation10 + $0xa0] sm:$0xff]
    %v2308 = vld [vmem:[#allocation10 + $0xa8] sm:$0xff]
    %v2309 = vld [vmem:[#allocation10 + $0xb0] sm:$0xff]
    %v2310 = vld [vmem:[#allocation10 + $0xb8] sm:$0xff]
    %v2311 = vld [vmem:[#allocation10 + $0xc0] sm:$0xff]
    %v2312 = vld [vmem:[#allocation10 + $0xc8] sm:$0xff]
    %v2313 = vld [vmem:[#allocation10 + $0xd0] sm:$0xff]
    %v2314 = vld [vmem:[#allocation10 + $0xd8] sm:$0xff]
    %v2315 = vld [vmem:[#allocation10 + $0xe0] sm:$0xff]
    %v2316 = vld [vmem:[#allocation10 + $0xe8] sm:$0xff]
    %v2317 = vld [vmem:[#allocation10 + $0xf0] sm:$0xff]
    %v2318 = vld [vmem:[#allocation10 + $0xf8] sm:$0xff]
    %v2319 = vld [vmem:[%s6] sm:$0xf]
    %v2321 = vlaneseq
    %v2322 = vshrl.u32 %v2321, 7
    %v2323 = vsub.s32 0, %v2322
    %v2324 = vrot.slane %v2319, %v2323
    %v2325 = vlaneseq
    %v2326 = vshrl.u32 %v2325, 7
    %v2327 = vsub.s32 1, %v2326
    %v2328 = vrot.slane %v2319, %v2327
    %v2329 = vlaneseq
    %v2330 = vshrl.u32 %v2329, 7
    %v2331 = vsub.s32 2, %v2330
    %v2332 = vrot.slane %v2319, %v2331
    %v2333 = vlaneseq
    %v2334 = vshrl.u32 %v2333, 7
    %v2335 = vsub.s32 3, %v2334
    %v2336 = vrot.slane %v2319, %v2335
    %v2357 = vunpack.c.l.b16 %v2271
    %v2358 = vunpack.c.l.b16 %v2272
    %v2359 = vunpack.c.l.b16 %v2273
    %v2360 = vunpack.c.l.b16 %v2274
    %v2361 = vunpack.c.l.b16 %v2275
    %v2362 = vunpack.c.l.b16 %v2276
    %v2363 = vunpack.c.l.b16 %v2277
    %v2364 = vunpack.c.l.b16 %v2278
    %v2365 = vunpack.c.l.b16 %v2279
    %v2366 = vunpack.c.l.b16 %v2280
    %v2367 = vunpack.c.l.b16 %v2281
    %v2368 = vunpack.c.l.b16 %v2282
    %v2369 = vunpack.c.l.b16 %v2283
    %v2370 = vunpack.c.l.b16 %v2284
    %v2371 = vunpack.c.l.b16 %v2285
    %v2372 = vunpack.c.l.b16 %v2286
    %v2373 = vpack.c.b16 %v2358, %v2357
    %v2374 = vpack.c.b16 %v2360, %v2359
    %v2375 = vpack.c.b16 %v2362, %v2361
    %v2376 = vpack.c.b16 %v2364, %v2363
    %v2377 = vpack.c.b16 %v2366, %v2365
    %v2378 = vpack.c.b16 %v2368, %v2367
    %v2379 = vpack.c.b16 %v2370, %v2369
    %v2380 = vpack.c.b16 %v2372, %v2371
    %v2421 = vunpack.c.l.b16 %v2287
    %v2422 = vunpack.c.h.b16 %v2287
    %v2423 = vunpack.c.l.b16 %v2288
    %v2424 = vunpack.c.h.b16 %v2288
    %v2425 = vunpack.c.l.b16 %v2289
    %v2426 = vunpack.c.h.b16 %v2289
    %v2427 = vunpack.c.l.b16 %v2290
    %v2428 = vunpack.c.h.b16 %v2290
    %v2429 = vunpack.c.l.b16 %v2291
    %v2430 = vunpack.c.h.b16 %v2291
    %v2431 = vunpack.c.l.b16 %v2292
    %v2432 = vunpack.c.h.b16 %v2292
    %v2433 = vunpack.c.l.b16 %v2293
    %v2434 = vunpack.c.h.b16 %v2293
    %v2435 = vunpack.c.l.b16 %v2294
    %v2436 = vunpack.c.h.b16 %v2294
    %v2437 = vunpack.c.l.b16 %v2295
    %v2438 = vunpack.c.h.b16 %v2295
    %v2439 = vunpack.c.l.b16 %v2296
    %v2440 = vunpack.c.h.b16 %v2296
    %v2441 = vunpack.c.l.b16 %v2297
    %v2442 = vunpack.c.h.b16 %v2297
    %v2443 = vunpack.c.l.b16 %v2298
    %v2444 = vunpack.c.h.b16 %v2298
    %v2445 = vunpack.c.l.b16 %v2299
    %v2446 = vunpack.c.h.b16 %v2299
    %v2447 = vunpack.c.l.b16 %v2300
    %v2448 = vunpack.c.h.b16 %v2300
    %v2449 = vunpack.c.l.b16 %v2301
    %v2450 = vunpack.c.h.b16 %v2301
    %v2451 = vunpack.c.l.b16 %v2302
    %v2452 = vunpack.c.h.b16 %v2302
    %v2453 = vunpack.c.l.b16 %v2303
    %v2454 = vunpack.c.h.b16 %v2303
    %v2455 = vunpack.c.l.b16 %v2304
    %v2456 = vunpack.c.h.b16 %v2304
    %v2457 = vunpack.c.l.b16 %v2305
    %v2458 = vunpack.c.h.b16 %v2305
    %v2459 = vunpack.c.l.b16 %v2306
    %v2460 = vunpack.c.h.b16 %v2306
    %v2461 = vunpack.c.l.b16 %v2307
    %v2462 = vunpack.c.h.b16 %v2307
    %v2463 = vunpack.c.l.b16 %v2308
    %v2464 = vunpack.c.h.b16 %v2308
    %v2465 = vunpack.c.l.b16 %v2309
    %v2466 = vunpack.c.h.b16 %v2309
    %v2467 = vunpack.c.l.b16 %v2310
    %v2468 = vunpack.c.h.b16 %v2310
    %v2469 = vunpack.c.l.b16 %v2311
    %v2470 = vunpack.c.h.b16 %v2311
    %v2471 = vunpack.c.l.b16 %v2312
    %v2472 = vunpack.c.h.b16 %v2312
    %v2473 = vunpack.c.l.b16 %v2313
    %v2474 = vunpack.c.h.b16 %v2313
    %v2475 = vunpack.c.l.b16 %v2314
    %v2476 = vunpack.c.h.b16 %v2314
    %v2477 = vunpack.c.l.b16 %v2315
    %v2478 = vunpack.c.h.b16 %v2315
    %v2479 = vunpack.c.l.b16 %v2316
    %v2480 = vunpack.c.h.b16 %v2316
    %v2481 = vunpack.c.l.b16 %v2317
    %v2482 = vunpack.c.h.b16 %v2317
    %v2483 = vunpack.c.l.b16 %v2318
    %v2484 = vunpack.c.h.b16 %v2318
    %v2485 = vpack.c.b16 %v2425, %v2421
    %v2486 = vpack.c.b16 %v2426, %v2422
    %v2487 = vpack.c.b16 %v2427, %v2423
    %v2488 = vpack.c.b16 %v2428, %v2424
    %v2489 = vpack.c.b16 %v2433, %v2429
    %v2490 = vpack.c.b16 %v2434, %v2430
    %v2491 = vpack.c.b16 %v2435, %v2431
    %v2492 = vpack.c.b16 %v2436, %v2432
    %v2493 = vpack.c.b16 %v2441, %v2437
    %v2494 = vpack.c.b16 %v2442, %v2438
    %v2495 = vpack.c.b16 %v2443, %v2439
    %v2496 = vpack.c.b16 %v2444, %v2440
    %v2497 = vpack.c.b16 %v2449, %v2445
    %v2498 = vpack.c.b16 %v2450, %v2446
    %v2499 = vpack.c.b16 %v2451, %v2447
    %v2500 = vpack.c.b16 %v2452, %v2448
    %v2501 = vpack.c.b16 %v2457, %v2453
    %v2502 = vpack.c.b16 %v2458, %v2454
    %v2503 = vpack.c.b16 %v2459, %v2455
    %v2504 = vpack.c.b16 %v2460, %v2456
    %v2505 = vpack.c.b16 %v2465, %v2461
    %v2506 = vpack.c.b16 %v2466, %v2462
    %v2507 = vpack.c.b16 %v2467, %v2463
    %v2508 = vpack.c.b16 %v2468, %v2464
    %v2509 = vpack.c.b16 %v2473, %v2469
    %v2510 = vpack.c.b16 %v2474, %v2470
    %v2511 = vpack.c.b16 %v2475, %v2471
    %v2512 = vpack.c.b16 %v2476, %v2472
    %v2513 = vpack.c.b16 %v2481, %v2477
    %v2514 = vpack.c.b16 %v2482, %v2478
    %v2515 = vpack.c.b16 %v2483, %v2479
    %v2516 = vpack.c.b16 %v2484, %v2480
    %2549 = vmatprep.subr.bf16.mxu0 %v2514
    %2550 = vmatpush1.bf16.msra.mxu0 %v2513
    %2551 = vmatprep.subr.bf16.mxu0 %v2510
    %2552 = vmatpush1.bf16.msra.mxu0 %v2509
    %2553 = vmatprep.subr.bf16.mxu0 %v2506
    %2554 = vmatpush1.bf16.msra.mxu0 %v2505
    %2555 = vmatprep.subr.bf16.mxu0 %v2502
    %2556 = vmatpush1.bf16.msra.mxu0 %v2501
    %2557 = vmatprep.subr.bf16.mxu0 %v2498
    %2558 = vmatpush1.bf16.msra.mxu0 %v2497
    %2559 = vmatprep.subr.bf16.mxu0 %v2494
    %2560 = vmatpush1.bf16.msra.mxu0 %v2493
    %2561 = vmatprep.subr.bf16.mxu0 %v2490
    %2562 = vmatpush1.bf16.msra.mxu0 %v2489
    %2563 = vmatprep.subr.bf16.mxu0 %v2486
    %2564 = vmatpush1.bf16.msra.mxu0 %v2485
    %2565 = vmatprep.subr.bf16.mxu0 0
    %2566 = vmatpush2.bf16.msra.mxu0 0
    %2567 = vmatprep.subr.bf16.mxu0 0
    %2568 = vmatpush2.bf16.msra.mxu0 0
    %2569 = vmatprep.subr.bf16.mxu0 0
    %2570 = vmatpush2.bf16.msra.mxu0 0
    %2571 = vmatprep.subr.bf16.mxu0 0
    %2572 = vmatpush2.bf16.msra.mxu0 0
    %2573 = vmatprep.subr.bf16.mxu0 0
    %2574 = vmatpush2.bf16.msra.mxu0 0
    %2575 = vmatprep.subr.bf16.mxu0 0
    %2576 = vmatpush2.bf16.msra.mxu0 0
    %2577 = vmatprep.subr.bf16.mxu0 0
    %2578 = vmatpush2.bf16.msra.mxu0 0
    %2579 = vmatprep.subr.bf16.mxu0 0
    %2580 = vmatpush2.bf16.msra.mxu0 0
    %2581 = vmatprep.mubr.bf16.mxu0 0
    %2582 = vmatmul.mubr.bf16.gmra.mxu0 %v2373
    %v2583 = vpop.f32.mrf.mxu0
    %v2584 = vadd.f32 %v2324, %v2583
    %v2585 = vpop.f32.mrf.mxu0
    %v2586 = vadd.f32 %v2328, %v2585
    %v2587 = vpop.f32.mrf.mxu0
    %v2588 = vadd.f32 %v2324, %v2587
    %v2589 = vpop.f32.mrf.mxu0
    %v2590 = vadd.f32 %v2328, %v2589
    %2591 = vmatprep.mubr.bf16.mxu0 0
    %2592 = vmatmul.mubr.bf16.gmra.mxu0 %v2374
    %v2593 = vpop.f32.mrf.mxu0
    %v2594 = vadd.f32 %v2324, %v2593
    %v2595 = vpop.f32.mrf.mxu0
    %v2596 = vadd.f32 %v2328, %v2595
    %v2597 = vpop.f32.mrf.mxu0
    %v2598 = vadd.f32 %v2324, %v2597
    %v2599 = vpop.f32.mrf.mxu0
    %v2600 = vadd.f32 %v2328, %v2599
    %2601 = vmatprep.mubr.bf16.mxu0 0
    %2602 = vmatmul.mubr.bf16.gmra.mxu0 %v2375
    %v2603 = vpop.f32.mrf.mxu0
    %v2604 = vadd.f32 %v2324, %v2603
    %v2605 = vpop.f32.mrf.mxu0
    %v2606 = vadd.f32 %v2328, %v2605
    %v2607 = vpop.f32.mrf.mxu0
    %v2608 = vadd.f32 %v2324, %v2607
    %v2609 = vpop.f32.mrf.mxu0
    %v2610 = vadd.f32 %v2328, %v2609
    %2611 = vmatprep.mubr.bf16.mxu0 0
    %2612 = vmatmul.mubr.bf16.gmra.mxu0 %v2376
    %v2613 = vpop.f32.mrf.mxu0
    %v2614 = vadd.f32 %v2324, %v2613
    %v2615 = vpop.f32.mrf.mxu0
    %v2616 = vadd.f32 %v2328, %v2615
    %v2617 = vpop.f32.mrf.mxu0
    %v2618 = vadd.f32 %v2324, %v2617
    %v2619 = vpop.f32.mrf.mxu0
    %v2620 = vadd.f32 %v2328, %v2619
    %2621 = vmatprep.mubr.bf16.mxu0 0
    %2622 = vmatmul.mubr.bf16.gmra.mxu0 %v2377
    %v2623 = vpop.f32.mrf.mxu0
    %v2624 = vadd.f32 %v2324, %v2623
    %v2625 = vpop.f32.mrf.mxu0
    %v2626 = vadd.f32 %v2328, %v2625
    %v2627 = vpop.f32.mrf.mxu0
    %v2628 = vadd.f32 %v2324, %v2627
    %v2629 = vpop.f32.mrf.mxu0
    %v2630 = vadd.f32 %v2328, %v2629
    %2631 = vmatprep.mubr.bf16.mxu0 0
    %2632 = vmatmul.mubr.bf16.gmra.mxu0 %v2378
    %v2633 = vpop.f32.mrf.mxu0
    %v2634 = vadd.f32 %v2324, %v2633
    %v2635 = vpop.f32.mrf.mxu0
    %v2636 = vadd.f32 %v2328, %v2635
    %v2637 = vpop.f32.mrf.mxu0
    %v2638 = vadd.f32 %v2324, %v2637
    %v2639 = vpop.f32.mrf.mxu0
    %v2640 = vadd.f32 %v2328, %v2639
    %2641 = vmatprep.mubr.bf16.mxu0 0
    %2642 = vmatmul.mubr.bf16.gmra.mxu0 %v2379
    %v2643 = vpop.f32.mrf.mxu0
    %v2644 = vadd.f32 %v2324, %v2643
    %v2645 = vpop.f32.mrf.mxu0
    %v2646 = vadd.f32 %v2328, %v2645
    %v2647 = vpop.f32.mrf.mxu0
    %v2648 = vadd.f32 %v2324, %v2647
    %v2649 = vpop.f32.mrf.mxu0
    %v2650 = vadd.f32 %v2328, %v2649
    %2651 = vmatprep.mubr.bf16.mxu0 0
    %2652 = vmatmul.mubr.bf16.gmra.mxu0 %v2380
    %v2653 = vpop.f32.mrf.mxu0
    %v2654 = vadd.f32 %v2324, %v2653
    %v2655 = vpop.f32.mrf.mxu0
    %v2656 = vadd.f32 %v2328, %v2655
    %v2657 = vpop.f32.mrf.mxu0
    %v2658 = vadd.f32 %v2324, %v2657
    %v2659 = vpop.f32.mrf.mxu0
    %v2660 = vadd.f32 %v2328, %v2659
    %2661 = vdwg.mxu0
    %2662 = vmatprep.subr.bf16.mxu0 %v2516
    %2663 = vmatpush1.bf16.msra.mxu0 %v2515
    %2664 = vmatprep.subr.bf16.mxu0 %v2512
    %2665 = vmatpush1.bf16.msra.mxu0 %v2511
    %2666 = vmatprep.subr.bf16.mxu0 %v2508
    %2667 = vmatpush1.bf16.msra.mxu0 %v2507
    %2668 = vmatprep.subr.bf16.mxu0 %v2504
    %2669 = vmatpush1.bf16.msra.mxu0 %v2503
    %2670 = vmatprep.subr.bf16.mxu0 %v2500
    %2671 = vmatpush1.bf16.msra.mxu0 %v2499
    %2672 = vmatprep.subr.bf16.mxu0 %v2496
    %2673 = vmatpush1.bf16.msra.mxu0 %v2495
    %2674 = vmatprep.subr.bf16.mxu0 %v2492
    %2675 = vmatpush1.bf16.msra.mxu0 %v2491
    %2676 = vmatprep.subr.bf16.mxu0 %v2488
    %2677 = vmatpush1.bf16.msra.mxu0 %v2487
    %2678 = vmatprep.subr.bf16.mxu0 0
    %2679 = vmatpush2.bf16.msra.mxu0 0
    %2680 = vmatprep.subr.bf16.mxu0 0
    %2681 = vmatpush2.bf16.msra.mxu0 0
    %2682 = vmatprep.subr.bf16.mxu0 0
    %2683 = vmatpush2.bf16.msra.mxu0 0
    %2684 = vmatprep.subr.bf16.mxu0 0
    %2685 = vmatpush2.bf16.msra.mxu0 0
    %2686 = vmatprep.subr.bf16.mxu0 0
    %2687 = vmatpush2.bf16.msra.mxu0 0
    %2688 = vmatprep.subr.bf16.mxu0 0
    %2689 = vmatpush2.bf16.msra.mxu0 0
    %2690 = vmatprep.subr.bf16.mxu0 0
    %2691 = vmatpush2.bf16.msra.mxu0 0
    %2692 = vmatprep.subr.bf16.mxu0 0
    %2693 = vmatpush2.bf16.msra.mxu0 0
    %2694 = vmatprep.mubr.bf16.mxu0 0
    %2695 = vmatmul.mubr.bf16.gmra.mxu0 %v2373
    %v2696 = vpop.f32.mrf.mxu0
    %v2697 = vadd.f32 %v2332, %v2696
    %v2698 = vpop.f32.mrf.mxu0
    %v2699 = vadd.f32 %v2336, %v2698
    %v2700 = vpop.f32.mrf.mxu0
    %v2701 = vadd.f32 %v2332, %v2700
    %v2702 = vpop.f32.mrf.mxu0
    %v2703 = vadd.f32 %v2336, %v2702
    %2704 = vmatprep.mubr.bf16.mxu0 0
    %2705 = vmatmul.mubr.bf16.gmra.mxu0 %v2374
    %v2706 = vpop.f32.mrf.mxu0
    %v2707 = vadd.f32 %v2332, %v2706
    %v2708 = vpop.f32.mrf.mxu0
    %v2709 = vadd.f32 %v2336, %v2708
    %v2710 = vpop.f32.mrf.mxu0
    %v2711 = vadd.f32 %v2332, %v2710
    %v2712 = vpop.f32.mrf.mxu0
    %v2713 = vadd.f32 %v2336, %v2712
    %2714 = vmatprep.mubr.bf16.mxu0 0
    %2715 = vmatmul.mubr.bf16.gmra.mxu0 %v2375
    %v2716 = vpop.f32.mrf.mxu0
    %v2717 = vadd.f32 %v2332, %v2716
    %v2718 = vpop.f32.mrf.mxu0
    %v2719 = vadd.f32 %v2336, %v2718
    %v2720 = vpop.f32.mrf.mxu0
    %v2721 = vadd.f32 %v2332, %v2720
    %v2722 = vpop.f32.mrf.mxu0
    %v2723 = vadd.f32 %v2336, %v2722
    %2724 = vmatprep.mubr.bf16.mxu0 0
    %2725 = vmatmul.mubr.bf16.gmra.mxu0 %v2376
    %v2726 = vpop.f32.mrf.mxu0
    %v2727 = vadd.f32 %v2332, %v2726
    %v2728 = vpop.f32.mrf.mxu0
    %v2729 = vadd.f32 %v2336, %v2728
    %v2730 = vpop.f32.mrf.mxu0
    %v2731 = vadd.f32 %v2332, %v2730
    %v2732 = vpop.f32.mrf.mxu0
    %v2733 = vadd.f32 %v2336, %v2732
    %2734 = vmatprep.mubr.bf16.mxu0 0
    %2735 = vmatmul.mubr.bf16.gmra.mxu0 %v2377
    %v2736 = vpop.f32.mrf.mxu0
    %v2737 = vadd.f32 %v2332, %v2736
    %v2738 = vpop.f32.mrf.mxu0
    %v2739 = vadd.f32 %v2336, %v2738
    %v2740 = vpop.f32.mrf.mxu0
    %v2741 = vadd.f32 %v2332, %v2740
    %v2742 = vpop.f32.mrf.mxu0
    %v2743 = vadd.f32 %v2336, %v2742
    %2744 = vmatprep.mubr.bf16.mxu0 0
    %2745 = vmatmul.mubr.bf16.gmra.mxu0 %v2378
    %v2746 = vpop.f32.mrf.mxu0
    %v2747 = vadd.f32 %v2332, %v2746
    %v2748 = vpop.f32.mrf.mxu0
    %v2749 = vadd.f32 %v2336, %v2748
    %v2750 = vpop.f32.mrf.mxu0
    %v2751 = vadd.f32 %v2332, %v2750
    %v2752 = vpop.f32.mrf.mxu0
    %v2753 = vadd.f32 %v2336, %v2752
    %2754 = vmatprep.mubr.bf16.mxu0 0
    %2755 = vmatmul.mubr.bf16.gmra.mxu0 %v2379
    %v2756 = vpop.f32.mrf.mxu0
    %v2757 = vadd.f32 %v2332, %v2756
    %v2758 = vpop.f32.mrf.mxu0
    %v2759 = vadd.f32 %v2336, %v2758
    %v2760 = vpop.f32.mrf.mxu0
    %v2761 = vadd.f32 %v2332, %v2760
    %v2762 = vpop.f32.mrf.mxu0
    %v2763 = vadd.f32 %v2336, %v2762
    %2764 = vmatprep.mubr.bf16.mxu0 0
    %2765 = vmatmul.mubr.bf16.gmra.mxu0 %v2380
    %v2766 = vpop.f32.mrf.mxu0
    %v2767 = vadd.f32 %v2332, %v2766
    %v2768 = vpop.f32.mrf.mxu0
    %v2769 = vadd.f32 %v2336, %v2768
    %v2770 = vpop.f32.mrf.mxu0
    %v2771 = vadd.f32 %v2332, %v2770
    %v2772 = vpop.f32.mrf.mxu0
    %v2773 = vadd.f32 %v2336, %v2772
    %2774 = vdwg.mxu0
    %v2775 = vpack.c.bf16 %v2588, %v2584
    %v2776 = vpack.c.bf16 %v2590, %v2586
    %v2777 = vpack.c.bf16 %v2701, %v2697
    %v2778 = vpack.c.bf16 %v2703, %v2699
    %v2779 = vpack.c.bf16 %v2598, %v2594
    %v2780 = vpack.c.bf16 %v2600, %v2596
    %v2781 = vpack.c.bf16 %v2711, %v2707
    %v2782 = vpack.c.bf16 %v2713, %v2709
    %v2783 = vpack.c.bf16 %v2608, %v2604
    %v2784 = vpack.c.bf16 %v2610, %v2606
    %v2785 = vpack.c.bf16 %v2721, %v2717
    %v2786 = vpack.c.bf16 %v2723, %v2719
    %v2787 = vpack.c.bf16 %v2618, %v2614
    %v2788 = vpack.c.bf16 %v2620, %v2616
    %v2789 = vpack.c.bf16 %v2731, %v2727
    %v2790 = vpack.c.bf16 %v2733, %v2729
    %v2791 = vpack.c.bf16 %v2628, %v2624
    %v2792 = vpack.c.bf16 %v2630, %v2626
    %v2793 = vpack.c.bf16 %v2741, %v2737
    %v2794 = vpack.c.bf16 %v2743, %v2739
    %v2795 = vpack.c.bf16 %v2638, %v2634
    %v2796 = vpack.c.bf16 %v2640, %v2636
    %v2797 = vpack.c.bf16 %v2751, %v2747
    %v2798 = vpack.c.bf16 %v2753, %v2749
    %v2799 = vpack.c.bf16 %v2648, %v2644
    %v2800 = vpack.c.bf16 %v2650, %v2646
    %v2801 = vpack.c.bf16 %v2761, %v2757
    %v2802 = vpack.c.bf16 %v2763, %v2759
    %v2803 = vpack.c.bf16 %v2658, %v2654
    %v2804 = vpack.c.bf16 %v2660, %v2656
    %v2805 = vpack.c.bf16 %v2771, %v2767
    %v2806 = vpack.c.bf16 %v2773, %v2769
    %v2839 = vunpack.c.l.b16 %v2775
    %v2840 = vunpack.c.l.b16 %v2776
    %v2841 = vunpack.c.l.b16 %v2777
    %v2842 = vunpack.c.l.b16 %v2778
    %v2843 = vunpack.c.h.b16 %v2775
    %v2844 = vunpack.c.h.b16 %v2776
    %v2845 = vunpack.c.h.b16 %v2777
    %v2846 = vunpack.c.h.b16 %v2778
    %v2847 = vunpack.c.l.b16 %v2779
    %v2848 = vunpack.c.l.b16 %v2780
    %v2849 = vunpack.c.l.b16 %v2781
    %v2850 = vunpack.c.l.b16 %v2782
    %v2851 = vunpack.c.h.b16 %v2779
    %v2852 = vunpack.c.h.b16 %v2780
    %v2853 = vunpack.c.h.b16 %v2781
    %v2854 = vunpack.c.h.b16 %v2782
    %v2855 = vunpack.c.l.b16 %v2783
    %v2856 = vunpack.c.l.b16 %v2784
    %v2857 = vunpack.c.l.b16 %v2785
    %v2858 = vunpack.c.l.b16 %v2786
    %v2859 = vunpack.c.h.b16 %v2783
    %v2860 = vunpack.c.h.b16 %v2784
    %v2861 = vunpack.c.h.b16 %v2785
    %v2862 = vunpack.c.h.b16 %v2786
    %v2863 = vunpack.c.l.b16 %v2787
    %v2864 = vunpack.c.l.b16 %v2788
    %v2865 = vunpack.c.l.b16 %v2789
    %v2866 = vunpack.c.l.b16 %v2790
    %v2867 = vunpack.c.h.b16 %v2787
    %v2868 = vunpack.c.h.b16 %v2788
    %v2869 = vunpack.c.h.b16 %v2789
    %v2870 = vunpack.c.h.b16 %v2790
    %v2871 = vunpack.c.l.b16 %v2791
    %v2872 = vunpack.c.l.b16 %v2792
    %v2873 = vunpack.c.l.b16 %v2793
    %v2874 = vunpack.c.l.b16 %v2794
    %v2875 = vunpack.c.h.b16 %v2791
    %v2876 = vunpack.c.h.b16 %v2792
    %v2877 = vunpack.c.h.b16 %v2793
    %v2878 = vunpack.c.h.b16 %v2794
    %v2879 = vunpack.c.l.b16 %v2795
    %v2880 = vunpack.c.l.b16 %v2796
    %v2881 = vunpack.c.l.b16 %v2797
    %v2882 = vunpack.c.l.b16 %v2798
    %v2883 = vunpack.c.h.b16 %v2795
    %v2884 = vunpack.c.h.b16 %v2796
    %v2885 = vunpack.c.h.b16 %v2797
    %v2886 = vunpack.c.h.b16 %v2798
    %v2887 = vunpack.c.l.b16 %v2799
    %v2888 = vunpack.c.l.b16 %v2800
    %v2889 = vunpack.c.l.b16 %v2801
    %v2890 = vunpack.c.l.b16 %v2802
    %v2891 = vunpack.c.h.b16 %v2799
    %v2892 = vunpack.c.h.b16 %v2800
    %v2893 = vunpack.c.h.b16 %v2801
    %v2894 = vunpack.c.h.b16 %v2802
    %v2895 = vunpack.c.l.b16 %v2803
    %v2896 = vunpack.c.l.b16 %v2804
    %v2897 = vunpack.c.l.b16 %v2805
    %v2898 = vunpack.c.l.b16 %v2806
    %v2899 = vunpack.c.h.b16 %v2803
    %v2900 = vunpack.c.h.b16 %v2804
    %v2901 = vunpack.c.h.b16 %v2805
    %v2902 = vunpack.c.h.b16 %v2806
    %v2903 = vpack.c.b16 %v2840, %v2839
    %v2904 = vpack.c.b16 %v2842, %v2841
    %v2905 = vpack.c.b16 %v2844, %v2843
    %v2906 = vpack.c.b16 %v2846, %v2845
    %v2907 = vpack.c.b16 %v2848, %v2847
    %v2908 = vpack.c.b16 %v2850, %v2849
    %v2909 = vpack.c.b16 %v2852, %v2851
    %v2910 = vpack.c.b16 %v2854, %v2853
    %v2911 = vpack.c.b16 %v2856, %v2855
    %v2912 = vpack.c.b16 %v2858, %v2857
    %v2913 = vpack.c.b16 %v2860, %v2859
    %v2914 = vpack.c.b16 %v2862, %v2861
    %v2915 = vpack.c.b16 %v2864, %v2863
    %v2916 = vpack.c.b16 %v2866, %v2865
    %v2917 = vpack.c.b16 %v2868, %v2867
    %v2918 = vpack.c.b16 %v2870, %v2869
    %v2919 = vpack.c.b16 %v2872, %v2871
    %v2920 = vpack.c.b16 %v2874, %v2873
    %v2921 = vpack.c.b16 %v2876, %v2875
    %v2922 = vpack.c.b16 %v2878, %v2877
    %v2923 = vpack.c.b16 %v2880, %v2879
    %v2924 = vpack.c.b16 %v2882, %v2881
    %v2925 = vpack.c.b16 %v2884, %v2883
    %v2926 = vpack.c.b16 %v2886, %v2885
    %v2927 = vpack.c.b16 %v2888, %v2887
    %v2928 = vpack.c.b16 %v2890, %v2889
    %v2929 = vpack.c.b16 %v2892, %v2891
    %v2930 = vpack.c.b16 %v2894, %v2893
    %v2931 = vpack.c.b16 %v2896, %v2895
    %v2932 = vpack.c.b16 %v2898, %v2897
    %v2933 = vpack.c.b16 %v2900, %v2899
    %v2934 = vpack.c.b16 %v2902, %v2901
    %2967 = vst [vmem:[#allocation2] sm:$0xff] %v2903
    %2968 = vst [vmem:[#allocation2 + $0x8] sm:$0xff] %v2904
    %2969 = vst [vmem:[#allocation2 + $0x10] sm:$0xff] %v2905
    %2970 = vst [vmem:[#allocation2 + $0x18] sm:$0xff] %v2906
    %2971 = vst [vmem:[#allocation2 + $0x20] sm:$0xff] %v2907
    %2972 = vst [vmem:[#allocation2 + $0x28] sm:$0xff] %v2908
    %2973 = vst [vmem:[#allocation2 + $0x30] sm:$0xff] %v2909
    %2974 = vst [vmem:[#allocation2 + $0x38] sm:$0xff] %v2910
    %2975 = vst [vmem:[#allocation2 + $0x40] sm:$0xff] %v2911
    %2976 = vst [vmem:[#allocation2 + $0x48] sm:$0xff] %v2912
    %2977 = vst [vmem:[#allocation2 + $0x50] sm:$0xff] %v2913
    %2978 = vst [vmem:[#allocation2 + $0x58] sm:$0xff] %v2914
    %2979 = vst [vmem:[#allocation2 + $0x60] sm:$0xff] %v2915
    %2980 = vst [vmem:[#allocation2 + $0x68] sm:$0xff] %v2916
    %2981 = vst [vmem:[#allocation2 + $0x70] sm:$0xff] %v2917
    %2982 = vst [vmem:[#allocation2 + $0x78] sm:$0xff] %v2918
    %2983 = vst [vmem:[#allocation2 + $0x80] sm:$0xff] %v2919
    %2984 = vst [vmem:[#allocation2 + $0x88] sm:$0xff] %v2920
    %2985 = vst [vmem:[#allocation2 + $0x90] sm:$0xff] %v2921
    %2986 = vst [vmem:[#allocation2 + $0x98] sm:$0xff] %v2922
    %2987 = vst [vmem:[#allocation2 + $0xa0] sm:$0xff] %v2923
    %2988 = vst [vmem:[#allocation2 + $0xa8] sm:$0xff] %v2924
    %2989 = vst [vmem:[#allocation2 + $0xb0] sm:$0xff] %v2925
    %2990 = vst [vmem:[#allocation2 + $0xb8] sm:$0xff] %v2926
    %2991 = vst [vmem:[#allocation2 + $0xc0] sm:$0xff] %v2927
    %2992 = vst [vmem:[#allocation2 + $0xc8] sm:$0xff] %v2928
    %2993 = vst [vmem:[#allocation2 + $0xd0] sm:$0xff] %v2929
    %2994 = vst [vmem:[#allocation2 + $0xd8] sm:$0xff] %v2930
    %2995 = vst [vmem:[#allocation2 + $0xe0] sm:$0xff] %v2931
    %2996 = vst [vmem:[#allocation2 + $0xe8] sm:$0xff] %v2932
    %2997 = vst [vmem:[#allocation2 + $0xf0] sm:$0xff] %v2933
    %2998 = vst [vmem:[#allocation2 + $0xf8] sm:$0xff] %v2934
    %v2999 = vld [vmem:[#allocation12] sm:$0xff]
    %v3000 = vld [vmem:[#allocation12 + $0x8] sm:$0xff]
    %v3001 = vld [vmem:[#allocation12 + $0x10] sm:$0xff]
    %v3002 = vld [vmem:[#allocation12 + $0x18] sm:$0xff]
    %v3003 = vld [vmem:[#allocation12 + $0x20] sm:$0xff]
    %v3004 = vld [vmem:[#allocation12 + $0x28] sm:$0xff]
    %v3005 = vld [vmem:[#allocation12 + $0x30] sm:$0xff]
    %v3006 = vld [vmem:[#allocation12 + $0x38] sm:$0xff]
    %v3007 = vld [vmem:[#allocation12 + $0x40] sm:$0xff]
    %v3008 = vld [vmem:[#allocation12 + $0x48] sm:$0xff]
    %v3009 = vld [vmem:[#allocation12 + $0x50] sm:$0xff]
    %v3010 = vld [vmem:[#allocation12 + $0x58] sm:$0xff]
    %v3011 = vld [vmem:[#allocation12 + $0x60] sm:$0xff]
    %v3012 = vld [vmem:[#allocation12 + $0x68] sm:$0xff]
    %v3013 = vld [vmem:[#allocation12 + $0x70] sm:$0xff]
    %v3014 = vld [vmem:[#allocation12 + $0x78] sm:$0xff]
    %v3015 = vld [vmem:[#allocation12 + $0x80] sm:$0xff]
    %v3016 = vld [vmem:[#allocation12 + $0x88] sm:$0xff]
    %v3017 = vld [vmem:[#allocation12 + $0x90] sm:$0xff]
    %v3018 = vld [vmem:[#allocation12 + $0x98] sm:$0xff]
    %v3019 = vld [vmem:[#allocation12 + $0xa0] sm:$0xff]
    %v3020 = vld [vmem:[#allocation12 + $0xa8] sm:$0xff]
    %v3021 = vld [vmem:[#allocation12 + $0xb0] sm:$0xff]
    %v3022 = vld [vmem:[#allocation12 + $0xb8] sm:$0xff]
    %v3023 = vld [vmem:[#allocation12 + $0xc0] sm:$0xff]
    %v3024 = vld [vmem:[#allocation12 + $0xc8] sm:$0xff]
    %v3025 = vld [vmem:[#allocation12 + $0xd0] sm:$0xff]
    %v3026 = vld [vmem:[#allocation12 + $0xd8] sm:$0xff]
    %v3027 = vld [vmem:[#allocation12 + $0xe0] sm:$0xff]
    %v3028 = vld [vmem:[#allocation12 + $0xe8] sm:$0xff]
    %v3029 = vld [vmem:[#allocation12 + $0xf0] sm:$0xff]
    %v3030 = vld [vmem:[#allocation12 + $0xf8] sm:$0xff]
    %v3031 = vld [vmem:[#allocation2] sm:$0xff]
    %v3032 = vld [vmem:[#allocation2 + $0x8] sm:$0xff]
    %v3033 = vld [vmem:[#allocation2 + $0x10] sm:$0xff]
    %v3034 = vld [vmem:[#allocation2 + $0x18] sm:$0xff]
    %v3035 = vunpack.c.l.bf16 %v3031
    %v3036 = vunpack.c.h.bf16 %v3031
    %v3037 = vunpack.c.l.bf16 %v3032
    %v3038 = vunpack.c.h.bf16 %v3032
    %v3039 = vunpack.c.l.bf16 %v3033
    %v3040 = vunpack.c.h.bf16 %v3033
    %v3041 = vunpack.c.l.bf16 %v3034
    %v3042 = vunpack.c.h.bf16 %v3034
    %v3075 = vunpack.c.l.b16 %v2999
    %v3076 = vunpack.c.h.b16 %v2999
    %v3077 = vunpack.c.l.b16 %v3000
    %v3078 = vunpack.c.h.b16 %v3000
    %v3079 = vunpack.c.l.b16 %v3001
    %v3080 = vunpack.c.h.b16 %v3001
    %v3081 = vunpack.c.l.b16 %v3002
    %v3082 = vunpack.c.h.b16 %v3002
    %v3083 = vunpack.c.l.b16 %v3003
    %v3084 = vunpack.c.h.b16 %v3003
    %v3085 = vunpack.c.l.b16 %v3004
    %v3086 = vunpack.c.h.b16 %v3004
    %v3087 = vunpack.c.l.b16 %v3005
    %v3088 = vunpack.c.h.b16 %v3005
    %v3089 = vunpack.c.l.b16 %v3006
    %v3090 = vunpack.c.h.b16 %v3006
    %v3091 = vunpack.c.l.b16 %v3007
    %v3092 = vunpack.c.h.b16 %v3007
    %v3093 = vunpack.c.l.b16 %v3008
    %v3094 = vunpack.c.h.b16 %v3008
    %v3095 = vunpack.c.l.b16 %v3009
    %v3096 = vunpack.c.h.b16 %v3009
    %v3097 = vunpack.c.l.b16 %v3010
    %v3098 = vunpack.c.h.b16 %v3010
    %v3099 = vunpack.c.l.b16 %v3011
    %v3100 = vunpack.c.h.b16 %v3011
    %v3101 = vunpack.c.l.b16 %v3012
    %v3102 = vunpack.c.h.b16 %v3012
    %v3103 = vunpack.c.l.b16 %v3013
    %v3104 = vunpack.c.h.b16 %v3013
    %v3105 = vunpack.c.l.b16 %v3014
    %v3106 = vunpack.c.h.b16 %v3014
    %v3107 = vunpack.c.l.b16 %v3015
    %v3108 = vunpack.c.h.b16 %v3015
    %v3109 = vunpack.c.l.b16 %v3016
    %v3110 = vunpack.c.h.b16 %v3016
    %v3111 = vunpack.c.l.b16 %v3017
    %v3112 = vunpack.c.h.b16 %v3017
    %v3113 = vunpack.c.l.b16 %v3018
    %v3114 = vunpack.c.h.b16 %v3018
    %v3115 = vunpack.c.l.b16 %v3019
    %v3116 = vunpack.c.h.b16 %v3019
    %v3117 = vunpack.c.l.b16 %v3020
    %v3118 = vunpack.c.h.b16 %v3020
    %v3119 = vunpack.c.l.b16 %v3021
    %v3120 = vunpack.c.h.b16 %v3021
    %v3121 = vunpack.c.l.b16 %v3022
    %v3122 = vunpack.c.h.b16 %v3022
    %v3123 = vunpack.c.l.b16 %v3023
    %v3124 = vunpack.c.h.b16 %v3023
    %v3125 = vunpack.c.l.b16 %v3024
    %v3126 = vunpack.c.h.b16 %v3024
    %v3127 = vunpack.c.l.b16 %v3025
    %v3128 = vunpack.c.h.b16 %v3025
    %v3129 = vunpack.c.l.b16 %v3026
    %v3130 = vunpack.c.h.b16 %v3026
    %v3131 = vunpack.c.l.b16 %v3027
    %v3132 = vunpack.c.h.b16 %v3027
    %v3133 = vunpack.c.l.b16 %v3028
    %v3134 = vunpack.c.h.b16 %v3028
    %v3135 = vunpack.c.l.b16 %v3029
    %v3136 = vunpack.c.h.b16 %v3029
    %v3137 = vunpack.c.l.b16 %v3030
    %v3138 = vunpack.c.h.b16 %v3030
    %v3139 = vpack.c.b16 %v3079, %v3075
    %v3140 = vpack.c.b16 %v3080, %v3076
    %v3141 = vpack.c.b16 %v3081, %v3077
    %v3142 = vpack.c.b16 %v3082, %v3078
    %v3143 = vpack.c.b16 %v3087, %v3083
    %v3144 = vpack.c.b16 %v3088, %v3084
    %v3145 = vpack.c.b16 %v3089, %v3085
    %v3146 = vpack.c.b16 %v3090, %v3086
    %v3147 = vpack.c.b16 %v3095, %v3091
    %v3148 = vpack.c.b16 %v3096, %v3092
    %v3149 = vpack.c.b16 %v3097, %v3093
    %v3150 = vpack.c.b16 %v3098, %v3094
    %v3151 = vpack.c.b16 %v3103, %v3099
    %v3152 = vpack.c.b16 %v3104, %v3100
    %v3153 = vpack.c.b16 %v3105, %v3101
    %v3154 = vpack.c.b16 %v3106, %v3102
    %v3155 = vpack.c.b16 %v3111, %v3107
    %v3156 = vpack.c.b16 %v3112, %v3108
    %v3157 = vpack.c.b16 %v3113, %v3109
    %v3158 = vpack.c.b16 %v3114, %v3110
    %v3159 = vpack.c.b16 %v3119, %v3115
    %v3160 = vpack.c.b16 %v3120, %v3116
    %v3161 = vpack.c.b16 %v3121, %v3117
    %v3162 = vpack.c.b16 %v3122, %v3118
    %v3163 = vpack.c.b16 %v3127, %v3123
    %v3164 = vpack.c.b16 %v3128, %v3124
    %v3165 = vpack.c.b16 %v3129, %v3125
    %v3166 = vpack.c.b16 %v3130, %v3126
    %v3167 = vpack.c.b16 %v3135, %v3131
    %v3168 = vpack.c.b16 %v3136, %v3132
    %v3169 = vpack.c.b16 %v3137, %v3133
    %v3170 = vpack.c.b16 %v3138, %v3134
    %3203 = vmatprep.subr.bf16.mxu0 %v3168
    %3204 = vmatpush1.bf16.msra.mxu0 %v3167
    %3205 = vmatprep.subr.bf16.mxu0 %v3164
    %3206 = vmatpush1.bf16.msra.mxu0 %v3163
    %3207 = vmatprep.subr.bf16.mxu0 %v3160
    %3208 = vmatpush1.bf16.msra.mxu0 %v3159
    %3209 = vmatprep.subr.bf16.mxu0 %v3156
    %3210 = vmatpush1.bf16.msra.mxu0 %v3155
    %3211 = vmatprep.subr.bf16.mxu0 %v3152
    %3212 = vmatpush1.bf16.msra.mxu0 %v3151
    %3213 = vmatprep.subr.bf16.mxu0 %v3148
    %3214 = vmatpush1.bf16.msra.mxu0 %v3147
    %3215 = vmatprep.subr.bf16.mxu0 %v3144
    %3216 = vmatpush1.bf16.msra.mxu0 %v3143
    %3217 = vmatprep.subr.bf16.mxu0 %v3140
    %3218 = vmatpush1.bf16.msra.mxu0 %v3139
    %3219 = vmatprep.subr.bf16.mxu0 0
    %3220 = vmatpush2.bf16.msra.mxu0 0
    %3221 = vmatprep.subr.bf16.mxu0 0
    %3222 = vmatpush2.bf16.msra.mxu0 0
    %3223 = vmatprep.subr.bf16.mxu0 0
    %3224 = vmatpush2.bf16.msra.mxu0 0
    %3225 = vmatprep.subr.bf16.mxu0 0
    %3226 = vmatpush2.bf16.msra.mxu0 0
    %3227 = vmatprep.subr.bf16.mxu0 0
    %3228 = vmatpush2.bf16.msra.mxu0 0
    %3229 = vmatprep.subr.bf16.mxu0 0
    %3230 = vmatpush2.bf16.msra.mxu0 0
    %3231 = vmatprep.subr.bf16.mxu0 0
    %3232 = vmatpush2.bf16.msra.mxu0 0
    %3233 = vmatprep.subr.bf16.mxu0 0
    %3234 = vmatpush2.bf16.msra.mxu0 0
    %3235 = vmatprep.mubr.bf16.mxu0 0
    %3236 = vmatmul.mubr.bf16.gmra.mxu0 0
    %v3237 = vpop.f32.mrf.mxu0
    %v3238 = vadd.f32 0.0, %v3237
    %v3239 = vpop.f32.mrf.mxu0
    %v3240 = vadd.f32 0.0, %v3239
    %v3241 = vpop.f32.mrf.mxu0
    %v3242 = vadd.f32 0.0, %v3241
    %v3243 = vpop.f32.mrf.mxu0
    %v3244 = vadd.f32 0.0, %v3243
    %3245 = vdwg.mxu0
    %3246 = vmatprep.subr.bf16.mxu0 %v3170
    %3247 = vmatpush1.bf16.msra.mxu0 %v3169
    %3248 = vmatprep.subr.bf16.mxu0 %v3166
    %3249 = vmatpush1.bf16.msra.mxu0 %v3165
    %3250 = vmatprep.subr.bf16.mxu0 %v3162
    %3251 = vmatpush1.bf16.msra.mxu0 %v3161
    %3252 = vmatprep.subr.bf16.mxu0 %v3158
    %3253 = vmatpush1.bf16.msra.mxu0 %v3157
    %3254 = vmatprep.subr.bf16.mxu0 %v3154
    %3255 = vmatpush1.bf16.msra.mxu0 %v3153
    %3256 = vmatprep.subr.bf16.mxu0 %v3150
    %3257 = vmatpush1.bf16.msra.mxu0 %v3149
    %3258 = vmatprep.subr.bf16.mxu0 %v3146
    %3259 = vmatpush1.bf16.msra.mxu0 %v3145
    %3260 = vmatprep.subr.bf16.mxu0 %v3142
    %3261 = vmatpush1.bf16.msra.mxu0 %v3141
    %3262 = vmatprep.subr.bf16.mxu0 0
    %3263 = vmatpush2.bf16.msra.mxu0 0
    %3264 = vmatprep.subr.bf16.mxu0 0
    %3265 = vmatpush2.bf16.msra.mxu0 0
    %3266 = vmatprep.subr.bf16.mxu0 0
    %3267 = vmatpush2.bf16.msra.mxu0 0
    %3268 = vmatprep.subr.bf16.mxu0 0
    %3269 = vmatpush2.bf16.msra.mxu0 0
    %3270 = vmatprep.subr.bf16.mxu0 0
    %3271 = vmatpush2.bf16.msra.mxu0 0
    %3272 = vmatprep.subr.bf16.mxu0 0
    %3273 = vmatpush2.bf16.msra.mxu0 0
    %3274 = vmatprep.subr.bf16.mxu0 0
    %3275 = vmatpush2.bf16.msra.mxu0 0
    %3276 = vmatprep.subr.bf16.mxu0 0
    %3277 = vmatpush2.bf16.msra.mxu0 0
    %3278 = vmatprep.mubr.bf16.mxu0 0
    %3279 = vmatmul.mubr.bf16.gmra.mxu0 0
    %v3280 = vpop.f32.mrf.mxu0
    %v3281 = vadd.f32 0.0, %v3280
    %v3282 = vpop.f32.mrf.mxu0
    %v3283 = vadd.f32 0.0, %v3282
    %v3284 = vpop.f32.mrf.mxu0
    %v3285 = vadd.f32 0.0, %v3284
    %v3286 = vpop.f32.mrf.mxu0
    %v3287 = vadd.f32 0.0, %v3286
    %3288 = vdwg.mxu0
    %v3289 = vadd.f32 %v3035, %v3238
    %v3290 = vadd.f32 %v3036, %v3240
    %v3291 = vadd.f32 %v3037, %v3281
    %v3292 = vadd.f32 %v3038, %v3283
    %v3293 = vadd.f32 %v3039, %v3242
    %v3294 = vadd.f32 %v3040, %v3244
    %v3295 = vadd.f32 %v3041, %v3285
    %v3296 = vadd.f32 %v3042, %v3287
    %v3297 = vmul.f32 %v3289, 0.5
    %v3298 = vmul.f32 %v3293, 0.5
    %v3299 = vtanh.pop %v3297
    %v3300 = vtanh.pop %v3298
    %v3301 = vadd.f32 %v3299, 1.0
    %v3302 = vadd.f32 %v3300, 1.0
    %v3303 = vmul.f32 %v3301, 0.5
    %v3304 = vmul.f32 %v3302, 0.5
    %v3305 = vmul.f32 %v3290, 0.5
    %v3306 = vmul.f32 %v3294, 0.5
    %v3307 = vtanh.pop %v3305
    %v3308 = vtanh.pop %v3306
    %v3309 = vadd.f32 %v3307, 1.0
    %v3310 = vadd.f32 %v3308, 1.0
    %v3311 = vmul.f32 %v3309, 0.5
    %v3312 = vmul.f32 %v3310, 0.5
    %v3313 = vtanh.pop %v3291
    %v3314 = vtanh.pop %v3295
    %v3315 = vmul.f32 %v3292, 0.5
    %v3316 = vmul.f32 %v3296, 0.5
    %v3317 = vtanh.pop %v3315
    %v3318 = vtanh.pop %v3316
    %v3319 = vadd.f32 %v3317, 1.0
    %v3320 = vadd.f32 %v3318, 1.0
    %v3321 = vmul.f32 %v3319, 0.5
    %v3322 = vmul.f32 %v3320, 0.5
    %v3323 = vmul.f32 %v3311, 0.0
    %v3324 = vmul.f32 %v3312, 0.0
    %v3325 = vmul.f32 %v3303, %v3313
    %v3326 = vmul.f32 %v3304, %v3314
    %v3327 = vadd.f32 %v3323, %v3325
    %v3328 = vadd.f32 %v3324, %v3326
    %v3329 = vtanh.pop %v3327
    %v3330 = vtanh.pop %v3328
    %v3331 = vmul.f32 %v3321, %v3329
    %v3332 = vmul.f32 %v3322, %v3330
    %v3333 = vld [vmem:[%s1191] sm:$0xff]
    %v3334 = vld [vmem:[%s1191 + $0x8] sm:$0xff]
    %v3335 = vld [vmem:[%s1191 + $0x10] sm:$0xff]
    %v3336 = vld [vmem:[%s1191 + $0x18] sm:$0xff]
    %v3337 = vunpack.c.l.bf16 %v3333
    %v3338 = vunpack.c.h.bf16 %v3333
    %v3339 = vunpack.c.l.bf16 %v3334
    %v3340 = vunpack.c.h.bf16 %v3334
    %v3341 = vunpack.c.l.bf16 %v3335
    %v3342 = vunpack.c.h.bf16 %v3335
    %v3343 = vunpack.c.l.bf16 %v3336
    %v3344 = vunpack.c.h.bf16 %v3336
    %v3345 = vpack.c.bf16 %v3332, %v3331
    %3346 = vmatprep.subr.bf16.mxu0 %v3168
    %3347 = vmatpush1.bf16.msra.mxu0 %v3167
    %3348 = vmatprep.subr.bf16.mxu0 %v3164
    %3349 = vmatpush1.bf16.msra.mxu0 %v3163
    %3350 = vmatprep.subr.bf16.mxu0 %v3160
    %3351 = vmatpush1.bf16.msra.mxu0 %v3159
    %3352 = vmatprep.subr.bf16.mxu0 %v3156
    %3353 = vmatpush1.bf16.msra.mxu0 %v3155
    %3354 = vmatprep.subr.bf16.mxu0 %v3152
    %3355 = vmatpush1.bf16.msra.mxu0 %v3151
    %3356 = vmatprep.subr.bf16.mxu0 %v3148
    %3357 = vmatpush1.bf16.msra.mxu0 %v3147
    %3358 = vmatprep.subr.bf16.mxu0 %v3144
    %3359 = vmatpush1.bf16.msra.mxu0 %v3143
    %3360 = vmatprep.subr.bf16.mxu0 %v3140
    %3361 = vmatpush1.bf16.msra.mxu0 %v3139
    %3362 = vmatprep.subr.bf16.mxu0 0
    %3363 = vmatpush2.bf16.msra.mxu0 0
    %3364 = vmatprep.subr.bf16.mxu0 0
    %3365 = vmatpush2.bf16.msra.mxu0 0
    %3366 = vmatprep.subr.bf16.mxu0 0
    %3367 = vmatpush2.bf16.msra.mxu0 0
    %3368 = vmatprep.subr.bf16.mxu0 0
    %3369 = vmatpush2.bf16.msra.mxu0 0
    %3370 = vmatprep.subr.bf16.mxu0 0
    %3371 = vmatpush2.bf16.msra.mxu0 0
    %3372 = vmatprep.subr.bf16.mxu0 0
    %3373 = vmatpush2.bf16.msra.mxu0 0
    %3374 = vmatprep.subr.bf16.mxu0 0
    %3375 = vmatpush2.bf16.msra.mxu0 0
    %3376 = vmatprep.subr.bf16.mxu0 0
    %3377 = vmatpush2.bf16.msra.mxu0 0
    %3378 = vmatprep.mubr.bf16.mxu0 0
    %3379 = vmatmul.mubr.bf16.gmra.mxu0 %v3345
    %v3380 = vpop.f32.mrf.mxu0
    %v3381 = vadd.f32 0.0, %v3380
    %v3382 = vpop.f32.mrf.mxu0
    %v3383 = vadd.f32 0.0, %v3382
    %v3384 = vpop.f32.mrf.mxu0
    %v3385 = vadd.f32 0.0, %v3384
    %v3386 = vpop.f32.mrf.mxu0
    %v3387 = vadd.f32 0.0, %v3386
    %3388 = vdwg.mxu0
    %3389 = vmatprep.subr.bf16.mxu0 %v3170
    %3390 = vmatpush1.bf16.msra.mxu0 %v3169
    %3391 = vmatprep.subr.bf16.mxu0 %v3166
    %3392 = vmatpush1.bf16.msra.mxu0 %v3165
    %3393 = vmatprep.subr.bf16.mxu0 %v3162
    %3394 = vmatpush1.bf16.msra.mxu0 %v3161
    %3395 = vmatprep.subr.bf16.mxu0 %v3158
    %3396 = vmatpush1.bf16.msra.mxu0 %v3157
    %3397 = vmatprep.subr.bf16.mxu0 %v3154
    %3398 = vmatpush1.bf16.msra.mxu0 %v3153
    %3399 = vmatprep.subr.bf16.mxu0 %v3150
    %3400 = vmatpush1.bf16.msra.mxu0 %v3149
    %3401 = vmatprep.subr.bf16.mxu0 %v3146
    %3402 = vmatpush1.bf16.msra.mxu0 %v3145
    %3403 = vmatprep.subr.bf16.mxu0 %v3142
    %3404 = vmatpush1.bf16.msra.mxu0 %v3141
    %3405 = vmatprep.subr.bf16.mxu0 0
    %3406 = vmatpush2.bf16.msra.mxu0 0
    %3407 = vmatprep.subr.bf16.mxu0 0
    %3408 = vmatpush2.bf16.msra.mxu0 0
    %3409 = vmatprep.subr.bf16.mxu0 0
    %3410 = vmatpush2.bf16.msra.mxu0 0
    %3411 = vmatprep.subr.bf16.mxu0 0
    %3412 = vmatpush2.bf16.msra.mxu0 0
    %3413 = vmatprep.subr.bf16.mxu0 0
    %3414 = vmatpush2.bf16.msra.mxu0 0
    %3415 = vmatprep.subr.bf16.mxu0 0
    %3416 = vmatpush2.bf16.msra.mxu0 0
    %3417 = vmatprep.subr.bf16.mxu0 0
    %3418 = vmatpush2.bf16.msra.mxu0 0
    %3419 = vmatprep.subr.bf16.mxu0 0
    %3420 = vmatpush2.bf16.msra.mxu0 0
    %3421 = vmatprep.mubr.bf16.mxu0 0
    %3422 = vmatmul.mubr.bf16.gmra.mxu0 %v3345
    %v3423 = vpop.f32.mrf.mxu0
    %v3424 = vadd.f32 0.0, %v3423
    %v3425 = vpop.f32.mrf.mxu0
    %v3426 = vadd.f32 0.0, %v3425
    %v3427 = vpop.f32.mrf.mxu0
    %v3428 = vadd.f32 0.0, %v3427
    %v3429 = vpop.f32.mrf.mxu0
    %v3430 = vadd.f32 0.0, %v3429
    %3431 = vdwg.mxu0
    %v3432 = vadd.f32 %v3337, %v3381
    %v3433 = vadd.f32 %v3338, %v3383
    %v3434 = vadd.f32 %v3339, %v3424
    %v3435 = vadd.f32 %v3340, %v3426
    %v3436 = vadd.f32 %v3341, %v3385
    %v3437 = vadd.f32 %v3342, %v3387
    %v3438 = vadd.f32 %v3343, %v3428
    %v3439 = vadd.f32 %v3344, %v3430
    %v3440 = vmul.f32 %v3432, 0.5
    %v3441 = vmul.f32 %v3436, 0.5
    %v3442 = vtanh.pop %v3440
    %v3443 = vtanh.pop %v3441
    %v3444 = vadd.f32 %v3442, 1.0
    %v3445 = vadd.f32 %v3443, 1.0
    %v3446 = vmul.f32 %v3444, 0.5
    %v3447 = vmul.f32 %v3445, 0.5
    %v3448 = vmul.f32 %v3433, 0.5
    %v3449 = vmul.f32 %v3437, 0.5
    %v3450 = vtanh.pop %v3448
    %v3451 = vtanh.pop %v3449
    %v3452 = vadd.f32 %v3450, 1.0
    %v3453 = vadd.f32 %v3451, 1.0
    %v3454 = vmul.f32 %v3452, 0.5
    %v3455 = vmul.f32 %v3453, 0.5
    %v3456 = vtanh.pop %v3434
    %v3457 = vtanh.pop %v3438
    %v3458 = vmul.f32 %v3435, 0.5
    %v3459 = vmul.f32 %v3439, 0.5
    %v3460 = vtanh.pop %v3458
    %v3461 = vtanh.pop %v3459
    %v3462 = vadd.f32 %v3460, 1.0
    %v3463 = vadd.f32 %v3461, 1.0
    %v3464 = vmul.f32 %v3462, 0.5
    %v3465 = vmul.f32 %v3463, 0.5
    %v3466 = vmul.f32 %v3454, %v3327
    %v3467 = vmul.f32 %v3455, %v3328
    %v3468 = vmul.f32 %v3446, %v3456
    %v3469 = vmul.f32 %v3447, %v3457
    %v3470 = vadd.f32 %v3466, %v3468
    %v3471 = vadd.f32 %v3467, %v3469
    %v3472 = vtanh.pop %v3470
    %v3473 = vtanh.pop %v3471
    %v3474 = vmul.f32 %v3464, %v3472
    %v3475 = vmul.f32 %v3465, %v3473
    %v3476 = vld [vmem:[%s1345] sm:$0xff]
    %v3477 = vld [vmem:[%s1345 + $0x8] sm:$0xff]
    %v3478 = vld [vmem:[%s1345 + $0x10] sm:$0xff]
    %v3479 = vld [vmem:[%s1345 + $0x18] sm:$0xff]
    %v3480 = vunpack.c.l.bf16 %v3476
    %v3481 = vunpack.c.h.bf16 %v3476
    %v3482 = vunpack.c.l.bf16 %v3477
    %v3483 = vunpack.c.h.bf16 %v3477
    %v3484 = vunpack.c.l.bf16 %v3478
    %v3485 = vunpack.c.h.bf16 %v3478
    %v3486 = vunpack.c.l.bf16 %v3479
    %v3487 = vunpack.c.h.bf16 %v3479
    %v3488 = vpack.c.bf16 %v3475, %v3474
    %3489 = vmatprep.subr.bf16.mxu0 %v3168
    %3490 = vmatpush1.bf16.msra.mxu0 %v3167
    %3491 = vmatprep.subr.bf16.mxu0 %v3164
    %3492 = vmatpush1.bf16.msra.mxu0 %v3163
    %3493 = vmatprep.subr.bf16.mxu0 %v3160
    %3494 = vmatpush1.bf16.msra.mxu0 %v3159
    %3495 = vmatprep.subr.bf16.mxu0 %v3156
    %3496 = vmatpush1.bf16.msra.mxu0 %v3155
    %3497 = vmatprep.subr.bf16.mxu0 %v3152
    %3498 = vmatpush1.bf16.msra.mxu0 %v3151
    %3499 = vmatprep.subr.bf16.mxu0 %v3148
    %3500 = vmatpush1.bf16.msra.mxu0 %v3147
    %3501 = vmatprep.subr.bf16.mxu0 %v3144
    %3502 = vmatpush1.bf16.msra.mxu0 %v3143
    %3503 = vmatprep.subr.bf16.mxu0 %v3140
    %3504 = vmatpush1.bf16.msra.mxu0 %v3139
    %3505 = vmatprep.subr.bf16.mxu0 0
    %3506 = vmatpush2.bf16.msra.mxu0 0
    %3507 = vmatprep.subr.bf16.mxu0 0
    %3508 = vmatpush2.bf16.msra.mxu0 0
    %3509 = vmatprep.subr.bf16.mxu0 0
    %3510 = vmatpush2.bf16.msra.mxu0 0
    %3511 = vmatprep.subr.bf16.mxu0 0
    %3512 = vmatpush2.bf16.msra.mxu0 0
    %3513 = vmatprep.subr.bf16.mxu0 0
    %3514 = vmatpush2.bf16.msra.mxu0 0
    %3515 = vmatprep.subr.bf16.mxu0 0
    %3516 = vmatpush2.bf16.msra.mxu0 0
    %3517 = vmatprep.subr.bf16.mxu0 0
    %3518 = vmatpush2.bf16.msra.mxu0 0
    %3519 = vmatprep.subr.bf16.mxu0 0
    %3520 = vmatpush2.bf16.msra.mxu0 0
    %3521 = vmatprep.mubr.bf16.mxu0 0
    %3522 = vmatmul.mubr.bf16.gmra.mxu0 %v3488
    %v3523 = vpop.f32.mrf.mxu0
    %v3524 = vadd.f32 0.0, %v3523
    %v3525 = vpop.f32.mrf.mxu0
    %v3526 = vadd.f32 0.0, %v3525
    %v3527 = vpop.f32.mrf.mxu0
    %v3528 = vadd.f32 0.0, %v3527
    %v3529 = vpop.f32.mrf.mxu0
    %v3530 = vadd.f32 0.0, %v3529
    %3531 = vdwg.mxu0
    %3532 = vmatprep.subr.bf16.mxu0 %v3170
    %3533 = vmatpush1.bf16.msra.mxu0 %v3169
    %3534 = vmatprep.subr.bf16.mxu0 %v3166
    %3535 = vmatpush1.bf16.msra.mxu0 %v3165
    %3536 = vmatprep.subr.bf16.mxu0 %v3162
    %3537 = vmatpush1.bf16.msra.mxu0 %v3161
    %3538 = vmatprep.subr.bf16.mxu0 %v3158
    %3539 = vmatpush1.bf16.msra.mxu0 %v3157
    %3540 = vmatprep.subr.bf16.mxu0 %v3154
    %3541 = vmatpush1.bf16.msra.mxu0 %v3153
    %3542 = vmatprep.subr.bf16.mxu0 %v3150
    %3543 = vmatpush1.bf16.msra.mxu0 %v3149
    %3544 = vmatprep.subr.bf16.mxu0 %v3146
    %3545 = vmatpush1.bf16.msra.mxu0 %v3145
    %3546 = vmatprep.subr.bf16.mxu0 %v3142
    %3547 = vmatpush1.bf16.msra.mxu0 %v3141
    %3548 = vmatprep.subr.bf16.mxu0 0
    %3549 = vmatpush2.bf16.msra.mxu0 0
    %3550 = vmatprep.subr.bf16.mxu0 0
    %3551 = vmatpush2.bf16.msra.mxu0 0
    %3552 = vmatprep.subr.bf16.mxu0 0
    %3553 = vmatpush2.bf16.msra.mxu0 0
    %3554 = vmatprep.subr.bf16.mxu0 0
    %3555 = vmatpush2.bf16.msra.mxu0 0
    %3556 = vmatprep.subr.bf16.mxu0 0
    %3557 = vmatpush2.bf16.msra.mxu0 0
    %3558 = vmatprep.subr.bf16.mxu0 0
    %3559 = vmatpush2.bf16.msra.mxu0 0
    %3560 = vmatprep.subr.bf16.mxu0 0
    %3561 = vmatpush2.bf16.msra.mxu0 0
    %3562 = vmatprep.subr.bf16.mxu0 0
    %3563 = vmatpush2.bf16.msra.mxu0 0
    %3564 = vmatprep.mubr.bf16.mxu0 0
    %3565 = vmatmul.mubr.bf16.gmra.mxu0 %v3488
    %v3566 = vpop.f32.mrf.mxu0
    %v3567 = vadd.f32 0.0, %v3566
    %v3568 = vpop.f32.mrf.mxu0
    %v3569 = vadd.f32 0.0, %v3568
    %v3570 = vpop.f32.mrf.mxu0
    %v3571 = vadd.f32 0.0, %v3570
    %v3572 = vpop.f32.mrf.mxu0
    %v3573 = vadd.f32 0.0, %v3572
    %3574 = vdwg.mxu0
    %v3575 = vadd.f32 %v3480, %v3524
    %v3576 = vadd.f32 %v3481, %v3526
    %v3577 = vadd.f32 %v3482, %v3567
    %v3578 = vadd.f32 %v3483, %v3569
    %v3579 = vadd.f32 %v3484, %v3528
    %v3580 = vadd.f32 %v3485, %v3530
    %v3581 = vadd.f32 %v3486, %v3571
    %v3582 = vadd.f32 %v3487, %v3573
    %v3583 = vmul.f32 %v3575, 0.5
    %v3584 = vmul.f32 %v3579, 0.5
    %v3585 = vtanh.pop %v3583
    %v3586 = vtanh.pop %v3584
    %v3587 = vadd.f32 %v3585, 1.0
    %v3588 = vadd.f32 %v3586, 1.0
    %v3589 = vmul.f32 %v3587, 0.5
    %v3590 = vmul.f32 %v3588, 0.5
    %v3591 = vmul.f32 %v3576, 0.5
    %v3592 = vmul.f32 %v3580, 0.5
    %v3593 = vtanh.pop %v3591
    %v3594 = vtanh.pop %v3592
    %v3595 = vadd.f32 %v3593, 1.0
    %v3596 = vadd.f32 %v3594, 1.0
    %v3597 = vmul.f32 %v3595, 0.5
    %v3598 = vmul.f32 %v3596, 0.5
    %v3599 = vtanh.pop %v3577
    %v3600 = vtanh.pop %v3581
    %v3601 = vmul.f32 %v3578, 0.5
    %v3602 = vmul.f32 %v3582, 0.5
    %v3603 = vtanh.pop %v3601
    %v3604 = vtanh.pop %v3602
    %v3605 = vadd.f32 %v3603, 1.0
    %v3606 = vadd.f32 %v3604, 1.0
    %v3607 = vmul.f32 %v3605, 0.5
    %v3608 = vmul.f32 %v3606, 0.5
    %v3609 = vmul.f32 %v3597, %v3470
    %v3610 = vmul.f32 %v3598, %v3471
    %v3611 = vmul.f32 %v3589, %v3599
    %v3612 = vmul.f32 %v3590, %v3600
    %v3613 = vadd.f32 %v3609, %v3611
    %v3614 = vadd.f32 %v3610, %v3612
    %v3615 = vtanh.pop %v3613
    %v3616 = vtanh.pop %v3614
    %v3617 = vmul.f32 %v3607, %v3615
    %v3618 = vmul.f32 %v3608, %v3616
    %v3619 = vld [vmem:[%s1499] sm:$0xff]
    %v3620 = vld [vmem:[%s1499 + $0x8] sm:$0xff]
    %v3621 = vld [vmem:[%s1499 + $0x10] sm:$0xff]
    %v3622 = vld [vmem:[%s1499 + $0x18] sm:$0xff]
    %v3623 = vunpack.c.l.bf16 %v3619
    %v3624 = vunpack.c.h.bf16 %v3619
    %v3625 = vunpack.c.l.bf16 %v3620
    %v3626 = vunpack.c.h.bf16 %v3620
    %v3627 = vunpack.c.l.bf16 %v3621
    %v3628 = vunpack.c.h.bf16 %v3621
    %v3629 = vunpack.c.l.bf16 %v3622
    %v3630 = vunpack.c.h.bf16 %v3622
    %v3631 = vpack.c.bf16 %v3618, %v3617
    %3632 = vmatprep.subr.bf16.mxu0 %v3168
    %3633 = vmatpush1.bf16.msra.mxu0 %v3167
    %3634 = vmatprep.subr.bf16.mxu0 %v3164
    %3635 = vmatpush1.bf16.msra.mxu0 %v3163
    %3636 = vmatprep.subr.bf16.mxu0 %v3160
    %3637 = vmatpush1.bf16.msra.mxu0 %v3159
    %3638 = vmatprep.subr.bf16.mxu0 %v3156
    %3639 = vmatpush1.bf16.msra.mxu0 %v3155
    %3640 = vmatprep.subr.bf16.mxu0 %v3152
    %3641 = vmatpush1.bf16.msra.mxu0 %v3151
    %3642 = vmatprep.subr.bf16.mxu0 %v3148
    %3643 = vmatpush1.bf16.msra.mxu0 %v3147
    %3644 = vmatprep.subr.bf16.mxu0 %v3144
    %3645 = vmatpush1.bf16.msra.mxu0 %v3143
    %3646 = vmatprep.subr.bf16.mxu0 %v3140
    %3647 = vmatpush1.bf16.msra.mxu0 %v3139
    %3648 = vmatprep.subr.bf16.mxu0 0
    %3649 = vmatpush2.bf16.msra.mxu0 0
    %3650 = vmatprep.subr.bf16.mxu0 0
    %3651 = vmatpush2.bf16.msra.mxu0 0
    %3652 = vmatprep.subr.bf16.mxu0 0
    %3653 = vmatpush2.bf16.msra.mxu0 0
    %3654 = vmatprep.subr.bf16.mxu0 0
    %3655 = vmatpush2.bf16.msra.mxu0 0
    %3656 = vmatprep.subr.bf16.mxu0 0
    %3657 = vmatpush2.bf16.msra.mxu0 0
    %3658 = vmatprep.subr.bf16.mxu0 0
    %3659 = vmatpush2.bf16.msra.mxu0 0
    %3660 = vmatprep.subr.bf16.mxu0 0
    %3661 = vmatpush2.bf16.msra.mxu0 0
    %3662 = vmatprep.subr.bf16.mxu0 0
    %3663 = vmatpush2.bf16.msra.mxu0 0
    %3664 = vmatprep.mubr.bf16.mxu0 0
    %3665 = vmatmul.mubr.bf16.gmra.mxu0 %v3631
    %v3666 = vpop.f32.mrf.mxu0
    %v3667 = vadd.f32 0.0, %v3666
    %v3668 = vpop.f32.mrf.mxu0
    %v3669 = vadd.f32 0.0, %v3668
    %v3670 = vpop.f32.mrf.mxu0
    %v3671 = vadd.f32 0.0, %v3670
    %v3672 = vpop.f32.mrf.mxu0
    %v3673 = vadd.f32 0.0, %v3672
    %3674 = vdwg.mxu0
    %3675 = vmatprep.subr.bf16.mxu0 %v3170
    %3676 = vmatpush1.bf16.msra.mxu0 %v3169
    %3677 = vmatprep.subr.bf16.mxu0 %v3166
    %3678 = vmatpush1.bf16.msra.mxu0 %v3165
    %3679 = vmatprep.subr.bf16.mxu0 %v3162
    %3680 = vmatpush1.bf16.msra.mxu0 %v3161
    %3681 = vmatprep.subr.bf16.mxu0 %v3158
    %3682 = vmatpush1.bf16.msra.mxu0 %v3157
    %3683 = vmatprep.subr.bf16.mxu0 %v3154
    %3684 = vmatpush1.bf16.msra.mxu0 %v3153
    %3685 = vmatprep.subr.bf16.mxu0 %v3150
    %3686 = vmatpush1.bf16.msra.mxu0 %v3149
    %3687 = vmatprep.subr.bf16.mxu0 %v3146
    %3688 = vmatpush1.bf16.msra.mxu0 %v3145
    %3689 = vmatprep.subr.bf16.mxu0 %v3142
    %3690 = vmatpush1.bf16.msra.mxu0 %v3141
    %3691 = vmatprep.subr.bf16.mxu0 0
    %3692 = vmatpush2.bf16.msra.mxu0 0
    %3693 = vmatprep.subr.bf16.mxu0 0
    %3694 = vmatpush2.bf16.msra.mxu0 0
    %3695 = vmatprep.subr.bf16.mxu0 0
    %3696 = vmatpush2.bf16.msra.mxu0 0
    %3697 = vmatprep.subr.bf16.mxu0 0
    %3698 = vmatpush2.bf16.msra.mxu0 0
    %3699 = vmatprep.subr.bf16.mxu0 0
    %3700 = vmatpush2.bf16.msra.mxu0 0
    %3701 = vmatprep.subr.bf16.mxu0 0
    %3702 = vmatpush2.bf16.msra.mxu0 0
    %3703 = vmatprep.subr.bf16.mxu0 0
    %3704 = vmatpush2.bf16.msra.mxu0 0
    %3705 = vmatprep.subr.bf16.mxu0 0
    %3706 = vmatpush2.bf16.msra.mxu0 0
    %3707 = vmatprep.mubr.bf16.mxu0 0
    %3708 = vmatmul.mubr.bf16.gmra.mxu0 %v3631
    %v3709 = vpop.f32.mrf.mxu0
    %v3710 = vadd.f32 0.0, %v3709
    %v3711 = vpop.f32.mrf.mxu0
    %v3712 = vadd.f32 0.0, %v3711
    %v3713 = vpop.f32.mrf.mxu0
    %v3714 = vadd.f32 0.0, %v3713
    %v3715 = vpop.f32.mrf.mxu0
    %v3716 = vadd.f32 0.0, %v3715
    %3717 = vdwg.mxu0
    %v3718 = vadd.f32 %v3623, %v3667
    %v3719 = vadd.f32 %v3624, %v3669
    %v3720 = vadd.f32 %v3625, %v3710
    %v3721 = vadd.f32 %v3626, %v3712
    %v3722 = vadd.f32 %v3627, %v3671
    %v3723 = vadd.f32 %v3628, %v3673
    %v3724 = vadd.f32 %v3629, %v3714
    %v3725 = vadd.f32 %v3630, %v3716
    %v3726 = vmul.f32 %v3718, 0.5
    %v3727 = vmul.f32 %v3722, 0.5
    %v3728 = vtanh.pop %v3726
    %v3729 = vtanh.pop %v3727
    %v3730 = vadd.f32 %v3728, 1.0
    %v3731 = vadd.f32 %v3729, 1.0
    %v3732 = vmul.f32 %v3730, 0.5
    %v3733 = vmul.f32 %v3731, 0.5
    %v3734 = vmul.f32 %v3719, 0.5
    %v3735 = vmul.f32 %v3723, 0.5
    %v3736 = vtanh.pop %v3734
    %v3737 = vtanh.pop %v3735
    %v3738 = vadd.f32 %v3736, 1.0
    %v3739 = vadd.f32 %v3737, 1.0
    %v3740 = vmul.f32 %v3738, 0.5
    %v3741 = vmul.f32 %v3739, 0.5
    %v3742 = vtanh.pop %v3720
    %v3743 = vtanh.pop %v3724
    %v3744 = vmul.f32 %v3721, 0.5
    %v3745 = vmul.f32 %v3725, 0.5
    %v3746 = vtanh.pop %v3744
    %v3747 = vtanh.pop %v3745
    %v3748 = vadd.f32 %v3746, 1.0
    %v3749 = vadd.f32 %v3747, 1.0
    %v3750 = vmul.f32 %v3748, 0.5
    %v3751 = vmul.f32 %v3749, 0.5
    %v3752 = vmul.f32 %v3740, %v3613
    %v3753 = vmul.f32 %v3741, %v3614
    %v3754 = vmul.f32 %v3732, %v3742
    %v3755 = vmul.f32 %v3733, %v3743
    %v3756 = vadd.f32 %v3752, %v3754
    %v3757 = vadd.f32 %v3753, %v3755
    %v3758 = vtanh.pop %v3756
    %v3759 = vtanh.pop %v3757
    %v3760 = vmul.f32 %v3750, %v3758
    %v3761 = vmul.f32 %v3751, %v3759
    %v3762 = vld [vmem:[%s1653] sm:$0xff]
    %v3763 = vld [vmem:[%s1653 + $0x8] sm:$0xff]
    %v3764 = vld [vmem:[%s1653 + $0x10] sm:$0xff]
    %v3765 = vld [vmem:[%s1653 + $0x18] sm:$0xff]
    %v3766 = vunpack.c.l.bf16 %v3762
    %v3767 = vunpack.c.h.bf16 %v3762
    %v3768 = vunpack.c.l.bf16 %v3763
    %v3769 = vunpack.c.h.bf16 %v3763
    %v3770 = vunpack.c.l.bf16 %v3764
    %v3771 = vunpack.c.h.bf16 %v3764
    %v3772 = vunpack.c.l.bf16 %v3765
    %v3773 = vunpack.c.h.bf16 %v3765
    %v3774 = vpack.c.bf16 %v3761, %v3760
    %3775 = vmatprep.subr.bf16.mxu0 %v3168
    %3776 = vmatpush1.bf16.msra.mxu0 %v3167
    %3777 = vmatprep.subr.bf16.mxu0 %v3164
    %3778 = vmatpush1.bf16.msra.mxu0 %v3163
    %3779 = vmatprep.subr.bf16.mxu0 %v3160
    %3780 = vmatpush1.bf16.msra.mxu0 %v3159
    %3781 = vmatprep.subr.bf16.mxu0 %v3156
    %3782 = vmatpush1.bf16.msra.mxu0 %v3155
    %3783 = vmatprep.subr.bf16.mxu0 %v3152
    %3784 = vmatpush1.bf16.msra.mxu0 %v3151
    %3785 = vmatprep.subr.bf16.mxu0 %v3148
    %3786 = vmatpush1.bf16.msra.mxu0 %v3147
    %3787 = vmatprep.subr.bf16.mxu0 %v3144
    %3788 = vmatpush1.bf16.msra.mxu0 %v3143
    %3789 = vmatprep.subr.bf16.mxu0 %v3140
    %3790 = vmatpush1.bf16.msra.mxu0 %v3139
    %3791 = vmatprep.subr.bf16.mxu0 0
    %3792 = vmatpush2.bf16.msra.mxu0 0
    %3793 = vmatprep.subr.bf16.mxu0 0
    %3794 = vmatpush2.bf16.msra.mxu0 0
    %3795 = vmatprep.subr.bf16.mxu0 0
    %3796 = vmatpush2.bf16.msra.mxu0 0
    %3797 = vmatprep.subr.bf16.mxu0 0
    %3798 = vmatpush2.bf16.msra.mxu0 0
    %3799 = vmatprep.subr.bf16.mxu0 0
    %3800 = vmatpush2.bf16.msra.mxu0 0
    %3801 = vmatprep.subr.bf16.mxu0 0
    %3802 = vmatpush2.bf16.msra.mxu0 0
    %3803 = vmatprep.subr.bf16.mxu0 0
    %3804 = vmatpush2.bf16.msra.mxu0 0
    %3805 = vmatprep.subr.bf16.mxu0 0
    %3806 = vmatpush2.bf16.msra.mxu0 0
    %3807 = vmatprep.mubr.bf16.mxu0 0
    %3808 = vmatmul.mubr.bf16.gmra.mxu0 %v3774
    %v3809 = vpop.f32.mrf.mxu0
    %v3810 = vadd.f32 0.0, %v3809
    %v3811 = vpop.f32.mrf.mxu0
    %v3812 = vadd.f32 0.0, %v3811
    %v3813 = vpop.f32.mrf.mxu0
    %v3814 = vadd.f32 0.0, %v3813
    %v3815 = vpop.f32.mrf.mxu0
    %v3816 = vadd.f32 0.0, %v3815
    %3817 = vdwg.mxu0
    %3818 = vmatprep.subr.bf16.mxu0 %v3170
    %3819 = vmatpush1.bf16.msra.mxu0 %v3169
    %3820 = vmatprep.subr.bf16.mxu0 %v3166
    %3821 = vmatpush1.bf16.msra.mxu0 %v3165
    %3822 = vmatprep.subr.bf16.mxu0 %v3162
    %3823 = vmatpush1.bf16.msra.mxu0 %v3161
    %3824 = vmatprep.subr.bf16.mxu0 %v3158
    %3825 = vmatpush1.bf16.msra.mxu0 %v3157
    %3826 = vmatprep.subr.bf16.mxu0 %v3154
    %3827 = vmatpush1.bf16.msra.mxu0 %v3153
    %3828 = vmatprep.subr.bf16.mxu0 %v3150
    %3829 = vmatpush1.bf16.msra.mxu0 %v3149
    %3830 = vmatprep.subr.bf16.mxu0 %v3146
    %3831 = vmatpush1.bf16.msra.mxu0 %v3145
    %3832 = vmatprep.subr.bf16.mxu0 %v3142
    %3833 = vmatpush1.bf16.msra.mxu0 %v3141
    %3834 = vmatprep.subr.bf16.mxu0 0
    %3835 = vmatpush2.bf16.msra.mxu0 0
    %3836 = vmatprep.subr.bf16.mxu0 0
    %3837 = vmatpush2.bf16.msra.mxu0 0
    %3838 = vmatprep.subr.bf16.mxu0 0
    %3839 = vmatpush2.bf16.msra.mxu0 0
    %3840 = vmatprep.subr.bf16.mxu0 0
    %3841 = vmatpush2.bf16.msra.mxu0 0
    %3842 = vmatprep.subr.bf16.mxu0 0
    %3843 = vmatpush2.bf16.msra.mxu0 0
    %3844 = vmatprep.subr.bf16.mxu0 0
    %3845 = vmatpush2.bf16.msra.mxu0 0
    %3846 = vmatprep.subr.bf16.mxu0 0
    %3847 = vmatpush2.bf16.msra.mxu0 0
    %3848 = vmatprep.subr.bf16.mxu0 0
    %3849 = vmatpush2.bf16.msra.mxu0 0
    %3850 = vmatprep.mubr.bf16.mxu0 0
    %3851 = vmatmul.mubr.bf16.gmra.mxu0 %v3774
    %v3852 = vpop.f32.mrf.mxu0
    %v3853 = vadd.f32 0.0, %v3852
    %v3854 = vpop.f32.mrf.mxu0
    %v3855 = vadd.f32 0.0, %v3854
    %v3856 = vpop.f32.mrf.mxu0
    %v3857 = vadd.f32 0.0, %v3856
    %v3858 = vpop.f32.mrf.mxu0
    %v3859 = vadd.f32 0.0, %v3858
    %3860 = vdwg.mxu0
    %v3861 = vadd.f32 %v3766, %v3810
    %v3862 = vadd.f32 %v3767, %v3812
    %v3863 = vadd.f32 %v3768, %v3853
    %v3864 = vadd.f32 %v3769, %v3855
    %v3865 = vadd.f32 %v3770, %v3814
    %v3866 = vadd.f32 %v3771, %v3816
    %v3867 = vadd.f32 %v3772, %v3857
    %v3868 = vadd.f32 %v3773, %v3859
    %v3869 = vmul.f32 %v3861, 0.5
    %v3870 = vmul.f32 %v3865, 0.5
    %v3871 = vtanh.pop %v3869
    %v3872 = vtanh.pop %v3870
    %v3873 = vadd.f32 %v3871, 1.0
    %v3874 = vadd.f32 %v3872, 1.0
    %v3875 = vmul.f32 %v3873, 0.5
    %v3876 = vmul.f32 %v3874, 0.5
    %v3877 = vmul.f32 %v3862, 0.5
    %v3878 = vmul.f32 %v3866, 0.5
    %v3879 = vtanh.pop %v3877
    %v3880 = vtanh.pop %v3878
    %v3881 = vadd.f32 %v3879, 1.0
    %v3882 = vadd.f32 %v3880, 1.0
    %v3883 = vmul.f32 %v3881, 0.5
    %v3884 = vmul.f32 %v3882, 0.5
    %v3885 = vtanh.pop %v3863
    %v3886 = vtanh.pop %v3867
    %v3887 = vmul.f32 %v3864, 0.5
    %v3888 = vmul.f32 %v3868, 0.5
    %v3889 = vtanh.pop %v3887
    %v3890 = vtanh.pop %v3888
    %v3891 = vadd.f32 %v3889, 1.0
    %v3892 = vadd.f32 %v3890, 1.0
    %v3893 = vmul.f32 %v3891, 0.5
    %v3894 = vmul.f32 %v3892, 0.5
    %v3895 = vmul.f32 %v3883, %v3756
    %v3896 = vmul.f32 %v3884, %v3757
    %v3897 = vmul.f32 %v3875, %v3885
    %v3898 = vmul.f32 %v3876, %v3886
    %v3899 = vadd.f32 %v3895, %v3897
    %v3900 = vadd.f32 %v3896, %v3898
    %v3901 = vtanh.pop %v3899
    %v3902 = vtanh.pop %v3900
    %v3903 = vmul.f32 %v3893, %v3901
    %v3904 = vmul.f32 %v3894, %v3902
    %v3905 = vld [vmem:[%s1807] sm:$0xff]
    %v3906 = vld [vmem:[%s1807 + $0x8] sm:$0xff]
    %v3907 = vld [vmem:[%s1807 + $0x10] sm:$0xff]
    %v3908 = vld [vmem:[%s1807 + $0x18] sm:$0xff]
    %v3909 = vunpack.c.l.bf16 %v3905
    %v3910 = vunpack.c.h.bf16 %v3905
    %v3911 = vunpack.c.l.bf16 %v3906
    %v3912 = vunpack.c.h.bf16 %v3906
    %v3913 = vunpack.c.l.bf16 %v3907
    %v3914 = vunpack.c.h.bf16 %v3907
    %v3915 = vunpack.c.l.bf16 %v3908
    %v3916 = vunpack.c.h.bf16 %v3908
    %v3917 = vpack.c.bf16 %v3904, %v3903
    %3918 = vmatprep.subr.bf16.mxu0 %v3168
    %3919 = vmatpush1.bf16.msra.mxu0 %v3167
    %3920 = vmatprep.subr.bf16.mxu0 %v3164
    %3921 = vmatpush1.bf16.msra.mxu0 %v3163
    %3922 = vmatprep.subr.bf16.mxu0 %v3160
    %3923 = vmatpush1.bf16.msra.mxu0 %v3159
    %3924 = vmatprep.subr.bf16.mxu0 %v3156
    %3925 = vmatpush1.bf16.msra.mxu0 %v3155
    %3926 = vmatprep.subr.bf16.mxu0 %v3152
    %3927 = vmatpush1.bf16.msra.mxu0 %v3151
    %3928 = vmatprep.subr.bf16.mxu0 %v3148
    %3929 = vmatpush1.bf16.msra.mxu0 %v3147
    %3930 = vmatprep.subr.bf16.mxu0 %v3144
    %3931 = vmatpush1.bf16.msra.mxu0 %v3143
    %3932 = vmatprep.subr.bf16.mxu0 %v3140
    %3933 = vmatpush1.bf16.msra.mxu0 %v3139
    %3934 = vmatprep.subr.bf16.mxu0 0
    %3935 = vmatpush2.bf16.msra.mxu0 0
    %3936 = vmatprep.subr.bf16.mxu0 0
    %3937 = vmatpush2.bf16.msra.mxu0 0
    %3938 = vmatprep.subr.bf16.mxu0 0
    %3939 = vmatpush2.bf16.msra.mxu0 0
    %3940 = vmatprep.subr.bf16.mxu0 0
    %3941 = vmatpush2.bf16.msra.mxu0 0
    %3942 = vmatprep.subr.bf16.mxu0 0
    %3943 = vmatpush2.bf16.msra.mxu0 0
    %3944 = vmatprep.subr.bf16.mxu0 0
    %3945 = vmatpush2.bf16.msra.mxu0 0
    %3946 = vmatprep.subr.bf16.mxu0 0
    %3947 = vmatpush2.bf16.msra.mxu0 0
    %3948 = vmatprep.subr.bf16.mxu0 0
    %3949 = vmatpush2.bf16.msra.mxu0 0
    %3950 = vmatprep.mubr.bf16.mxu0 0
    %3951 = vmatmul.mubr.bf16.gmra.mxu0 %v3917
    %v3952 = vpop.f32.mrf.mxu0
    %v3953 = vadd.f32 0.0, %v3952
    %v3954 = vpop.f32.mrf.mxu0
    %v3955 = vadd.f32 0.0, %v3954
    %v3956 = vpop.f32.mrf.mxu0
    %v3957 = vadd.f32 0.0, %v3956
    %v3958 = vpop.f32.mrf.mxu0
    %v3959 = vadd.f32 0.0, %v3958
    %3960 = vdwg.mxu0
    %3961 = vmatprep.subr.bf16.mxu0 %v3170
    %3962 = vmatpush1.bf16.msra.mxu0 %v3169
    %3963 = vmatprep.subr.bf16.mxu0 %v3166
    %3964 = vmatpush1.bf16.msra.mxu0 %v3165
    %3965 = vmatprep.subr.bf16.mxu0 %v3162
    %3966 = vmatpush1.bf16.msra.mxu0 %v3161
    %3967 = vmatprep.subr.bf16.mxu0 %v3158
    %3968 = vmatpush1.bf16.msra.mxu0 %v3157
    %3969 = vmatprep.subr.bf16.mxu0 %v3154
    %3970 = vmatpush1.bf16.msra.mxu0 %v3153
    %3971 = vmatprep.subr.bf16.mxu0 %v3150
    %3972 = vmatpush1.bf16.msra.mxu0 %v3149
    %3973 = vmatprep.subr.bf16.mxu0 %v3146
    %3974 = vmatpush1.bf16.msra.mxu0 %v3145
    %3975 = vmatprep.subr.bf16.mxu0 %v3142
    %3976 = vmatpush1.bf16.msra.mxu0 %v3141
    %3977 = vmatprep.subr.bf16.mxu0 0
    %3978 = vmatpush2.bf16.msra.mxu0 0
    %3979 = vmatprep.subr.bf16.mxu0 0
    %3980 = vmatpush2.bf16.msra.mxu0 0
    %3981 = vmatprep.subr.bf16.mxu0 0
    %3982 = vmatpush2.bf16.msra.mxu0 0
    %3983 = vmatprep.subr.bf16.mxu0 0
    %3984 = vmatpush2.bf16.msra.mxu0 0
    %3985 = vmatprep.subr.bf16.mxu0 0
    %3986 = vmatpush2.bf16.msra.mxu0 0
    %3987 = vmatprep.subr.bf16.mxu0 0
    %3988 = vmatpush2.bf16.msra.mxu0 0
    %3989 = vmatprep.subr.bf16.mxu0 0
    %3990 = vmatpush2.bf16.msra.mxu0 0
    %3991 = vmatprep.subr.bf16.mxu0 0
    %3992 = vmatpush2.bf16.msra.mxu0 0
    %3993 = vmatprep.mubr.bf16.mxu0 0
    %3994 = vmatmul.mubr.bf16.gmra.mxu0 %v3917
    %v3995 = vpop.f32.mrf.mxu0
    %v3996 = vadd.f32 0.0, %v3995
    %v3997 = vpop.f32.mrf.mxu0
    %v3998 = vadd.f32 0.0, %v3997
    %v3999 = vpop.f32.mrf.mxu0
    %v4000 = vadd.f32 0.0, %v3999
    %v4001 = vpop.f32.mrf.mxu0
    %v4002 = vadd.f32 0.0, %v4001
    %4003 = vdwg.mxu0
    %v4004 = vadd.f32 %v3909, %v3953
    %v4005 = vadd.f32 %v3910, %v3955
    %v4006 = vadd.f32 %v3911, %v3996
    %v4007 = vadd.f32 %v3912, %v3998
    %v4008 = vadd.f32 %v3913, %v3957
    %v4009 = vadd.f32 %v3914, %v3959
    %v4010 = vadd.f32 %v3915, %v4000
    %v4011 = vadd.f32 %v3916, %v4002
    %v4012 = vmul.f32 %v4004, 0.5
    %v4013 = vmul.f32 %v4008, 0.5
    %v4014 = vtanh.pop %v4012
    %v4015 = vtanh.pop %v4013
    %v4016 = vadd.f32 %v4014, 1.0
    %v4017 = vadd.f32 %v4015, 1.0
    %v4018 = vmul.f32 %v4016, 0.5
    %v4019 = vmul.f32 %v4017, 0.5
    %v4020 = vmul.f32 %v4005, 0.5
    %v4021 = vmul.f32 %v4009, 0.5
    %v4022 = vtanh.pop %v4020
    %v4023 = vtanh.pop %v4021
    %v4024 = vadd.f32 %v4022, 1.0
    %v4025 = vadd.f32 %v4023, 1.0
    %v4026 = vmul.f32 %v4024, 0.5
    %v4027 = vmul.f32 %v4025, 0.5
    %v4028 = vtanh.pop %v4006
    %v4029 = vtanh.pop %v4010
    %v4030 = vmul.f32 %v4007, 0.5
    %v4031 = vmul.f32 %v4011, 0.5
    %v4032 = vtanh.pop %v4030
    %v4033 = vtanh.pop %v4031
    %v4034 = vadd.f32 %v4032, 1.0
    %v4035 = vadd.f32 %v4033, 1.0
    %v4036 = vmul.f32 %v4034, 0.5
    %v4037 = vmul.f32 %v4035, 0.5
    %v4038 = vmul.f32 %v4026, %v3899
    %v4039 = vmul.f32 %v4027, %v3900
    %v4040 = vmul.f32 %v4018, %v4028
    %v4041 = vmul.f32 %v4019, %v4029
    %v4042 = vadd.f32 %v4038, %v4040
    %v4043 = vadd.f32 %v4039, %v4041
    %v4044 = vtanh.pop %v4042
    %v4045 = vtanh.pop %v4043
    %v4046 = vmul.f32 %v4036, %v4044
    %v4047 = vmul.f32 %v4037, %v4045
    %v4048 = vld [vmem:[%s1961] sm:$0xff]
    %v4049 = vld [vmem:[%s1961 + $0x8] sm:$0xff]
    %v4050 = vld [vmem:[%s1961 + $0x10] sm:$0xff]
    %v4051 = vld [vmem:[%s1961 + $0x18] sm:$0xff]
    %v4052 = vunpack.c.l.bf16 %v4048
    %v4053 = vunpack.c.h.bf16 %v4048
    %v4054 = vunpack.c.l.bf16 %v4049
    %v4055 = vunpack.c.h.bf16 %v4049
    %v4056 = vunpack.c.l.bf16 %v4050
    %v4057 = vunpack.c.h.bf16 %v4050
    %v4058 = vunpack.c.l.bf16 %v4051
    %v4059 = vunpack.c.h.bf16 %v4051
    %v4060 = vpack.c.bf16 %v4047, %v4046
    %4061 = vmatprep.subr.bf16.mxu0 %v3168
    %4062 = vmatpush1.bf16.msra.mxu0 %v3167
    %4063 = vmatprep.subr.bf16.mxu0 %v3164
    %4064 = vmatpush1.bf16.msra.mxu0 %v3163
    %4065 = vmatprep.subr.bf16.mxu0 %v3160
    %4066 = vmatpush1.bf16.msra.mxu0 %v3159
    %4067 = vmatprep.subr.bf16.mxu0 %v3156
    %4068 = vmatpush1.bf16.msra.mxu0 %v3155
    %4069 = vmatprep.subr.bf16.mxu0 %v3152
    %4070 = vmatpush1.bf16.msra.mxu0 %v3151
    %4071 = vmatprep.subr.bf16.mxu0 %v3148
    %4072 = vmatpush1.bf16.msra.mxu0 %v3147
    %4073 = vmatprep.subr.bf16.mxu0 %v3144
    %4074 = vmatpush1.bf16.msra.mxu0 %v3143
    %4075 = vmatprep.subr.bf16.mxu0 %v3140
    %4076 = vmatpush1.bf16.msra.mxu0 %v3139
    %4077 = vmatprep.subr.bf16.mxu0 0
    %4078 = vmatpush2.bf16.msra.mxu0 0
    %4079 = vmatprep.subr.bf16.mxu0 0
    %4080 = vmatpush2.bf16.msra.mxu0 0
    %4081 = vmatprep.subr.bf16.mxu0 0
    %4082 = vmatpush2.bf16.msra.mxu0 0
    %4083 = vmatprep.subr.bf16.mxu0 0
    %4084 = vmatpush2.bf16.msra.mxu0 0
    %4085 = vmatprep.subr.bf16.mxu0 0
    %4086 = vmatpush2.bf16.msra.mxu0 0
    %4087 = vmatprep.subr.bf16.mxu0 0
    %4088 = vmatpush2.bf16.msra.mxu0 0
    %4089 = vmatprep.subr.bf16.mxu0 0
    %4090 = vmatpush2.bf16.msra.mxu0 0
    %4091 = vmatprep.subr.bf16.mxu0 0
    %4092 = vmatpush2.bf16.msra.mxu0 0
    %4093 = vmatprep.mubr.bf16.mxu0 0
    %4094 = vmatmul.mubr.bf16.gmra.mxu0 %v4060
    %v4095 = vpop.f32.mrf.mxu0
    %v4096 = vadd.f32 0.0, %v4095
    %v4097 = vpop.f32.mrf.mxu0
    %v4098 = vadd.f32 0.0, %v4097
    %v4099 = vpop.f32.mrf.mxu0
    %v4100 = vadd.f32 0.0, %v4099
    %v4101 = vpop.f32.mrf.mxu0
    %v4102 = vadd.f32 0.0, %v4101
    %4103 = vdwg.mxu0
    %4104 = vmatprep.subr.bf16.mxu0 %v3170
    %4105 = vmatpush1.bf16.msra.mxu0 %v3169
    %4106 = vmatprep.subr.bf16.mxu0 %v3166
    %4107 = vmatpush1.bf16.msra.mxu0 %v3165
    %4108 = vmatprep.subr.bf16.mxu0 %v3162
    %4109 = vmatpush1.bf16.msra.mxu0 %v3161
    %4110 = vmatprep.subr.bf16.mxu0 %v3158
    %4111 = vmatpush1.bf16.msra.mxu0 %v3157
    %4112 = vmatprep.subr.bf16.mxu0 %v3154
    %4113 = vmatpush1.bf16.msra.mxu0 %v3153
    %4114 = vmatprep.subr.bf16.mxu0 %v3150
    %4115 = vmatpush1.bf16.msra.mxu0 %v3149
    %4116 = vmatprep.subr.bf16.mxu0 %v3146
    %4117 = vmatpush1.bf16.msra.mxu0 %v3145
    %4118 = vmatprep.subr.bf16.mxu0 %v3142
    %4119 = vmatpush1.bf16.msra.mxu0 %v3141
    %4120 = vmatprep.subr.bf16.mxu0 0
    %4121 = vmatpush2.bf16.msra.mxu0 0
    %4122 = vmatprep.subr.bf16.mxu0 0
    %4123 = vmatpush2.bf16.msra.mxu0 0
    %4124 = vmatprep.subr.bf16.mxu0 0
    %4125 = vmatpush2.bf16.msra.mxu0 0
    %4126 = vmatprep.subr.bf16.mxu0 0
    %4127 = vmatpush2.bf16.msra.mxu0 0
    %4128 = vmatprep.subr.bf16.mxu0 0
    %4129 = vmatpush2.bf16.msra.mxu0 0
    %4130 = vmatprep.subr.bf16.mxu0 0
    %4131 = vmatpush2.bf16.msra.mxu0 0
    %4132 = vmatprep.subr.bf16.mxu0 0
    %4133 = vmatpush2.bf16.msra.mxu0 0
    %4134 = vmatprep.subr.bf16.mxu0 0
    %4135 = vmatpush2.bf16.msra.mxu0 0
    %4136 = vmatprep.mubr.bf16.mxu0 0
    %4137 = vmatmul.mubr.bf16.gmra.mxu0 %v4060
    %v4138 = vpop.f32.mrf.mxu0
    %v4139 = vadd.f32 0.0, %v4138
    %v4140 = vpop.f32.mrf.mxu0
    %v4141 = vadd.f32 0.0, %v4140
    %v4142 = vpop.f32.mrf.mxu0
    %v4143 = vadd.f32 0.0, %v4142
    %v4144 = vpop.f32.mrf.mxu0
    %v4145 = vadd.f32 0.0, %v4144
    %4146 = vdwg.mxu0
    %v4147 = vadd.f32 %v4052, %v4096
    %v4148 = vadd.f32 %v4053, %v4098
    %v4149 = vadd.f32 %v4054, %v4139
    %v4150 = vadd.f32 %v4055, %v4141
    %v4151 = vadd.f32 %v4056, %v4100
    %v4152 = vadd.f32 %v4057, %v4102
    %v4153 = vadd.f32 %v4058, %v4143
    %v4154 = vadd.f32 %v4059, %v4145
    %v4155 = vmul.f32 %v4147, 0.5
    %v4156 = vmul.f32 %v4151, 0.5
    %v4157 = vtanh.pop %v4155
    %v4158 = vtanh.pop %v4156
    %v4159 = vadd.f32 %v4157, 1.0
    %v4160 = vadd.f32 %v4158, 1.0
    %v4161 = vmul.f32 %v4159, 0.5
    %v4162 = vmul.f32 %v4160, 0.5
    %v4163 = vmul.f32 %v4148, 0.5
    %v4164 = vmul.f32 %v4152, 0.5
    %v4165 = vtanh.pop %v4163
    %v4166 = vtanh.pop %v4164
    %v4167 = vadd.f32 %v4165, 1.0
    %v4168 = vadd.f32 %v4166, 1.0
    %v4169 = vmul.f32 %v4167, 0.5
    %v4170 = vmul.f32 %v4168, 0.5
    %v4171 = vtanh.pop %v4149
    %v4172 = vtanh.pop %v4153
    %v4173 = vmul.f32 %v4150, 0.5
    %v4174 = vmul.f32 %v4154, 0.5
    %v4175 = vtanh.pop %v4173
    %v4176 = vtanh.pop %v4174
    %v4177 = vadd.f32 %v4175, 1.0
    %v4178 = vadd.f32 %v4176, 1.0
    %v4179 = vmul.f32 %v4177, 0.5
    %v4180 = vmul.f32 %v4178, 0.5
    %v4181 = vmul.f32 %v4169, %v4042
    %v4182 = vmul.f32 %v4170, %v4043
    %v4183 = vmul.f32 %v4161, %v4171
    %v4184 = vmul.f32 %v4162, %v4172
    %v4185 = vadd.f32 %v4181, %v4183
    %v4186 = vadd.f32 %v4182, %v4184
    %v4187 = vtanh.pop %v4185
    %v4188 = vtanh.pop %v4186
    %v4189 = vmul.f32 %v4179, %v4187
    %v4190 = vmul.f32 %v4180, %v4188
    %v4191 = vld [vmem:[%s2115] sm:$0xff]
    %v4192 = vld [vmem:[%s2115 + $0x8] sm:$0xff]
    %v4193 = vld [vmem:[%s2115 + $0x10] sm:$0xff]
    %v4194 = vld [vmem:[%s2115 + $0x18] sm:$0xff]
    %v4195 = vunpack.c.l.bf16 %v4191
    %v4196 = vunpack.c.h.bf16 %v4191
    %v4197 = vunpack.c.l.bf16 %v4192
    %v4198 = vunpack.c.h.bf16 %v4192
    %v4199 = vunpack.c.l.bf16 %v4193
    %v4200 = vunpack.c.h.bf16 %v4193
    %v4201 = vunpack.c.l.bf16 %v4194
    %v4202 = vunpack.c.h.bf16 %v4194
    %v4203 = vpack.c.bf16 %v4190, %v4189
    %4204 = vmatprep.subr.bf16.mxu0 %v3168
    %4205 = vmatpush1.bf16.msra.mxu0 %v3167
    %4206 = vmatprep.subr.bf16.mxu0 %v3164
    %4207 = vmatpush1.bf16.msra.mxu0 %v3163
    %4208 = vmatprep.subr.bf16.mxu0 %v3160
    %4209 = vmatpush1.bf16.msra.mxu0 %v3159
    %4210 = vmatprep.subr.bf16.mxu0 %v3156
    %4211 = vmatpush1.bf16.msra.mxu0 %v3155
    %4212 = vmatprep.subr.bf16.mxu0 %v3152
    %4213 = vmatpush1.bf16.msra.mxu0 %v3151
    %4214 = vmatprep.subr.bf16.mxu0 %v3148
    %4215 = vmatpush1.bf16.msra.mxu0 %v3147
    %4216 = vmatprep.subr.bf16.mxu0 %v3144
    %4217 = vmatpush1.bf16.msra.mxu0 %v3143
    %4218 = vmatprep.subr.bf16.mxu0 %v3140
    %4219 = vmatpush1.bf16.msra.mxu0 %v3139
    %4220 = vmatprep.subr.bf16.mxu0 0
    %4221 = vmatpush2.bf16.msra.mxu0 0
    %4222 = vmatprep.subr.bf16.mxu0 0
    %4223 = vmatpush2.bf16.msra.mxu0 0
    %4224 = vmatprep.subr.bf16.mxu0 0
    %4225 = vmatpush2.bf16.msra.mxu0 0
    %4226 = vmatprep.subr.bf16.mxu0 0
    %4227 = vmatpush2.bf16.msra.mxu0 0
    %4228 = vmatprep.subr.bf16.mxu0 0
    %4229 = vmatpush2.bf16.msra.mxu0 0
    %4230 = vmatprep.subr.bf16.mxu0 0
    %4231 = vmatpush2.bf16.msra.mxu0 0
    %4232 = vmatprep.subr.bf16.mxu0 0
    %4233 = vmatpush2.bf16.msra.mxu0 0
    %4234 = vmatprep.subr.bf16.mxu0 0
    %4235 = vmatpush2.bf16.msra.mxu0 0
    %4236 = vmatprep.mubr.bf16.mxu0 0
    %4237 = vmatmul.mubr.bf16.gmra.mxu0 %v4203
    %v4238 = vpop.f32.mrf.mxu0
    %v4239 = vadd.f32 0.0, %v4238
    %v4240 = vpop.f32.mrf.mxu0
    %v4241 = vadd.f32 0.0, %v4240
    %v4242 = vpop.f32.mrf.mxu0
    %v4243 = vadd.f32 0.0, %v4242
    %v4244 = vpop.f32.mrf.mxu0
    %v4245 = vadd.f32 0.0, %v4244
    %4246 = vdwg.mxu0
    %4247 = vmatprep.subr.bf16.mxu0 %v3170
    %4248 = vmatpush1.bf16.msra.mxu0 %v3169
    %4249 = vmatprep.subr.bf16.mxu0 %v3166
    %4250 = vmatpush1.bf16.msra.mxu0 %v3165
    %4251 = vmatprep.subr.bf16.mxu0 %v3162
    %4252 = vmatpush1.bf16.msra.mxu0 %v3161
    %4253 = vmatprep.subr.bf16.mxu0 %v3158
    %4254 = vmatpush1.bf16.msra.mxu0 %v3157
    %4255 = vmatprep.subr.bf16.mxu0 %v3154
    %4256 = vmatpush1.bf16.msra.mxu0 %v3153
    %4257 = vmatprep.subr.bf16.mxu0 %v3150
    %4258 = vmatpush1.bf16.msra.mxu0 %v3149
    %4259 = vmatprep.subr.bf16.mxu0 %v3146
    %4260 = vmatpush1.bf16.msra.mxu0 %v3145
    %4261 = vmatprep.subr.bf16.mxu0 %v3142
    %4262 = vmatpush1.bf16.msra.mxu0 %v3141
    %4263 = vmatprep.subr.bf16.mxu0 0
    %4264 = vmatpush2.bf16.msra.mxu0 0
    %4265 = vmatprep.subr.bf16.mxu0 0
    %4266 = vmatpush2.bf16.msra.mxu0 0
    %4267 = vmatprep.subr.bf16.mxu0 0
    %4268 = vmatpush2.bf16.msra.mxu0 0
    %4269 = vmatprep.subr.bf16.mxu0 0
    %4270 = vmatpush2.bf16.msra.mxu0 0
    %4271 = vmatprep.subr.bf16.mxu0 0
    %4272 = vmatpush2.bf16.msra.mxu0 0
    %4273 = vmatprep.subr.bf16.mxu0 0
    %4274 = vmatpush2.bf16.msra.mxu0 0
    %4275 = vmatprep.subr.bf16.mxu0 0
    %4276 = vmatpush2.bf16.msra.mxu0 0
    %4277 = vmatprep.subr.bf16.mxu0 0
    %4278 = vmatpush2.bf16.msra.mxu0 0
    %4279 = vmatprep.mubr.bf16.mxu0 0
    %4280 = vmatmul.mubr.bf16.gmra.mxu0 %v4203
    %v4281 = vpop.f32.mrf.mxu0
    %v4282 = vadd.f32 0.0, %v4281
    %v4283 = vpop.f32.mrf.mxu0
    %v4284 = vadd.f32 0.0, %v4283
    %v4285 = vpop.f32.mrf.mxu0
    %v4286 = vadd.f32 0.0, %v4285
    %v4287 = vpop.f32.mrf.mxu0
    %v4288 = vadd.f32 0.0, %v4287
    %4289 = vdwg.mxu0
    %v4290 = vadd.f32 %v4195, %v4239
    %v4291 = vadd.f32 %v4196, %v4241
    %v4292 = vadd.f32 %v4197, %v4282
    %v4293 = vadd.f32 %v4198, %v4284
    %v4294 = vadd.f32 %v4199, %v4243
    %v4295 = vadd.f32 %v4200, %v4245
    %v4296 = vadd.f32 %v4201, %v4286
    %v4297 = vadd.f32 %v4202, %v4288
    %v4298 = vmul.f32 %v4290, 0.5
    %v4299 = vmul.f32 %v4294, 0.5
    %v4300 = vtanh.pop %v4298
    %v4301 = vtanh.pop %v4299
    %v4302 = vadd.f32 %v4300, 1.0
    %v4303 = vadd.f32 %v4301, 1.0
    %v4304 = vmul.f32 %v4302, 0.5
    %v4305 = vmul.f32 %v4303, 0.5
    %v4306 = vmul.f32 %v4291, 0.5
    %v4307 = vmul.f32 %v4295, 0.5
    %v4308 = vtanh.pop %v4306
    %v4309 = vtanh.pop %v4307
    %v4310 = vadd.f32 %v4308, 1.0
    %v4311 = vadd.f32 %v4309, 1.0
    %v4312 = vmul.f32 %v4310, 0.5
    %v4313 = vmul.f32 %v4311, 0.5
    %v4314 = vtanh.pop %v4292
    %v4315 = vtanh.pop %v4296
    %v4316 = vmul.f32 %v4293, 0.5
    %v4317 = vmul.f32 %v4297, 0.5
    %v4318 = vtanh.pop %v4316
    %v4319 = vtanh.pop %v4317
    %v4320 = vadd.f32 %v4318, 1.0
    %v4321 = vadd.f32 %v4319, 1.0
    %v4322 = vmul.f32 %v4320, 0.5
    %v4323 = vmul.f32 %v4321, 0.5
    %v4324 = vmul.f32 %v4312, %v4185
    %v4325 = vmul.f32 %v4313, %v4186
    %v4326 = vmul.f32 %v4304, %v4314
    %v4327 = vmul.f32 %v4305, %v4315
    %v4328 = vadd.f32 %v4324, %v4326
    %v4329 = vadd.f32 %v4325, %v4327
    %v4330 = vtanh.pop %v4328
    %v4331 = vtanh.pop %v4329
    %v4332 = vmul.f32 %v4322, %v4330
    %v4333 = vmul.f32 %v4323, %v4331
    %s4334 = scalar_lea.vmem [#allocation16], 16
    %4335 = vst [vmem:[%s4334] sm:$0xff] %v4332
    %4336 = vst [vmem:[%s4334 + $0x8] sm:$0xff] %v4333
    %v4337 = vpack.c.bf16 %v4333, %v4332
    %v4338 = vld [vmem:[#allocation13] sm:$0xf]
    %v4339 = vld [vmem:[#allocation13 + $0x4] sm:$0xf]
    %v4340 = vld [vmem:[#allocation13 + $0x8] sm:$0xf]
    %v4341 = vld [vmem:[#allocation13 + $0xc] sm:$0xf]
    %v4342 = vld [vmem:[#allocation13 + $0x10] sm:$0xf]
    %v4343 = vld [vmem:[#allocation13 + $0x14] sm:$0xf]
    %v4344 = vld [vmem:[#allocation13 + $0x18] sm:$0xf]
    %v4345 = vld [vmem:[#allocation13 + $0x1c] sm:$0xf]
    %v4346 = vld [vmem:[#allocation13 + $0x20] sm:$0xf]
    %v4347 = vld [vmem:[#allocation13 + $0x24] sm:$0xf]
    %v4348 = vld [vmem:[#allocation13 + $0x28] sm:$0xf]
    %v4349 = vld [vmem:[#allocation13 + $0x2c] sm:$0xf]
    %v4350 = vld [vmem:[#allocation13 + $0x30] sm:$0xf]
    %v4351 = vld [vmem:[#allocation13 + $0x34] sm:$0xf]
    %v4352 = vld [vmem:[#allocation13 + $0x38] sm:$0xf]
    %v4353 = vld [vmem:[#allocation13 + $0x3c] sm:$0xf]
    %v4354 = vld [vmem:[%s8] sm:$0x1]
    %v4356 = vlaneseq
    %v4357 = vshrl.u32 %v4356, 7
    %v4358 = vsub.s32 0, %v4357
    %v4359 = vrot.slane %v4354, %v4358
    %v4377 = vunpack.c.l.b16 %v4338
    %v4378 = vunpack.c.l.b16 %v4339
    %v4379 = vunpack.c.l.b16 %v4340
    %v4380 = vunpack.c.l.b16 %v4341
    %v4381 = vunpack.c.l.b16 %v4342
    %v4382 = vunpack.c.l.b16 %v4343
    %v4383 = vunpack.c.l.b16 %v4344
    %v4384 = vunpack.c.l.b16 %v4345
    %v4385 = vunpack.c.l.b16 %v4346
    %v4386 = vunpack.c.l.b16 %v4347
    %v4387 = vunpack.c.l.b16 %v4348
    %v4388 = vunpack.c.l.b16 %v4349
    %v4389 = vunpack.c.l.b16 %v4350
    %v4390 = vunpack.c.l.b16 %v4351
    %v4391 = vunpack.c.l.b16 %v4352
    %v4392 = vunpack.c.l.b16 %v4353
    %v4393 = vpack.c.b16 %v4378, %v4377
    %v4394 = vpack.c.b16 %v4380, %v4379
    %v4395 = vpack.c.b16 %v4382, %v4381
    %v4396 = vpack.c.b16 %v4384, %v4383
    %v4397 = vpack.c.b16 %v4386, %v4385
    %v4398 = vpack.c.b16 %v4388, %v4387
    %v4399 = vpack.c.b16 %v4390, %v4389
    %v4400 = vpack.c.b16 %v4392, %v4391
    %4409 = vmatprep.subr.bf16.mxu0 0
    %4410 = vmatpush1.bf16.msra.mxu0 %v4400
    %4411 = vmatprep.subr.bf16.mxu0 0
    %4412 = vmatpush1.bf16.msra.mxu0 %v4399
    %4413 = vmatprep.subr.bf16.mxu0 0
    %4414 = vmatpush1.bf16.msra.mxu0 %v4398
    %4415 = vmatprep.subr.bf16.mxu0 0
    %4416 = vmatpush1.bf16.msra.mxu0 %v4397
    %4417 = vmatprep.subr.bf16.mxu0 0
    %4418 = vmatpush1.bf16.msra.mxu0 %v4396
    %4419 = vmatprep.subr.bf16.mxu0 0
    %4420 = vmatpush1.bf16.msra.mxu0 %v4395
    %4421 = vmatprep.subr.bf16.mxu0 0
    %4422 = vmatpush1.bf16.msra.mxu0 %v4394
    %4423 = vmatprep.subr.bf16.mxu0 0
    %4424 = vmatpush1.bf16.msra.mxu0 %v4393
    %4425 = vmatprep.subr.bf16.mxu0 0
    %4426 = vmatpush2.bf16.msra.mxu0 0
    %4427 = vmatprep.subr.bf16.mxu0 0
    %4428 = vmatpush2.bf16.msra.mxu0 0
    %4429 = vmatprep.subr.bf16.mxu0 0
    %4430 = vmatpush2.bf16.msra.mxu0 0
    %4431 = vmatprep.subr.bf16.mxu0 0
    %4432 = vmatpush2.bf16.msra.mxu0 0
    %4433 = vmatprep.subr.bf16.mxu0 0
    %4434 = vmatpush2.bf16.msra.mxu0 0
    %4435 = vmatprep.subr.bf16.mxu0 0
    %4436 = vmatpush2.bf16.msra.mxu0 0
    %4437 = vmatprep.subr.bf16.mxu0 0
    %4438 = vmatpush2.bf16.msra.mxu0 0
    %4439 = vmatprep.subr.bf16.mxu0 0
    %4440 = vmatpush2.bf16.msra.mxu0 0
    %4441 = vmatprep.mubr.bf16.mxu0 0
    %4442 = vmatmul.mubr.bf16.gmra.mxu0 %v4337
    %v4443 = vpop.f32.mrf.mxu0
    %v4444 = vadd.f32 %v4359, %v4443
    %v4445 = vpop.f32.mrf.mxu0
    %v4446 = vpop.f32.mrf.mxu0
    %v4447 = vadd.f32 %v4359, %v4446
    %v4448 = vpop.f32.mrf.mxu0
    %4449 = vdwg.mxu0
    %4450 = vst [vmem:[#allocation15] sm:$0xff] %v4444
    %4451 = vst [vmem:[#allocation15 + $0x8] sm:$0xff] %v4447
    // Predicated region
    $region62: #{tpu_custom_call.1} parent=1 // pred_check
      _
    $region63: #{tpu_custom_call.1} parent=1 // pred_check_branch
      %4453 = sbr.rel (0) target = $region65
    $region64: #{tpu_custom_call.1} parent=1 // pred_region
      %s4455 = ssub.s32 256, 256
      %4456 = vsyncadd [#allocation6], %s4455
      %s4457 = sshll.u32 [#allocation15], 4
      %s4458 = int_to_ptr.vmem [resolvable:$true] %s4457
      %4463 = dma.vmem_to_hbm [thread:$0]  %s4458, 256, %s9, [#allocation6], 128, 128, 8
    $region65: #{tpu_custom_call.1} parent=1 // pred_fallthru
      _
    // Predicated region
    $region66: #{tpu_custom_call.1} parent=1 // pred_check
      _
    $region67: #{tpu_custom_call.1} parent=1 // pred_check_branch
      %4465 = sbr.rel (0) target = $region69
    $region68: #{tpu_custom_call.1} parent=1 // pred_region
      %s4467 = ssub.s32 512, 512
      %4468 = vsyncadd [#allocation17], %s4467
      %s4469 = sshll.u32 [#allocation16], 4
      %s4470 = int_to_ptr.vmem [resolvable:$true] %s4469
      %4475 = dma.vmem_to_hbm [thread:$0]  %s4470, 512, %s10, [#allocation17], 128, 128, 8
    $region69: #{tpu_custom_call.1} parent=1 // pred_fallthru
      _
    // Predicated region
    $region70: #{tpu_custom_call.1} parent=1 // pred_check
      _
    $region71: #{tpu_custom_call.1} parent=1 // pred_check_branch
      %4477 = sbr.rel (0) target = $region73
    $region72: #{tpu_custom_call.1} parent=1 // pred_region
      %4478 = dma.done [#allocation6], 256
    $region73: #{tpu_custom_call.1} parent=1 // pred_fallthru
      _
    // Predicated region
    $region74: #{tpu_custom_call.1} parent=1 // pred_check
      _
    $region75: #{tpu_custom_call.1} parent=1 // pred_check_branch
      %4480 = sbr.rel (0) target = $region77
    $region76: #{tpu_custom_call.1} parent=1 // pred_region
      %4481 = dma.done [#allocation17], 512
    $region77: #{tpu_custom_call.1} parent=1 // pred_fallthru
      _
    %4482 = vsyncpa [#allocation5], 1
    %4483 = vsyncpa [#allocation8], 1
    %4484 = vsyncpa [#allocation11], 1
    %4485 = vsyncpa [#allocation14], 1
    %4486 = vsyncpa [#allocation6], 1
    %4487 = vsyncpa [#allocation17], 1

</llo_original>
